<compile_context>
chip_gen: v7x
topology: tpu7x:2x2x1
jax: 0.10.0
libtpu: 0.0.40
codegen_flags: <defaults>
</compile_context>

<pallas_src>
import jax
import jax.numpy as jnp
from jax import lax
from jax.experimental import pallas as pl
from jax.experimental.pallas import tpu as pltpu


# ------------------------------ budgets / tiling ------------------------------

def _round_up(x, m):
    return ((x + m - 1) // m) * m


def _vmem_budget_bytes():
    """Generation-aware VMEM limit (leave headroom for compiler scratch)."""
    try:
        info = pltpu.get_tpu_info()
        for attr in ("vmem_capacity_bytes", "vmem_bytes", "vmem_size_bytes"):
            cap = getattr(info, attr, None)
            if cap:
                return max(32 << 20, int(cap) * 3 // 4)
    except Exception:
        pass
    return 48 << 20          # conservative fallback (fits v7x)


def _divisors_desc(n):
    return [d for d in range(n, 0, -1) if n % d == 0]


def _pick_conv_tiles(H, W, cins, cout_p, budget):
    """Pick (tco, th_h): Cout tile (multiple of 128) and H strip height."""
    work = budget // 2                       # leave room for double buffers etc.
    tco_opts = [c for c in (256, 128) if cout_p % c == 0] or [cout_p]

    def usage(th, tco):
        b = 0
        b += sum(2 * 2 * H * W * c for c in cins)            # resident inputs (bf16, x2 buf)
        b += sum(2 * 2 * 9 * c * tco for c in cins)           # packed weights (bf16, x2 buf)
        b += 2 * 2 * th * W * tco                              # output block (bf16, x2 buf)
        b += sum(2 * (th * W + 2 * W + 2) * c for c in cins)   # halo-flat strips (bf16)
        b += 2 * 2 * th * W * 3 * max(cins)                    # ~2 live packed LHS (bf16)
        b += 2 * 4 * th * W * tco                              # f32 acc + partial
        return b

    cap = max(8, H // 4)                     # keep >=~4 strips on larger images
    for tco in tco_opts:
        for th in _divisors_desc(H):
            if th > cap and H > cap:
                continue
            if usage(th, tco) <= work:
                return tco, th
    return tco_opts[-1], 1


def _pick_upconv_rows(NH, W, Cin, cup_p, budget):
    """Byte-budgeted row-strip height for the upconv matmul."""
    work = budget // 2
    fixed = 2 * 2 * Cin * 4 * cup_p + 4 * 4 * cup_p            # weights + bias
    per_row = (2 * 2 * W * Cin) \
        + (2 * 2 * 2 * W * 2 * cup_p) \
        + (4 * W * 4 * cup_p)                                   # in + out + f32 y
    th_budget = max(1, (work - fixed) // max(per_row, 1))
    cap = max(8, NH // 4)
    target = min(th_budget, cap, NH)
    th = 1
    for d in range(1, NH + 1):
        if NH % d == 0 and d <= target:
            th = d
    return th


# -------------------------- Pallas kernel: upconv -----------------------------

def _upconv_kernel(x_ref, w_ref, b_ref, o_ref):
    # ConvTranspose2d(kernel=2, stride=2) for a strip of flattened (N*H) rows.
    #   x_ref: (th, W, Cin)         bf16
    #   w_ref: (Cin, 4*Cout_p)      bf16   columns ordered (a, b, co)
    #   b_ref: (1, 4*Cout_p)        f32    bias tiled over (a, b)
    #   o_ref: (th, 2, W, 2*Cout_p)        a-plane = output row parity
    th, W, Cin = x_ref.shape
    two_cout = o_ref.shape[3]

    x2d = x_ref[...].reshape(th * W, Cin)                 # free reshape
    y = jnp.dot(x2d, w_ref[...], preferred_element_type=jnp.float32) + b_ref[...]
    o_ref[:, 0, :, :] = y[:, :two_cout].reshape(th, W, two_cout).astype(o_ref.dtype)
    o_ref[:, 1, :, :] = y[:, two_cout:].reshape(th, W, two_cout).astype(o_ref.dtype)


# --------------------- Pallas kernels: conv3x3 + BN + ReLU --------------------

def _conv_col_masks(th_h, W):
    col = lax.broadcasted_iota(jnp.int32, (th_h, W, 1), 1).reshape(th_h * W, 1)
    return col != 0, col != W - 1       # dx=-1 invalid at w==0; dx=+1 at w==W-1


def _halo_flat_strip(x_ref, r0, th_h):
    """Row-padded flattened strip for the 3x3 taps.

    x_ref: (H, W, C) bf16 resident image.  Returns (th_h*W + 2W + 2, C):
      [1 zero row | row r0-1 (or zeros) | rows r0..r0+th_h-1 | row r0+th_h
       (or zeros) | 1 zero row]
    so every (dy, dx) tap is a contiguous static slice of length th_h*W.
    """
    H, W, C = x_ref.shape
    mid = x_ref[pl.ds(r0, th_h)].reshape(th_h * W, C)
    top = x_ref[pl.ds(jnp.maximum(r0 - 1, 0), 1)].reshape(W, C)
    bot = x_ref[pl.ds(jnp.minimum(r0 + th_h, H - 1), 1)].reshape(W, C)
    top = jnp.where(r0 > 0, top, jnp.zeros_like(top))
    bot = jnp.where(r0 + th_h < H, bot, jnp.zeros_like(bot))
    z1 = jnp.zeros((1, C), x_ref.dtype)
    return jnp.concatenate([z1, top, mid, bot, z1], axis=0)


def _accum_taps(acc, xw, wk_ref, th_h, W, left_ok, right_ok):
    """acc += 3x3 conv taps of one input, dy packed into the contraction dim.

    xw:     (th_h*W + 2W + 2, C) bf16 halo-padded flat strip.
    wk_ref: (3, 3C, tco) bf16; axis0 = dx in {-1,0,+1}; K is dy-major.
    Column masks are applied to the dx=+-1 partials before accumulation so a
    single f32 accumulator stays live.
    """
    n = th_h * W
    for dx_i in range(3):
        lhs = jnp.concatenate(
            [lax.slice_in_dim(xw, dy_i * W + dx_i, dy_i * W + dx_i + n, axis=0)
             for dy_i in range(3)],
            axis=1)
        part = jnp.dot(lhs, wk_ref[dx_i], preferred_element_type=jnp.float32)
        if dx_i == 0:
            part = jnp.where(left_ok, part, 0.0)
        elif dx_i == 2:
            part = jnp.where(right_ok, part, 0.0)
        acc = part if acc is None else acc + part
    return acc


def _dconv_concat_kernel(xa_ref, xb_ref, wa_ref, wb_ref, shift_ref, o_ref):
    # Fused concat([xa, xb], C) -> Conv3x3(pad=1) -> BN(eval) -> ReLU, H strip.
    #   xa_ref: (H, W, Ca)   xb_ref: (H, W, Cb)      bf16 (full resident image)
    #   wa_ref: (3, 3*Ca, tco)  wb_ref: (3, 3*Cb, tco)  bf16 (BN scale folded)
    #   shift_ref: (1, tco) f32    o_ref: (th_h, W, tco)
    H, W, Ca = xa_ref.shape
    th_h, _, tco = o_ref.shape
    r0 = pl.multiple_of(pl.program_id(2) * th_h, th_h)

    left_ok, right_ok = _conv_col_masks(th_h, W)
    acc = _accum_taps(None, _halo_flat_strip(xa_ref, r0, th_h), wa_ref,
                      th_h, W, left_ok, right_ok)
    acc = _accum_taps(acc, _halo_flat_strip(xb_ref, r0, th_h), wb_ref,
                      th_h, W, left_ok, right_ok)
    y = jnp.maximum(acc + shift_ref[...], 0.0)
    o_ref[...] = y.reshape(th_h, W, tco).astype(o_ref.dtype)


def _dconv_kernel(x_ref, w_ref, shift_ref, o_ref):
    # Conv3x3(pad=1) -> BN(eval) -> ReLU for one input tensor, H strip.
    H, W, Cin = x_ref.shape
    th_h, _, tco = o_ref.shape
    r0 = pl.multiple_of(pl.program_id(2) * th_h, th_h)

    left_ok, right_ok = _conv_col_masks(th_h, W)
    acc = _accum_taps(None, _halo_flat_strip(x_ref, r0, th_h), w_ref,
                      th_h, W, left_ok, right_ok)
    y = jnp.maximum(acc + shift_ref[...], 0.0)
    o_ref[...] = y.reshape(th_h, W, tco).astype(o_ref.dtype)


# --------------------------------- wrappers -----------------------------------

def conv_transpose2x2(x_nhwc, w_t, b_t, budget):
    """ConvTranspose2d(Cin, Cup, k=2, s=2); output channels padded to a
    multiple of 64 (lane-dense stores); padded channels are exactly zero."""
    N, H, W, Cin = x_nhwc.shape
    cup = w_t.shape[1]                                 # PyTorch: (Cin, Cup, 2, 2)
    cup_p = _round_up(max(cup, 64), 64)

    w = jnp.transpose(w_t.astype(jnp.float32), (0, 2, 3, 1))   # (Cin, a, b, co)
    b = b_t.astype(jnp.float32)
    if cup_p != cup:
        w = jnp.pad(w, ((0, 0), (0, 0), (0, 0), (0, cup_p - cup)))
        b = jnp.pad(b, (0, cup_p - cup))
    w_all = w.reshape(Cin, 4 * cup_p).astype(jnp.bfloat16)     # cols = (a, b, co)
    b_row = jnp.tile(b, 4).reshape(1, 4 * cup_p)

    NH = N * H
    x = x_nhwc.reshape(NH, W, Cin).astype(jnp.bfloat16)
    th = _pick_upconv_rows(NH, W, Cin, cup_p, budget)

    y = pl.pallas_call(
        _upconv_kernel,
        out_shape=jax.ShapeDtypeStruct((NH, 2, W, 2 * cup_p), jnp.bfloat16),
        grid=(NH // th,),
        in_specs=[
            pl.BlockSpec((th, W, Cin), lambda i: (i, 0, 0)),
            pl.BlockSpec((Cin, 4 * cup_p), lambda i: (0, 0)),
            pl.BlockSpec((1, 4 * cup_p), lambda i: (0, 0)),
        ],
        out_specs=pl.BlockSpec((th, 2, W, 2 * cup_p), lambda i: (i, 0, 0, 0)),
        compiler_params=pltpu.CompilerParams(
            dimension_semantics=("parallel",),
            vmem_limit_bytes=budget),
    )(x, w_all, b_row)

    # (NH, 2, W, 2*Cup_p) -> (N, 2H, 2W, Cup_p): contiguous reshape, no transpose.
    return y.reshape(N, 2 * H, 2 * W, cup_p)


def _fold_bn_dxdy(w_oihw, gamma, beta, mean, var, eps=1e-5):
    """Fold eval-mode BN scale into the conv weight; (dx, dy, ci, co) layout,
    Cout padded to a multiple of 128; shift kept as a (1, Cout_p) bias."""
    cout = w_oihw.shape[0]
    cout_p = _round_up(max(cout, 128), 128)
    inv_std = 1.0 / jnp.sqrt(var.astype(jnp.float32) + eps)
    scale = gamma.astype(jnp.float32) * inv_std
    shift = beta.astype(jnp.float32) - mean.astype(jnp.float32) * scale
    w = jnp.transpose(w_oihw.astype(jnp.float32), (3, 2, 1, 0))    # (dx, dy, ci, co)
    w = w * scale[None, None, None, :]
    pad = cout_p - cout
    if pad:
        w = jnp.pad(w, ((0, 0), (0, 0), (0, 0), (0, pad)))
        shift = jnp.pad(shift, (0, pad))
    return w, shift.reshape(1, cout_p)


def dconv_concat_bn_relu(xa, xb, w_oihw, gamma, beta, mean, var, budget,
                         out_dtype=jnp.bfloat16):
    """Fused cat([xa, xb], C) + Conv3x3(pad=1, no bias) + BN(eval) + ReLU.
    xb may carry zero-padded trailing channels; matching weight rows are zero.
    Returns a tensor with Cout padded to a multiple of 128."""
    N, H, W, Ca = xa.shape
    Cbp = xb.shape[3]
    Cb_real = w_oihw.shape[1] - Ca
    assert 0 < Cb_real <= Cbp

    w4, shift = _fold_bn_dxdy(w_oihw, gamma, beta, mean, var)
    cout_p = w4.shape[3]
    wa = w4[:, :, :Ca, :].reshape(3, 3 * Ca, cout_p).astype(jnp.bfloat16)
    wb4 = w4[:, :, Ca:, :]
    if Cbp != Cb_real:
        wb4 = jnp.pad(wb4, ((0, 0), (0, 0), (0, Cbp - Cb_real), (0, 0)))
    wb = wb4.reshape(3, 3 * Cbp, cout_p).astype(jnp.bfloat16)

    tco, th_h = _pick_conv_tiles(H, W, (Ca, Cbp), cout_p, budget)
    grid = (N, cout_p // tco, H // th_h)

    return pl.pallas_call(
        _dconv_concat_kernel,
        out_shape=jax.ShapeDtypeStruct((N, H, W, cout_p), out_dtype),
        grid=grid,
        in_specs=[
            pl.BlockSpec((None, H, W, Ca), lambda n, j, h: (n, 0, 0, 0)),
            pl.BlockSpec((None, H, W, Cbp), lambda n, j, h: (n, 0, 0, 0)),
            pl.BlockSpec((3, 3 * Ca, tco), lambda n, j, h: (0, 0, j)),
            pl.BlockSpec((3, 3 * Cbp, tco), lambda n, j, h: (0, 0, j)),
            pl.BlockSpec((1, tco), lambda n, j, h: (0, j)),
        ],
        out_specs=pl.BlockSpec((None, th_h, W, tco), lambda n, j, h: (n, h, 0, j)),
        compiler_params=pltpu.CompilerParams(
            dimension_semantics=("parallel", "parallel", "arbitrary"),
            vmem_limit_bytes=budget),
    )(xa.astype(jnp.bfloat16), xb.astype(jnp.bfloat16), wa, wb, shift)


def dconv_bn_relu(x, w_oihw, gamma, beta, mean, var, budget,
                  out_dtype=jnp.float32):
    """Fused Conv3x3(pad=1, no bias) + BN(eval) + ReLU.  Input may carry
    zero-padded trailing channels; output Cout is padded to a multiple of 128."""
    N, H, W, Cin_p = x.shape
    Cin_real = w_oihw.shape[1]
    assert Cin_real <= Cin_p

    w4, shift = _fold_bn_dxdy(w_oihw, gamma, beta, mean, var)
    cout_p = w4.shape[3]
    if Cin_p != Cin_real:
        w4 = jnp.pad(w4, ((0, 0), (0, 0), (0, Cin_p - Cin_real), (0, 0)))
    wk = w4.reshape(3, 3 * Cin_p, cout_p).astype(jnp.bfloat16)

    tco, th_h = _pick_conv_tiles(H, W, (Cin_p,), cout_p, budget)
    grid = (N, cout_p // tco, H // th_h)

    return pl.pallas_call(
        _dconv_kernel,
        out_shape=jax.ShapeDtypeStruct((N, H, W, cout_p), out_dtype),
        grid=grid,
        in_specs=[
            pl.BlockSpec((None, H, W, Cin_p), lambda n, j, h: (n, 0, 0, 0)),
            pl.BlockSpec((3, 3 * Cin_p, tco), lambda n, j, h: (0, 0, j)),
            pl.BlockSpec((1, tco), lambda n, j, h: (0, j)),
        ],
        out_specs=pl.BlockSpec((None, th_h, W, tco), lambda n, j, h: (n, h, 0, j)),
        compiler_params=pltpu.CompilerParams(
            dimension_semantics=("parallel", "parallel", "arbitrary"),
            vmem_limit_bytes=budget),
    )(x.astype(jnp.bfloat16), wk, shift)


def up_forward(x1_nchw, x2_nchw, params):
    """Equivalent of Up.forward(x1, x2) (bilinear=False). NCHW in / NCHW out."""
    budget = _vmem_budget_bytes()
    x1 = jnp.transpose(x1_nchw, (0, 2, 3, 1))
    x2 = jnp.transpose(x2_nchw, (0, 2, 3, 1))

    # up: ConvTranspose2d(in, in//2, k=2, s=2)   (channel-padded, bf16 NHWC)
    x1u = conv_transpose2x2(x1, params["up_w"], params["up_b"], budget)

    # center pad (F.pad) to x2's spatial size (no-op in the usual even case).
    diffY = x2.shape[1] - x1u.shape[1]
    diffX = x2.shape[2] - x1u.shape[2]
    if diffY != 0 or diffX != 0:
        x1u = jnp.pad(x1u, ((0, 0),
                            (diffY // 2, diffY - diffY // 2),
                            (diffX // 2, diffX - diffX // 2),
                            (0, 0)))

    # DoubleConv; torch.cat([x2, x1], dim=1) fused into the first conv.
    y = dconv_concat_bn_relu(x2, x1u, params["c1_w"], params["bn1_g"],
                             params["bn1_b"], params["bn1_m"], params["bn1_v"],
                             budget, out_dtype=jnp.bfloat16)
    y = dconv_bn_relu(y, params["c2_w"], params["bn2_g"], params["bn2_b"],
                      params["bn2_m"], params["bn2_v"], budget,
                      out_dtype=jnp.float32)

    y = y[..., : params["c2_w"].shape[0]]          # drop channel lane-padding
    return jnp.transpose(y, (0, 3, 1, 2))          # back to NCHW


# ------------------------------ parameter init --------------------------------

def init_params(key, in_channels, out_channels):
    cin, cout = in_channels, out_channels
    mid = cout                                    # DoubleConv default mid
    k0, k1, k2 = jax.random.split(key, 3)
    return {
        # ConvTranspose2d(cin, cin//2, 2, 2): weight (cin, cin//2, 2, 2) + bias
        "up_w": 0.1 * jax.random.normal(k0, (cin, cin // 2, 2, 2), jnp.float32),
        "up_b": jnp.linspace(-0.1, 0.1, cin // 2).astype(jnp.float32),
        # Conv2d(cin, mid, 3, pad=1, bias=False): (mid, cin, 3, 3)
        "c1_w": 0.1 * jax.random.normal(k1, (mid, cin, 3, 3), jnp.float32),
        "bn1_g": jnp.ones((mid,), jnp.float32),
        "bn1_b": jnp.zeros((mid,), jnp.float32),
        "bn1_m": jnp.zeros((mid,), jnp.float32),
        "bn1_v": jnp.ones((mid,), jnp.float32),
        # Conv2d(mid, cout, 3, pad=1, bias=False): (cout, mid, 3, 3)
        "c2_w": 0.1 * jax.random.normal(k2, (cout, mid, 3, 3), jnp.float32),
        "bn2_g": jnp.ones((cout,), jnp.float32),
        "bn2_b": jnp.zeros((cout,), jnp.float32),
        "bn2_m": jnp.zeros((cout,), jnp.float32),
        "bn2_v": jnp.ones((cout,), jnp.float32),
    }


# --------------------------- pure-JAX reference --------------------------------

def _ref_up_forward(x1, x2, p, eps=1e-5):
    # ConvTranspose2d(k=2, s=2)
    y = jnp.einsum("nchw,cdab->ndhawb", x1, p["up_w"])
    y = y + p["up_b"][None, :, None, None, None, None]
    n, d, h, _, w, _ = y.shape
    x1u = y.reshape(n, d, 2 * h, 2 * w)
    x = jnp.concatenate([x2, x1u], axis=1)

    def cbr(x, wt, g, b, m, v):
        y = lax.conv_general_dilated(x, wt, (1, 1), "SAME",
                                     dimension_numbers=("NCHW", "OIHW", "NCHW"))
        s = g / jnp.sqrt(v + eps)
        return jnp.maximum(y * s[None, :, None, None]
                           + (b - m * s)[None, :, None, None], 0.0)

    x = cbr(x, p["c1_w"], p["bn1_g"], p["bn1_b"], p["bn1_m"], p["bn1_v"])
    x = cbr(x, p["c2_w"], p["bn2_g"], p["bn2_b"], p["bn2_m"], p["bn2_v"])
    return x


# ----------------------------------- main --------------------------------------

if __name__ == "__main__":
    key = jax.random.PRNGKey(0)
    in_channels, out_channels = 8, 4
    N, H, W = 2, 8, 8                               # x1 spatial; x2 is 2H x 2W

    kx1, kx2, kp = jax.random.split(key, 3)
    x1 = jax.random.normal(kx1, (N, in_channels, H, W), jnp.float32)
    x2 = jax.random.normal(kx2, (N, in_channels // 2, 2 * H, 2 * W), jnp.float32)
    params = init_params(kp, in_channels, out_channels)

    out = jax.jit(up_forward)(x1, x2, params)
    out = jax.block_until_ready(out)

    assert out.shape == (N, out_channels, 2 * H, 2 * W), out.shape
    assert bool(jnp.all(jnp.isfinite(out)))

    # correctness vs. float32 reference (kernels run bf16 -> loose tolerance)
    ref = _ref_up_forward(x1, x2, params)
    max_err = float(jnp.max(jnp.abs(out - ref)))
    assert max_err < 0.1, f"max abs err {max_err}"

    print("KERNEL_OK")
</pallas_src>

<mosaic_0001>
module attributes {stable_mosaic.version = 11 : i64} {
  func.func @_upconv_kernel(%arg0: i32, %arg1: memref<8x8x8xbf16, #tpu.memory_space<vmem>>, %arg2: memref<8x256xbf16, #tpu.memory_space<vmem>>, %arg3: memref<1x256xf32, #tpu.memory_space<vmem>>, %arg4: memref<8x2x8x128xbf16, #tpu.memory_space<vmem>>) attributes {dimension_semantics = [#tpu.dimension_semantics<parallel>], iteration_bounds = array<i64: 2>, scalar_prefetch = 0 : i64, scratch_operands = 0 : i64, tpu.core_type = #tpu.core_type<tc>, window_params = [{transform_indices = @transform_0, window_bounds = array<i64: 8, 8, 8>}, {pipeline_mode = #tpu.pipeline_mode<synchronous>, transform_indices = @transform_1, window_bounds = array<i64: 8, 256>}, {pipeline_mode = #tpu.pipeline_mode<synchronous>, transform_indices = @transform_2, window_bounds = array<i64: 1, 256>}, {transform_indices = @transform_3, window_bounds = array<i64: 8, 2, 8, 128>}]} {
    %c0 = arith.constant 0 : index
    %c0_0 = arith.constant 0 : index
    %c0_1 = arith.constant 0 : index
    %0 = vector.load %arg1[%c0, %c0_0, %c0_1] : memref<8x8x8xbf16, #tpu.memory_space<vmem>>, vector<8x8x8xbf16>
    %1 = vector.shape_cast %0 : vector<8x8x8xbf16> to vector<64x8xbf16>
    %c0_2 = arith.constant 0 : index
    %c0_3 = arith.constant 0 : index
    %2 = vector.load %arg2[%c0_2, %c0_3] : memref<8x256xbf16, #tpu.memory_space<vmem>>, vector<8x256xbf16>
    %cst = arith.constant dense<0.000000e+00> : vector<64x256xf32>
    %3 = tpu.matmul %1, %2, %cst {dimension_numbers = #tpu.dot_dimension_numbers<[1], [0], [0], [1], [0, 0, 1, 1], [], []>} : vector<64x8xbf16>, vector<8x256xbf16>, vector<64x256xf32> -> vector<64x256xf32>
    %c0_4 = arith.constant 0 : index
    %c0_5 = arith.constant 0 : index
    %4 = vector.load %arg3[%c0_4, %c0_5] : memref<1x256xf32, #tpu.memory_space<vmem>>, vector<1x256xf32>
    %5 = vector.broadcast %4 : vector<1x256xf32> to vector<64x256xf32>
    %6 = arith.addf %3, %5 : vector<64x256xf32>
    %7 = vector.extract_strided_slice %6 {offsets = [0, 0], sizes = [64, 128], strides = [1, 1]} : vector<64x256xf32> to vector<64x128xf32>
    %8 = vector.shape_cast %7 : vector<64x128xf32> to vector<8x8x128xf32>
    %9 = arith.truncf %8 : vector<8x8x128xf32> to vector<8x8x128xbf16>
    %c0_6 = arith.constant 0 : index
    %c0_7 = arith.constant 0 : index
    %c0_8 = arith.constant 0 : index
    %c0_9 = arith.constant 0 : index
    %10 = vector.load %arg4[%c0_6, %c0_7, %c0_8, %c0_9] : memref<8x2x8x128xbf16, #tpu.memory_space<vmem>>, vector<8x1x8x128xbf16>
    %11 = vector.shape_cast %10 : vector<8x1x8x128xbf16> to vector<8x8x128xbf16>
    %12 = vector.shape_cast %9 : vector<8x8x128xbf16> to vector<8x1x8x128xbf16>
    tpu.vector_store %arg4[%c0_6, %c0_7, %c0_8, %c0_9], %12 {strides = array<i32>} : memref<8x2x8x128xbf16, #tpu.memory_space<vmem>>, vector<8x1x8x128xbf16>,
    %13 = vector.extract_strided_slice %6 {offsets = [0, 128], sizes = [64, 128], strides = [1, 1]} : vector<64x256xf32> to vector<64x128xf32>
    %14 = vector.shape_cast %13 : vector<64x128xf32> to vector<8x8x128xf32>
    %15 = arith.truncf %14 : vector<8x8x128xf32> to vector<8x8x128xbf16>
    %c0_10 = arith.constant 0 : index
    %c1 = arith.constant 1 : index
    %c0_11 = arith.constant 0 : index
    %c0_12 = arith.constant 0 : index
    %16 = vector.load %arg4[%c0_10, %c1, %c0_11, %c0_12] : memref<8x2x8x128xbf16, #tpu.memory_space<vmem>>, vector<8x1x8x128xbf16>
    %17 = vector.shape_cast %16 : vector<8x1x8x128xbf16> to vector<8x8x128xbf16>
    %18 = vector.shape_cast %15 : vector<8x8x128xbf16> to vector<8x1x8x128xbf16>
    tpu.vector_store %arg4[%c0_10, %c1, %c0_11, %c0_12], %18 {strides = array<i32>} : memref<8x2x8x128xbf16, #tpu.memory_space<vmem>>, vector<8x1x8x128xbf16>,
    return
  }
  func.func @transform_0(%arg0: i32) -> (i32, i32, i32) {
    %c0_i32 = arith.constant 0 : i32
    %c0_i32_0 = arith.constant 0 : i32
    %c0_i32_1 = arith.constant 0 : i32
    return %arg0, %c0_i32, %c0_i32_0 : i32, i32, i32
  }
  func.func @transform_1(%arg0: i32) -> (i32, i32) {
    %c0_i32 = arith.constant 0 : i32
    %c0_i32_0 = arith.constant 0 : i32
    %c0_i32_1 = arith.constant 0 : i32
    return %c0_i32, %c0_i32_0 : i32, i32
  }
  func.func @transform_2(%arg0: i32) -> (i32, i32) {
    %c0_i32 = arith.constant 0 : i32
    %c0_i32_0 = arith.constant 0 : i32
    %c0_i32_1 = arith.constant 0 : i32
    return %c0_i32, %c0_i32_0 : i32, i32
  }
  func.func @transform_3(%arg0: i32) -> (i32, i32, i32, i32) {
    %c0_i32 = arith.constant 0 : i32
    %c0_i32_0 = arith.constant 0 : i32
    %c0_i32_1 = arith.constant 0 : i32
    %c0_i32_2 = arith.constant 0 : i32
    return %arg0, %c0_i32, %c0_i32_0, %c0_i32_1 : i32, i32, i32, i32
  }
}

module attributes {stable_mosaic.version = 11 : i64} {
  func.func @_dconv_concat_kernel(%arg0: i32, %arg1: i32, %arg2: i32, %arg3: memref<1x16x16x4xbf16, #tpu.memory_space<vmem>>, %arg4: memref<1x16x16x64xbf16, #tpu.memory_space<vmem>>, %arg5: memref<3x12x128xbf16, #tpu.memory_space<vmem>>, %arg6: memref<3x192x128xbf16, #tpu.memory_space<vmem>>, %arg7: memref<1x128xf32, #tpu.memory_space<vmem>>, %arg8: memref<1x8x16x128xbf16, #tpu.memory_space<vmem>>) attributes {dimension_semantics = [#tpu.dimension_semantics<parallel>, #tpu.dimension_semantics<parallel>, #tpu.dimension_semantics<arbitrary>], iteration_bounds = array<i64: 2, 1, 2>, scalar_prefetch = 0 : i64, scratch_operands = 0 : i64, tpu.core_type = #tpu.core_type<tc>, window_params = [{transform_indices = @transform_0, window_bounds = array<i64: 1, 16, 16, 4>}, {transform_indices = @transform_1, window_bounds = array<i64: 1, 16, 16, 64>}, {transform_indices = @transform_2, window_bounds = array<i64: 3, 12, 128>}, {transform_indices = @transform_3, window_bounds = array<i64: 3, 192, 128>}, {transform_indices = @transform_4, window_bounds = array<i64: 1, 128>}, {transform_indices = @transform_5, window_bounds = array<i64: 1, 8, 16, 128>}]} {
    %c8_i32 = arith.constant 8 : i32
    %0 = arith.muli %arg2, %c8_i32 : i32
    %1 = tpu.assume_multiple %0, 8 : i32
    %2 = tpu.iota {dimensions = array<i32: 1>} : vector<8x16x1xi32>
    %3 = vector.shape_cast %2 : vector<8x16x1xi32> to vector<128x1xi32>
    %c0_i32 = arith.constant 0 : i32
    %4 = vector.broadcast %c0_i32 : i32 to vector<128x1xi32>
    %5 = arith.cmpi ne, %3, %4 : vector<128x1xi32>
    %c15_i32 = arith.constant 15 : i32
    %6 = vector.broadcast %c15_i32 : i32 to vector<128x1xi32>
    %7 = arith.cmpi ne, %3, %6 : vector<128x1xi32>
    %c0 = arith.constant 0 : index
    %8 = arith.index_cast %1 : i32 to index
    %c0_0 = arith.constant 0 : index
    %c0_1 = arith.constant 0 : index
    %9 = vector.load %arg3[%c0, %8, %c0_0, %c0_1] : memref<1x16x16x4xbf16, #tpu.memory_space<vmem>>, vector<1x8x16x4xbf16>
    %10 = vector.shape_cast %9 : vector<1x8x16x4xbf16> to vector<8x16x4xbf16>
    %11 = vector.shape_cast %10 : vector<8x16x4xbf16> to vector<128x4xbf16>
    %c1_i32 = arith.constant 1 : i32
    %12 = arith.subi %1, %c1_i32 : i32
    %c0_i32_2 = arith.constant 0 : i32
    %13 = arith.maxsi %12, %c0_i32_2 : i32
    %c0_3 = arith.constant 0 : index
    %14 = arith.index_cast %13 : i32 to index
    %c0_4 = arith.constant 0 : index
    %c0_5 = arith.constant 0 : index
    %15 = vector.load %arg3[%c0_3, %14, %c0_4, %c0_5] : memref<1x16x16x4xbf16, #tpu.memory_space<vmem>>, vector<1x1x16x4xbf16>
    %16 = vector.shape_cast %15 : vector<1x1x16x4xbf16> to vector<1x16x4xbf16>
    %17 = vector.shape_cast %16 : vector<1x16x4xbf16> to vector<16x4xbf16>
    %c8_i32_6 = arith.constant 8 : i32
    %18 = arith.addi %1, %c8_i32_6 : i32
    %c15_i32_7 = arith.constant 15 : i32
    %19 = arith.minsi %18, %c15_i32_7 : i32
    %c0_8 = arith.constant 0 : index
    %20 = arith.index_cast %19 : i32 to index
    %c0_9 = arith.constant 0 : index
    %c0_10 = arith.constant 0 : index
    %21 = vector.load %arg3[%c0_8, %20, %c0_9, %c0_10] : memref<1x16x16x4xbf16, #tpu.memory_space<vmem>>, vector<1x1x16x4xbf16>
    %22 = vector.shape_cast %21 : vector<1x1x16x4xbf16> to vector<1x16x4xbf16>
    %23 = vector.shape_cast %22 : vector<1x16x4xbf16> to vector<16x4xbf16>
    %c0_i32_11 = arith.constant 0 : i32
    %24 = arith.cmpi sgt, %1, %c0_i32_11 : i32
    %cst = arith.constant 0.000000e+00 : bf16
    %25 = vector.broadcast %cst : bf16 to vector<16x4xbf16>
    %26 = arith.select %24, %17, %25 : vector<16x4xbf16>
    %c8_i32_12 = arith.constant 8 : i32
    %27 = arith.addi %1, %c8_i32_12 : i32
    %c16_i32 = arith.constant 16 : i32
    %28 = arith.cmpi slt, %27, %c16_i32 : i32
    %cst_13 = arith.constant 0.000000e+00 : bf16
    %29 = vector.broadcast %cst_13 : bf16 to vector<16x4xbf16>
    %30 = arith.select %28, %23, %29 : vector<16x4xbf16>
    %cst_14 = arith.constant 0.000000e+00 : bf16
    %31 = vector.broadcast %cst_14 : bf16 to vector<1x4xbf16>
    %32 = tpu.concatenate %31, %26, %11, %30, %31 in 0 : vector<1x4xbf16>, vector<16x4xbf16>, vector<128x4xbf16>, vector<16x4xbf16>, vector<1x4xbf16> -> vector<162x4xbf16>
    %33 = vector.extract_strided_slice %32 {offsets = [0, 0], sizes = [128, 4], strides = [1, 1]} : vector<162x4xbf16> to vector<128x4xbf16>
    %34 = vector.extract_strided_slice %32 {offsets = [16, 0], sizes = [128, 4], strides = [1, 1]} : vector<162x4xbf16> to vector<128x4xbf16>
    %35 = vector.extract_strided_slice %32 {offsets = [32, 0], sizes = [128, 4], strides = [1, 1]} : vector<162x4xbf16> to vector<128x4xbf16>
    %36 = tpu.concatenate %33, %34, %35 in 1 : vector<128x4xbf16>, vector<128x4xbf16>, vector<128x4xbf16> -> vector<128x12xbf16>
    %c0_15 = arith.constant 0 : index
    %c0_16 = arith.constant 0 : index
    %c0_17 = arith.constant 0 : index
    %37 = vector.load %arg5[%c0_15, %c0_16, %c0_17] : memref<3x12x128xbf16, #tpu.memory_space<vmem>>, vector<1x12x128xbf16>
    %38 = vector.shape_cast %37 : vector<1x12x128xbf16> to vector<12x128xbf16>
    %cst_18 = arith.constant dense<0.000000e+00> : vector<128x128xf32>
    %39 = tpu.matmul %36, %38, %cst_18 {dimension_numbers = #tpu.dot_dimension_numbers<[1], [0], [0], [1], [0, 0, 1, 1], [], []>} : vector<128x12xbf16>, vector<12x128xbf16>, vector<128x128xf32> -> vector<128x128xf32>
    %cst_19 = arith.constant 0.000000e+00 : f32
    %40 = vector.shape_cast %5 : vector<128x1xi1> to vector<128x1xi1>
    %41 = vector.broadcast %40 : vector<128x1xi1> to vector<128x128xi1>
    %42 = vector.broadcast %cst_19 : f32 to vector<128x128xf32>
    %43 = arith.select %41, %39, %42 : vector<128x128xi1>, vector<128x128xf32>
    %44 = vector.extract_strided_slice %32 {offsets = [1, 0], sizes = [128, 4], strides = [1, 1]} : vector<162x4xbf16> to vector<128x4xbf16>
    %45 = vector.extract_strided_slice %32 {offsets = [17, 0], sizes = [128, 4], strides = [1, 1]} : vector<162x4xbf16> to vector<128x4xbf16>
    %46 = vector.extract_strided_slice %32 {offsets = [33, 0], sizes = [128, 4], strides = [1, 1]} : vector<162x4xbf16> to vector<128x4xbf16>
    %47 = tpu.concatenate %44, %45, %46 in 1 : vector<128x4xbf16>, vector<128x4xbf16>, vector<128x4xbf16> -> vector<128x12xbf16>
    %c1 = arith.constant 1 : index
    %c0_20 = arith.constant 0 : index
    %c0_21 = arith.constant 0 : index
    %48 = vector.load %arg5[%c1, %c0_20, %c0_21] : memref<3x12x128xbf16, #tpu.memory_space<vmem>>, vector<1x12x128xbf16>
    %49 = vector.shape_cast %48 : vector<1x12x128xbf16> to vector<12x128xbf16>
    %cst_22 = arith.constant dense<0.000000e+00> : vector<128x128xf32>
    %50 = tpu.matmul %47, %49, %cst_22 {dimension_numbers = #tpu.dot_dimension_numbers<[1], [0], [0], [1], [0, 0, 1, 1], [], []>} : vector<128x12xbf16>, vector<12x128xbf16>, vector<128x128xf32> -> vector<128x128xf32>
    %51 = arith.addf %43, %50 : vector<128x128xf32>
    %52 = vector.extract_strided_slice %32 {offsets = [2, 0], sizes = [128, 4], strides = [1, 1]} : vector<162x4xbf16> to vector<128x4xbf16>
    %53 = vector.extract_strided_slice %32 {offsets = [18, 0], sizes = [128, 4], strides = [1, 1]} : vector<162x4xbf16> to vector<128x4xbf16>
    %54 = vector.extract_strided_slice %32 {offsets = [34, 0], sizes = [128, 4], strides = [1, 1]} : vector<162x4xbf16> to vector<128x4xbf16>
    %55 = tpu.concatenate %52, %53, %54 in 1 : vector<128x4xbf16>, vector<128x4xbf16>, vector<128x4xbf16> -> vector<128x12xbf16>
    %c2 = arith.constant 2 : index
    %c0_23 = arith.constant 0 : index
    %c0_24 = arith.constant 0 : index
    %56 = vector.load %arg5[%c2, %c0_23, %c0_24] : memref<3x12x128xbf16, #tpu.memory_space<vmem>>, vector<1x12x128xbf16>
    %57 = vector.shape_cast %56 : vector<1x12x128xbf16> to vector<12x128xbf16>
    %cst_25 = arith.constant dense<0.000000e+00> : vector<128x128xf32>
    %58 = tpu.matmul %55, %57, %cst_25 {dimension_numbers = #tpu.dot_dimension_numbers<[1], [0], [0], [1], [0, 0, 1, 1], [], []>} : vector<128x12xbf16>, vector<12x128xbf16>, vector<128x128xf32> -> vector<128x128xf32>
    %cst_26 = arith.constant 0.000000e+00 : f32
    %59 = vector.shape_cast %7 : vector<128x1xi1> to vector<128x1xi1>
    %60 = vector.broadcast %59 : vector<128x1xi1> to vector<128x128xi1>
    %61 = vector.broadcast %cst_26 : f32 to vector<128x128xf32>
    %62 = arith.select %60, %58, %61 : vector<128x128xi1>, vector<128x128xf32>
    %63 = arith.addf %51, %62 : vector<128x128xf32>
    %c0_27 = arith.constant 0 : index
    %64 = arith.index_cast %1 : i32 to index
    %c0_28 = arith.constant 0 : index
    %c0_29 = arith.constant 0 : index
    %65 = vector.load %arg4[%c0_27, %64, %c0_28, %c0_29] : memref<1x16x16x64xbf16, #tpu.memory_space<vmem>>, vector<1x8x16x64xbf16>
    %66 = vector.shape_cast %65 : vector<1x8x16x64xbf16> to vector<8x16x64xbf16>
    %67 = vector.shape_cast %66 : vector<8x16x64xbf16> to vector<128x64xbf16>
    %c1_i32_30 = arith.constant 1 : i32
    %68 = arith.subi %1, %c1_i32_30 : i32
    %c0_i32_31 = arith.constant 0 : i32
    %69 = arith.maxsi %68, %c0_i32_31 : i32
    %c0_32 = arith.constant 0 : index
    %70 = arith.index_cast %69 : i32 to index
    %c0_33 = arith.constant 0 : index
    %c0_34 = arith.constant 0 : index
    %71 = vector.load %arg4[%c0_32, %70, %c0_33, %c0_34] : memref<1x16x16x64xbf16, #tpu.memory_space<vmem>>, vector<1x1x16x64xbf16>
    %72 = vector.shape_cast %71 : vector<1x1x16x64xbf16> to vector<1x16x64xbf16>
    %73 = vector.shape_cast %72 : vector<1x16x64xbf16> to vector<16x64xbf16>
    %c8_i32_35 = arith.constant 8 : i32
    %74 = arith.addi %1, %c8_i32_35 : i32
    %c15_i32_36 = arith.constant 15 : i32
    %75 = arith.minsi %74, %c15_i32_36 : i32
    %c0_37 = arith.constant 0 : index
    %76 = arith.index_cast %75 : i32 to index
    %c0_38 = arith.constant 0 : index
    %c0_39 = arith.constant 0 : index
    %77 = vector.load %arg4[%c0_37, %76, %c0_38, %c0_39] : memref<1x16x16x64xbf16, #tpu.memory_space<vmem>>, vector<1x1x16x64xbf16>
    %78 = vector.shape_cast %77 : vector<1x1x16x64xbf16> to vector<1x16x64xbf16>
    %79 = vector.shape_cast %78 : vector<1x16x64xbf16> to vector<16x64xbf16>
    %c0_i32_40 = arith.constant 0 : i32
    %80 = arith.cmpi sgt, %1, %c0_i32_40 : i32
    %cst_41 = arith.constant 0.000000e+00 : bf16
    %81 = vector.broadcast %cst_41 : bf16 to vector<16x64xbf16>
    %82 = arith.select %80, %73, %81 : vector<16x64xbf16>
    %c8_i32_42 = arith.constant 8 : i32
    %83 = arith.addi %1, %c8_i32_42 : i32
    %c16_i32_43 = arith.constant 16 : i32
    %84 = arith.cmpi slt, %83, %c16_i32_43 : i32
    %cst_44 = arith.constant 0.000000e+00 : bf16
    %85 = vector.broadcast %cst_44 : bf16 to vector<16x64xbf16>
    %86 = arith.select %84, %79, %85 : vector<16x64xbf16>
    %cst_45 = arith.constant 0.000000e+00 : bf16
    %87 = vector.broadcast %cst_45 : bf16 to vector<1x64xbf16>
    %88 = tpu.concatenate %87, %82, %67, %86, %87 in 0 : vector<1x64xbf16>, vector<16x64xbf16>, vector<128x64xbf16>, vector<16x64xbf16>, vector<1x64xbf16> -> vector<162x64xbf16>
    %89 = vector.extract_strided_slice %88 {offsets = [0, 0], sizes = [128, 64], strides = [1, 1]} : vector<162x64xbf16> to vector<128x64xbf16>
    %90 = vector.extract_strided_slice %88 {offsets = [16, 0], sizes = [128, 64], strides = [1, 1]} : vector<162x64xbf16> to vector<128x64xbf16>
    %91 = vector.extract_strided_slice %88 {offsets = [32, 0], sizes = [128, 64], strides = [1, 1]} : vector<162x64xbf16> to vector<128x64xbf16>
    %92 = tpu.concatenate %89, %90, %91 in 1 : vector<128x64xbf16>, vector<128x64xbf16>, vector<128x64xbf16> -> vector<128x192xbf16>
    %c0_46 = arith.constant 0 : index
    %c0_47 = arith.constant 0 : index
    %c0_48 = arith.constant 0 : index
    %93 = vector.load %arg6[%c0_46, %c0_47, %c0_48] : memref<3x192x128xbf16, #tpu.memory_space<vmem>>, vector<1x192x128xbf16>
    %94 = vector.shape_cast %93 : vector<1x192x128xbf16> to vector<192x128xbf16>
    %cst_49 = arith.constant dense<0.000000e+00> : vector<128x128xf32>
    %95 = tpu.matmul %92, %94, %cst_49 {dimension_numbers = #tpu.dot_dimension_numbers<[1], [0], [0], [1], [0, 0, 1, 1], [], []>} : vector<128x192xbf16>, vector<192x128xbf16>, vector<128x128xf32> -> vector<128x128xf32>
    %cst_50 = arith.constant 0.000000e+00 : f32
    %96 = vector.shape_cast %5 : vector<128x1xi1> to vector<128x1xi1>
    %97 = vector.broadcast %96 : vector<128x1xi1> to vector<128x128xi1>
    %98 = vector.broadcast %cst_50 : f32 to vector<128x128xf32>
    %99 = arith.select %97, %95, %98 : vector<128x128xi1>, vector<128x128xf32>
    %100 = arith.addf %63, %99 : vector<128x128xf32>
    %101 = vector.extract_strided_slice %88 {offsets = [1, 0], sizes = [128, 64], strides = [1, 1]} : vector<162x64xbf16> to vector<128x64xbf16>
    %102 = vector.extract_strided_slice %88 {offsets = [17, 0], sizes = [128, 64], strides = [1, 1]} : vector<162x64xbf16> to vector<128x64xbf16>
    %103 = vector.extract_strided_slice %88 {offsets = [33, 0], sizes = [128, 64], strides = [1, 1]} : vector<162x64xbf16> to vector<128x64xbf16>
    %104 = tpu.concatenate %101, %102, %103 in 1 : vector<128x64xbf16>, vector<128x64xbf16>, vector<128x64xbf16> -> vector<128x192xbf16>
    %c1_51 = arith.constant 1 : index
    %c0_52 = arith.constant 0 : index
    %c0_53 = arith.constant 0 : index
    %105 = vector.load %arg6[%c1_51, %c0_52, %c0_53] : memref<3x192x128xbf16, #tpu.memory_space<vmem>>, vector<1x192x128xbf16>
    %106 = vector.shape_cast %105 : vector<1x192x128xbf16> to vector<192x128xbf16>
    %cst_54 = arith.constant dense<0.000000e+00> : vector<128x128xf32>
    %107 = tpu.matmul %104, %106, %cst_54 {dimension_numbers = #tpu.dot_dimension_numbers<[1], [0], [0], [1], [0, 0, 1, 1], [], []>} : vector<128x192xbf16>, vector<192x128xbf16>, vector<128x128xf32> -> vector<128x128xf32>
    %108 = arith.addf %100, %107 : vector<128x128xf32>
    %109 = vector.extract_strided_slice %88 {offsets = [2, 0], sizes = [128, 64], strides = [1, 1]} : vector<162x64xbf16> to vector<128x64xbf16>
    %110 = vector.extract_strided_slice %88 {offsets = [18, 0], sizes = [128, 64], strides = [1, 1]} : vector<162x64xbf16> to vector<128x64xbf16>
    %111 = vector.extract_strided_slice %88 {offsets = [34, 0], sizes = [128, 64], strides = [1, 1]} : vector<162x64xbf16> to vector<128x64xbf16>
    %112 = tpu.concatenate %109, %110, %111 in 1 : vector<128x64xbf16>, vector<128x64xbf16>, vector<128x64xbf16> -> vector<128x192xbf16>
    %c2_55 = arith.constant 2 : index
    %c0_56 = arith.constant 0 : index
    %c0_57 = arith.constant 0 : index
    %113 = vector.load %arg6[%c2_55, %c0_56, %c0_57] : memref<3x192x128xbf16, #tpu.memory_space<vmem>>, vector<1x192x128xbf16>
    %114 = vector.shape_cast %113 : vector<1x192x128xbf16> to vector<192x128xbf16>
    %cst_58 = arith.constant dense<0.000000e+00> : vector<128x128xf32>
    %115 = tpu.matmul %112, %114, %cst_58 {dimension_numbers = #tpu.dot_dimension_numbers<[1], [0], [0], [1], [0, 0, 1, 1], [], []>} : vector<128x192xbf16>, vector<192x128xbf16>, vector<128x128xf32> -> vector<128x128xf32>
    %cst_59 = arith.constant 0.000000e+00 : f32
    %116 = vector.shape_cast %7 : vector<128x1xi1> to vector<128x1xi1>
    %117 = vector.broadcast %116 : vector<128x1xi1> to vector<128x128xi1>
    %118 = vector.broadcast %cst_59 : f32 to vector<128x128xf32>
    %119 = arith.select %117, %115, %118 : vector<128x128xi1>, vector<128x128xf32>
    %120 = arith.addf %108, %119 : vector<128x128xf32>
    %c0_60 = arith.constant 0 : index
    %c0_61 = arith.constant 0 : index
    %121 = vector.load %arg7[%c0_60, %c0_61] : memref<1x128xf32, #tpu.memory_space<vmem>>, vector<1x128xf32>
    %122 = vector.broadcast %121 : vector<1x128xf32> to vector<128x128xf32>
    %123 = arith.addf %120, %122 : vector<128x128xf32>
    %cst_62 = arith.constant 0.000000e+00 : f32
    %124 = vector.broadcast %cst_62 : f32 to vector<128x128xf32>
    %125 = arith.maximumf %123, %124 : vector<128x128xf32>
    %126 = vector.shape_cast %125 : vector<128x128xf32> to vector<8x16x128xf32>
    %127 = arith.truncf %126 : vector<8x16x128xf32> to vector<8x16x128xbf16>
    %c0_63 = arith.constant 0 : index
    %c0_64 = arith.constant 0 : index
    %c0_65 = arith.constant 0 : index
    %c0_66 = arith.constant 0 : index
    %128 = vector.load %arg8[%c0_63, %c0_64, %c0_65, %c0_66] : memref<1x8x16x128xbf16, #tpu.memory_space<vmem>>, vector<1x8x16x128xbf16>
    %129 = vector.shape_cast %128 : vector<1x8x16x128xbf16> to vector<8x16x128xbf16>
    %130 = vector.shape_cast %127 : vector<8x16x128xbf16> to vector<1x8x16x128xbf16>
    tpu.vector_store %arg8[%c0_63, %c0_64, %c0_65, %c0_66], %130 {strides = array<i32>} : memref<1x8x16x128xbf16, #tpu.memory_space<vmem>>, vector<1x8x16x128xbf16>,
    return
  }
  func.func @transform_0(%arg0: i32, %arg1: i32, %arg2: i32) -> (i32, i32, i32, i32) {
    %c0_i32 = arith.constant 0 : i32
    %c0_i32_0 = arith.constant 0 : i32
    %c0_i32_1 = arith.constant 0 : i32
    %c0_i32_2 = arith.constant 0 : i32
    return %arg0, %c0_i32, %c0_i32_0, %c0_i32_1 : i32, i32, i32, i32
  }
  func.func @transform_1(%arg0: i32, %arg1: i32, %arg2: i32) -> (i32, i32, i32, i32) {
    %c0_i32 = arith.constant 0 : i32
    %c0_i32_0 = arith.constant 0 : i32
    %c0_i32_1 = arith.constant 0 : i32
    %c0_i32_2 = arith.constant 0 : i32
    return %arg0, %c0_i32, %c0_i32_0, %c0_i32_1 : i32, i32, i32, i32
  }
  func.func @transform_2(%arg0: i32, %arg1: i32, %arg2: i32) -> (i32, i32, i32) {
    %c0_i32 = arith.constant 0 : i32
    %c0_i32_0 = arith.constant 0 : i32
    %c0_i32_1 = arith.constant 0 : i32
    return %c0_i32, %c0_i32_0, %arg1 : i32, i32, i32
  }
  func.func @transform_3(%arg0: i32, %arg1: i32, %arg2: i32) -> (i32, i32, i32) {
    %c0_i32 = arith.constant 0 : i32
    %c0_i32_0 = arith.constant 0 : i32
    %c0_i32_1 = arith.constant 0 : i32
    return %c0_i32, %c0_i32_0, %arg1 : i32, i32, i32
  }
  func.func @transform_4(%arg0: i32, %arg1: i32, %arg2: i32) -> (i32, i32) {
    %c0_i32 = arith.constant 0 : i32
    %c0_i32_0 = arith.constant 0 : i32
    return %c0_i32, %arg1 : i32, i32
  }
  func.func @transform_5(%arg0: i32, %arg1: i32, %arg2: i32) -> (i32, i32, i32, i32) {
    %c0_i32 = arith.constant 0 : i32
    %c0_i32_0 = arith.constant 0 : i32
    return %arg0, %arg2, %c0_i32, %arg1 : i32, i32, i32, i32
  }
}

module attributes {stable_mosaic.version = 11 : i64} {
  func.func @_dconv_kernel(%arg0: i32, %arg1: i32, %arg2: i32, %arg3: memref<1x16x16x128xbf16, #tpu.memory_space<vmem>>, %arg4: memref<3x384x128xbf16, #tpu.memory_space<vmem>>, %arg5: memref<1x128xf32, #tpu.memory_space<vmem>>, %arg6: memref<1x8x16x128xf32, #tpu.memory_space<vmem>>) attributes {dimension_semantics = [#tpu.dimension_semantics<parallel>, #tpu.dimension_semantics<parallel>, #tpu.dimension_semantics<arbitrary>], iteration_bounds = array<i64: 2, 1, 2>, scalar_prefetch = 0 : i64, scratch_operands = 0 : i64, tpu.core_type = #tpu.core_type<tc>, window_params = [{transform_indices = @transform_0, window_bounds = array<i64: 1, 16, 16, 128>}, {transform_indices = @transform_1, window_bounds = array<i64: 3, 384, 128>}, {transform_indices = @transform_2, window_bounds = array<i64: 1, 128>}, {transform_indices = @transform_3, window_bounds = array<i64: 1, 8, 16, 128>}]} {
    %c8_i32 = arith.constant 8 : i32
    %0 = arith.muli %arg2, %c8_i32 : i32
    %1 = tpu.assume_multiple %0, 8 : i32
    %2 = tpu.iota {dimensions = array<i32: 1>} : vector<8x16x1xi32>
    %3 = vector.shape_cast %2 : vector<8x16x1xi32> to vector<128x1xi32>
    %c0_i32 = arith.constant 0 : i32
    %4 = vector.broadcast %c0_i32 : i32 to vector<128x1xi32>
    %5 = arith.cmpi ne, %3, %4 : vector<128x1xi32>
    %c15_i32 = arith.constant 15 : i32
    %6 = vector.broadcast %c15_i32 : i32 to vector<128x1xi32>
    %7 = arith.cmpi ne, %3, %6 : vector<128x1xi32>
    %c0 = arith.constant 0 : index
    %8 = arith.index_cast %1 : i32 to index
    %c0_0 = arith.constant 0 : index
    %c0_1 = arith.constant 0 : index
    %9 = vector.load %arg3[%c0, %8, %c0_0, %c0_1] : memref<1x16x16x128xbf16, #tpu.memory_space<vmem>>, vector<1x8x16x128xbf16>
    %10 = vector.shape_cast %9 : vector<1x8x16x128xbf16> to vector<8x16x128xbf16>
    %11 = vector.shape_cast %10 : vector<8x16x128xbf16> to vector<128x128xbf16>
    %c1_i32 = arith.constant 1 : i32
    %12 = arith.subi %1, %c1_i32 : i32
    %c0_i32_2 = arith.constant 0 : i32
    %13 = arith.maxsi %12, %c0_i32_2 : i32
    %c0_3 = arith.constant 0 : index
    %14 = arith.index_cast %13 : i32 to index
    %c0_4 = arith.constant 0 : index
    %c0_5 = arith.constant 0 : index
    %15 = vector.load %arg3[%c0_3, %14, %c0_4, %c0_5] : memref<1x16x16x128xbf16, #tpu.memory_space<vmem>>, vector<1x1x16x128xbf16>
    %16 = vector.shape_cast %15 : vector<1x1x16x128xbf16> to vector<1x16x128xbf16>
    %17 = vector.shape_cast %16 : vector<1x16x128xbf16> to vector<16x128xbf16>
    %c8_i32_6 = arith.constant 8 : i32
    %18 = arith.addi %1, %c8_i32_6 : i32
    %c15_i32_7 = arith.constant 15 : i32
    %19 = arith.minsi %18, %c15_i32_7 : i32
    %c0_8 = arith.constant 0 : index
    %20 = arith.index_cast %19 : i32 to index
    %c0_9 = arith.constant 0 : index
    %c0_10 = arith.constant 0 : index
    %21 = vector.load %arg3[%c0_8, %20, %c0_9, %c0_10] : memref<1x16x16x128xbf16, #tpu.memory_space<vmem>>, vector<1x1x16x128xbf16>
    %22 = vector.shape_cast %21 : vector<1x1x16x128xbf16> to vector<1x16x128xbf16>
    %23 = vector.shape_cast %22 : vector<1x16x128xbf16> to vector<16x128xbf16>
    %c0_i32_11 = arith.constant 0 : i32
    %24 = arith.cmpi sgt, %1, %c0_i32_11 : i32
    %cst = arith.constant 0.000000e+00 : bf16
    %25 = vector.broadcast %cst : bf16 to vector<16x128xbf16>
    %26 = arith.select %24, %17, %25 : vector<16x128xbf16>
    %c8_i32_12 = arith.constant 8 : i32
    %27 = arith.addi %1, %c8_i32_12 : i32
    %c16_i32 = arith.constant 16 : i32
    %28 = arith.cmpi slt, %27, %c16_i32 : i32
    %cst_13 = arith.constant 0.000000e+00 : bf16
    %29 = vector.broadcast %cst_13 : bf16 to vector<16x128xbf16>
    %30 = arith.select %28, %23, %29 : vector<16x128xbf16>
    %cst_14 = arith.constant 0.000000e+00 : bf16
    %31 = vector.broadcast %cst_14 : bf16 to vector<1x128xbf16>
    %32 = tpu.concatenate %31, %26, %11, %30, %31 in 0 : vector<1x128xbf16>, vector<16x128xbf16>, vector<128x128xbf16>, vector<16x128xbf16>, vector<1x128xbf16> -> vector<162x128xbf16>
    %33 = vector.extract_strided_slice %32 {offsets = [0, 0], sizes = [128, 128], strides = [1, 1]} : vector<162x128xbf16> to vector<128x128xbf16>
    %34 = vector.extract_strided_slice %32 {offsets = [16, 0], sizes = [128, 128], strides = [1, 1]} : vector<162x128xbf16> to vector<128x128xbf16>
    %35 = vector.extract_strided_slice %32 {offsets = [32, 0], sizes = [128, 128], strides = [1, 1]} : vector<162x128xbf16> to vector<128x128xbf16>
    %36 = tpu.concatenate %33, %34, %35 in 1 : vector<128x128xbf16>, vector<128x128xbf16>, vector<128x128xbf16> -> vector<128x384xbf16>
    %c0_15 = arith.constant 0 : index
    %c0_16 = arith.constant 0 : index
    %c0_17 = arith.constant 0 : index
    %37 = vector.load %arg4[%c0_15, %c0_16, %c0_17] : memref<3x384x128xbf16, #tpu.memory_space<vmem>>, vector<1x384x128xbf16>
    %38 = vector.shape_cast %37 : vector<1x384x128xbf16> to vector<384x128xbf16>
    %cst_18 = arith.constant dense<0.000000e+00> : vector<128x128xf32>
    %39 = tpu.matmul %36, %38, %cst_18 {dimension_numbers = #tpu.dot_dimension_numbers<[1], [0], [0], [1], [0, 0, 1, 1], [], []>} : vector<128x384xbf16>, vector<384x128xbf16>, vector<128x128xf32> -> vector<128x128xf32>
    %cst_19 = arith.constant 0.000000e+00 : f32
    %40 = vector.shape_cast %5 : vector<128x1xi1> to vector<128x1xi1>
    %41 = vector.broadcast %40 : vector<128x1xi1> to vector<128x128xi1>
    %42 = vector.broadcast %cst_19 : f32 to vector<128x128xf32>
    %43 = arith.select %41, %39, %42 : vector<128x128xi1>, vector<128x128xf32>
    %44 = vector.extract_strided_slice %32 {offsets = [1, 0], sizes = [128, 128], strides = [1, 1]} : vector<162x128xbf16> to vector<128x128xbf16>
    %45 = vector.extract_strided_slice %32 {offsets = [17, 0], sizes = [128, 128], strides = [1, 1]} : vector<162x128xbf16> to vector<128x128xbf16>
    %46 = vector.extract_strided_slice %32 {offsets = [33, 0], sizes = [128, 128], strides = [1, 1]} : vector<162x128xbf16> to vector<128x128xbf16>
    %47 = tpu.concatenate %44, %45, %46 in 1 : vector<128x128xbf16>, vector<128x128xbf16>, vector<128x128xbf16> -> vector<128x384xbf16>
    %c1 = arith.constant 1 : index
    %c0_20 = arith.constant 0 : index
    %c0_21 = arith.constant 0 : index
    %48 = vector.load %arg4[%c1, %c0_20, %c0_21] : memref<3x384x128xbf16, #tpu.memory_space<vmem>>, vector<1x384x128xbf16>
    %49 = vector.shape_cast %48 : vector<1x384x128xbf16> to vector<384x128xbf16>
    %cst_22 = arith.constant dense<0.000000e+00> : vector<128x128xf32>
    %50 = tpu.matmul %47, %49, %cst_22 {dimension_numbers = #tpu.dot_dimension_numbers<[1], [0], [0], [1], [0, 0, 1, 1], [], []>} : vector<128x384xbf16>, vector<384x128xbf16>, vector<128x128xf32> -> vector<128x128xf32>
    %51 = arith.addf %43, %50 : vector<128x128xf32>
    %52 = vector.extract_strided_slice %32 {offsets = [2, 0], sizes = [128, 128], strides = [1, 1]} : vector<162x128xbf16> to vector<128x128xbf16>
    %53 = vector.extract_strided_slice %32 {offsets = [18, 0], sizes = [128, 128], strides = [1, 1]} : vector<162x128xbf16> to vector<128x128xbf16>
    %54 = vector.extract_strided_slice %32 {offsets = [34, 0], sizes = [128, 128], strides = [1, 1]} : vector<162x128xbf16> to vector<128x128xbf16>
    %55 = tpu.concatenate %52, %53, %54 in 1 : vector<128x128xbf16>, vector<128x128xbf16>, vector<128x128xbf16> -> vector<128x384xbf16>
    %c2 = arith.constant 2 : index
    %c0_23 = arith.constant 0 : index
    %c0_24 = arith.constant 0 : index
    %56 = vector.load %arg4[%c2, %c0_23, %c0_24] : memref<3x384x128xbf16, #tpu.memory_space<vmem>>, vector<1x384x128xbf16>
    %57 = vector.shape_cast %56 : vector<1x384x128xbf16> to vector<384x128xbf16>
    %cst_25 = arith.constant dense<0.000000e+00> : vector<128x128xf32>
    %58 = tpu.matmul %55, %57, %cst_25 {dimension_numbers = #tpu.dot_dimension_numbers<[1], [0], [0], [1], [0, 0, 1, 1], [], []>} : vector<128x384xbf16>, vector<384x128xbf16>, vector<128x128xf32> -> vector<128x128xf32>
    %cst_26 = arith.constant 0.000000e+00 : f32
    %59 = vector.shape_cast %7 : vector<128x1xi1> to vector<128x1xi1>
    %60 = vector.broadcast %59 : vector<128x1xi1> to vector<128x128xi1>
    %61 = vector.broadcast %cst_26 : f32 to vector<128x128xf32>
    %62 = arith.select %60, %58, %61 : vector<128x128xi1>, vector<128x128xf32>
    %63 = arith.addf %51, %62 : vector<128x128xf32>
    %c0_27 = arith.constant 0 : index
    %c0_28 = arith.constant 0 : index
    %64 = vector.load %arg5[%c0_27, %c0_28] : memref<1x128xf32, #tpu.memory_space<vmem>>, vector<1x128xf32>
    %65 = vector.broadcast %64 : vector<1x128xf32> to vector<128x128xf32>
    %66 = arith.addf %63, %65 : vector<128x128xf32>
    %cst_29 = arith.constant 0.000000e+00 : f32
    %67 = vector.broadcast %cst_29 : f32 to vector<128x128xf32>
    %68 = arith.maximumf %66, %67 : vector<128x128xf32>
    %69 = vector.shape_cast %68 : vector<128x128xf32> to vector<8x16x128xf32>
    %c0_30 = arith.constant 0 : index
    %c0_31 = arith.constant 0 : index
    %c0_32 = arith.constant 0 : index
    %c0_33 = arith.constant 0 : index
    %70 = vector.load %arg6[%c0_30, %c0_31, %c0_32, %c0_33] : memref<1x8x16x128xf32, #tpu.memory_space<vmem>>, vector<1x8x16x128xf32>
    %71 = vector.shape_cast %70 : vector<1x8x16x128xf32> to vector<8x16x128xf32>
    %72 = vector.shape_cast %69 : vector<8x16x128xf32> to vector<1x8x16x128xf32>
    tpu.vector_store %arg6[%c0_30, %c0_31, %c0_32, %c0_33], %72 {strides = array<i32>} : memref<1x8x16x128xf32, #tpu.memory_space<vmem>>, vector<1x8x16x128xf32>,
    return
  }
  func.func @transform_0(%arg0: i32, %arg1: i32, %arg2: i32) -> (i32, i32, i32, i32) {
    %c0_i32 = arith.constant 0 : i32
    %c0_i32_0 = arith.constant 0 : i32
    %c0_i32_1 = arith.constant 0 : i32
    %c0_i32_2 = arith.constant 0 : i32
    return %arg0, %c0_i32, %c0_i32_0, %c0_i32_1 : i32, i32, i32, i32
  }
  func.func @transform_1(%arg0: i32, %arg1: i32, %arg2: i32) -> (i32, i32, i32) {
    %c0_i32 = arith.constant 0 : i32
    %c0_i32_0 = arith.constant 0 : i32
    %c0_i32_1 = arith.constant 0 : i32
    return %c0_i32, %c0_i32_0, %arg1 : i32, i32, i32
  }
  func.func @transform_2(%arg0: i32, %arg1: i32, %arg2: i32) -> (i32, i32) {
    %c0_i32 = arith.constant 0 : i32
    %c0_i32_0 = arith.constant 0 : i32
    return %c0_i32, %arg1 : i32, i32
  }
  func.func @transform_3(%arg0: i32, %arg1: i32, %arg2: i32) -> (i32, i32, i32, i32) {
    %c0_i32 = arith.constant 0 : i32
    %c0_i32_0 = arith.constant 0 : i32
    return %arg0, %arg2, %c0_i32, %arg1 : i32, i32, i32, i32
  }
}

</mosaic_0001>

<llo_original>
// kernel: tile.8
$region0: #{tile.8}
  #allocation0 [shape = 's32[1]{0}', space=sflag, size = 0x4, scoped, tag = 'scoped memory for tile.8']
  %s0 = inlined_call_operand.vmem [shape: f32[64], index: 0, kind: input, shape index: {}]
  %s1 = inlined_call_operand.vmem [shape: f32[4,64], index: 1, kind: output, shape index: {}]
  // Predicated region
  $region2: #{tile.8} parent=0 // pred_check
    _
  $region3: #{tile.8} parent=0 // pred_check_branch
    %3 = sbr.rel (0) target = $region5
  $region4: #{tile.8} parent=0 // pred_region
    _
  $region5: #{tile.8} parent=0 // pred_fallthru
    _
  %v4 = vld [vmem:[%s0] ss:$0 sm:$0xff]
  %5 = vst [vmem:[%s1] sm:$0xf] %v4

// kernel: tile.9
$region0: #{tile.9}
  %s0 = inlined_call_operand.vmem [shape: f32[4,64], index: 0, kind: input, shape index: {}]
  %s1 = inlined_call_operand.vmem [shape: f32[1,256], index: 1, kind: output, shape index: {}]
  $region1: #{tile.9} parent=0
    #allocation0 [shape = 'u8[8192]{0}', space=vmem, size = 0x2000, scoped, tag = 'scoped mem for output reshape']
    #allocation1 [shape = 'u8[4096]{0}', space=vmem, size = 0x1000, scoped, tag = 'scoped mem for input reshape']
    %s3 = sshllo.u32 0, 4
    %v4 = vld [vmem:[%s0] sm:%s3]
    %5 = vst [vmem:[#allocation1] sm:%s3] %v4
    %s6 = smov 3
    %v7 = vld [vmem:[#allocation1] ss:$2 sm:%s6]
    %vm8 = vcmask 523264
    %9 = vst.msk [vmem:[#allocation0] ss:$8 sm:$0x3] %vm8, %v7
    %s10 = scalar_lea.vmem [#allocation1], 1
    %s11 = smov 3
    %v12 = vld [vmem:[%s10] ss:$2 sm:%s11]
    %13 = vrot.lane.b32.xlu0 %v12, 64
    %v14 = vpop.permute.xlu0 %13
    %vm15 = vcmask 1048064
    %16 = vst.msk [vmem:[#allocation0] ss:$8 sm:$0x3] %vm15, %v14
    %s18 = sshllo.u32 0, 1
    %v20 = vld [vmem:[#allocation0] sm:%s18]
    %s21 = sshllo.u32 0, 1
    %22 = vst [vmem:[%s1] sm:%s21] %v20
    %s23 = scalar_lea.vmem [#allocation0], 8
    %v24 = vld [vmem:[%s23] sm:%s18]
    %s25 = sshllo.u32 0, 1
    %s26 = scalar_lea.vmem %s1, 1
    %27 = vst [vmem:[%s26] sm:%s25] %v24

// kernel: up_forward.3
$region0: #{up_forward.3}
  #allocation0 [shape = 'u32[]', space=smem, size = 0x4, offset = 0x4, fixed_abs, tag = 'smem constant byte address 0x4 - core index']
  #allocation1 [shape = 'u32[144,128]{1,0:T(1,128)}', space=vmem, size = 0x12000, scoped, tag = 'internal scratch']
  %s0 = inlined_call_operand.vmem [shape: bf16[16,8,8], index: 0, kind: input, shape index: {}]
  %s1 = inlined_call_operand.vmem [shape: bf16[8,256], index: 1, kind: input, shape index: {}]
  %s2 = inlined_call_operand.vmem [shape: f32[1,256], index: 2, kind: input, shape index: {}]
  %s3 = inlined_call_operand.vmem [shape: bf16[16,2,8,128], index: 3, kind: output, shape index: {}]
  %s4 = sld [smem:[#allocation0]]
  $region45: #{up_forward.3} parent=0
    _
  %s6 = ssub.s32 1, %s4
  %s7 = scalar_select 0, %s6, %s4
  loop: start=0, step=1, limit=4
  $region2: #{up_forward.3} parent=0 // loop_pre_header
    _
  $region3: #{up_forward.3} parent=0 // loop_header
    %s9 = sphi 0, %s13
    %p10 = scmp.ge.s32.totalorder %s9, 4
    %s19 = sphi 0, %s21
    %s22 = sphi 0, %s19
    %s23 = sphi 0, %s22
    %s39 = sphi 0, %s23
    %s43 = sphi 0, %s43
    %s45 = sphi 0, %s43
    %s46 = sphi 0, %s45
    %s60 = sphi 0, %s46
    %s64 = sphi 0, %s64
    %s66 = sphi 0, %s64
    %s67 = sphi 0, %s66
    %s81 = sphi 0, %s67
    %s87 = sphi 0, %s89
    %s90 = sphi 0, %s87
    %s91 = sphi 0, %s90
    %s107 = sphi 0, %s91
  $region4: #{up_forward.3} parent=0 // loop_header_branch
    %12 = sbr.rel (%p10) target = $region8
  $region5: #{up_forward.3} parent=0 // loop_body
    %s14 = ssub.s32 %s9, 1
    %s15 = ssub.s32 %s9, 2
    %s16 = sadd.s32 %s9, 1
    %s17 = ssub.s32 %s9, %s16
    %p18 = scmp.eq.s32.totalorder %s17, 0
    %s20 = sadd.s32 %s19, 1
    %s21 = scalar_select %p18, %s19, %s20
    %p24 = pneg %p18
    %p25 = scmp.eq.s32.totalorder %s9, 1
    %p26 = por %p24, %p25
    %p27 = scmp.ne.s32.totalorder %s19, %s22
    %p28 = scmp.eq.s32.totalorder %s9, 0
    %p29 = por %p27, %p28
    %p30 = scmp.ne.s32.totalorder %s19, %s22
    %p31 = scmp.eq.s32.totalorder %s14, 1
    %p32 = por %p30, %p31
    %p33 = scmp.ne.s32.totalorder %s22, %s23
    %p34 = scmp.eq.s32.totalorder %s14, 0
    %p35 = por %p33, %p34
    %p36 = scmp.ne.s32.totalorder %s22, %s23
    %p37 = scmp.eq.s32.totalorder %s15, 1
    %p38 = por %p36, %p37
    %p40 = scmp.ne.s32.totalorder %s23, %s39
    %p41 = scmp.eq.s32.totalorder %s15, 0
    %p42 = por %p40, %p41
    %s44 = sadd.s32 %s43, 1
    %p47 = scmp.eq.s32.totalorder %s9, 1
    %p48 = scmp.ne.s32.totalorder %s43, %s45
    %p49 = scmp.eq.s32.totalorder %s9, 0
    %p50 = por %p48, %p49
    %p51 = scmp.ne.s32.totalorder %s43, %s45
    %p52 = scmp.eq.s32.totalorder %s14, 1
    %p53 = por %p51, %p52
    %p54 = scmp.ne.s32.totalorder %s45, %s46
    %p55 = scmp.eq.s32.totalorder %s14, 0
    %p56 = por %p54, %p55
    %p57 = scmp.ne.s32.totalorder %s45, %s46
    %p58 = scmp.eq.s32.totalorder %s15, 1
    %p59 = por %p57, %p58
    %p61 = scmp.ne.s32.totalorder %s46, %s60
    %p62 = scmp.eq.s32.totalorder %s15, 0
    %p63 = por %p61, %p62
    %s65 = sadd.s32 %s64, 1
    %p68 = scmp.eq.s32.totalorder %s9, 1
    %p69 = scmp.ne.s32.totalorder %s64, %s66
    %p70 = scmp.eq.s32.totalorder %s9, 0
    %p71 = por %p69, %p70
    %p72 = scmp.ne.s32.totalorder %s64, %s66
    %p73 = scmp.eq.s32.totalorder %s14, 1
    %p74 = por %p72, %p73
    %p75 = scmp.ne.s32.totalorder %s66, %s67
    %p76 = scmp.eq.s32.totalorder %s14, 0
    %p77 = por %p75, %p76
    %p78 = scmp.ne.s32.totalorder %s66, %s67
    %p79 = scmp.eq.s32.totalorder %s15, 1
    %p80 = por %p78, %p79
    %p82 = scmp.ne.s32.totalorder %s67, %s81
    %p83 = scmp.eq.s32.totalorder %s15, 0
    %p84 = por %p82, %p83
    %s85 = ssub.s32 %s9, %s16
    %p86 = scmp.eq.s32.totalorder %s85, 0
    %s88 = sadd.s32 %s87, 1
    %s89 = scalar_select %p86, %s87, %s88
    %p92 = pneg %p86
    %p93 = scmp.eq.s32.totalorder %s9, 1
    %p94 = por %p92, %p93
    %p95 = scmp.ne.s32.totalorder %s87, %s90
    %p96 = scmp.eq.s32.totalorder %s9, 0
    %p97 = por %p95, %p96
    %p98 = scmp.ne.s32.totalorder %s87, %s90
    %p99 = scmp.eq.s32.totalorder %s14, 1
    %p100 = por %p98, %p99
    %p101 = scmp.ne.s32.totalorder %s90, %s91
    %p102 = scmp.eq.s32.totalorder %s14, 0
    %p103 = por %p101, %p102
    %p104 = scmp.ne.s32.totalorder %s90, %s91
    %p105 = scmp.eq.s32.totalorder %s15, 1
    %p106 = por %p104, %p105
    %p108 = scmp.ne.s32.totalorder %s91, %s107
    %p109 = scmp.eq.s32.totalorder %s15, 0
    %p110 = por %p108, %p109
    %p111 = scmp.le.s32.totalorder 1, %s9
    %p112 = scmp.lt.s32.totalorder %s9, 3
    %p113 = pnand %p111, %p112
    %p114 = pneg %p113
    // Predicated region
    $region9: #{up_forward.3} parent=5 // pred_check
      _
    $region10: #{up_forward.3} parent=5 // pred_check_branch
      %116 = sbr.rel (%p113) target = $region12
    $region11: #{up_forward.3} parent=5 // pred_region
      %s117 = ssub.s32 %s9, 1
      // Predicated region
      $region13: #{up_forward.3} parent=11 // pred_check
        %p118 = pneg %p56
      $region14: #{up_forward.3} parent=11 // pred_check_branch
        %120 = sbr.rel (%p118) target = $region16
      $region15: #{up_forward.3} parent=11 // pred_region
        _
      $region16: #{up_forward.3} parent=11 // pred_fallthru
        _
      // Predicated region
      $region17: #{up_forward.3} parent=11 // pred_check
        %p121 = pneg %p77
      $region18: #{up_forward.3} parent=11 // pred_check_branch
        %123 = sbr.rel (%p121) target = $region20
      $region19: #{up_forward.3} parent=11 // pred_region
        _
      $region20: #{up_forward.3} parent=11 // pred_fallthru
        _
    $region12: #{up_forward.3} parent=5 // pred_fallthru
      _
    %p124 = scmp.lt.s32.totalorder %s9, 2
    // Predicated region
    $region21: #{up_forward.3} parent=5 // pred_check
      %p125 = pneg %p124
    $region22: #{up_forward.3} parent=5 // pred_check_branch
      %127 = sbr.rel (%p125) target = $region24
    $region23: #{up_forward.3} parent=5 // pred_region
      // Predicated region
      $region25: #{up_forward.3} parent=23 // pred_check
        %p128 = pneg %p29
      $region26: #{up_forward.3} parent=23 // pred_check_branch
        %130 = sbr.rel (%p128) target = $region28
      $region27: #{up_forward.3} parent=23 // pred_region
        %s131 = smul.u32 8, %s9
        %p132 = scmp.lt.s32.totalorder %s131, 15
        %s133 = scalar_select %p132, %s131, 15
        %s134 = smul.addr %s133, 4
        %s135 = scalar_lea.vmem %s0, %s134
        %s136 = smul.u32 8, %s9
      $region28: #{up_forward.3} parent=23 // pred_fallthru
        _
    $region24: #{up_forward.3} parent=5 // pred_fallthru
      _
    %p137 = scmp.le.s32.totalorder 1, %s9
    %p138 = scmp.lt.s32.totalorder %s9, 3
    %p139 = pnand %p137, %p138
    %p140 = pneg %p139
    // Predicated region
    $region29: #{up_forward.3} parent=5 // pred_check
      _
    $region30: #{up_forward.3} parent=5 // pred_check_branch
      %142 = sbr.rel (%p139) target = $region32
    $region31: #{up_forward.3} parent=5 // pred_region
      %s143 = ssub.s32 %s9, 1
      %s144 = smul.u32 8, %s14
      %p145 = scmp.lt.s32.totalorder %s144, 15
      %s146 = scalar_select %p145, %s144, 15
      %s147 = smul.addr %s146, 4
      %s148 = scalar_lea.vmem %s0, %s147
      %p149 = pneg %p35
      %p150 = pneg %p32
      %p151 = pneg %p56
      %p152 = pneg %p53
      %p153 = pneg %p77
      %p154 = pneg %p74
      %p155 = pneg %p103
      %p156 = pneg %p100
      %s157 = smul.u32 8, %s14
      %p158 = scmp.lt.s32.totalorder %s157, 15
      %s159 = scalar_select %p158, %s157, 15
      %s160 = smul.addr %s159, 2
      %s161 = smul.addr %s160, 4
      %s162 = scalar_lea.vmem %s3, %s161
      %s163 = smul.u32 8, %s14
      %p164 = scmp.lt.s32.totalorder %s163, 15
      %s165 = scalar_select %p164, %s163, 15
      %s166 = smul.addr %s165, 4
      %s167 = scalar_lea.vmem %s0, %s166
      %s168 = smul.u32 8, %s14
      %s169 = smul.u32 8, %s14
      %p170 = scmp.lt.s32.totalorder %s169, 15
      %s171 = scalar_select %p170, %s169, 15
      %s172 = smul.addr %s171, 2
      %s173 = smul.addr %s172, 4
      %s174 = scalar_lea.vmem %s3, %s173
      %s175 = smul.u32 8, %s14
      %v177 = vld [vmem:[%s167] sm:$0xf]
      %v178 = vld [vmem:[%s167 + $0x4] sm:$0xf]
      %v179 = vld [vmem:[%s167 + $0x8] sm:$0xf]
      %v180 = vld [vmem:[%s167 + $0xc] sm:$0xf]
      %v181 = vld [vmem:[%s167 + $0x10] sm:$0xf]
      %v182 = vld [vmem:[%s167 + $0x14] sm:$0xf]
      %v183 = vld [vmem:[%s167 + $0x18] sm:$0xf]
      %v184 = vld [vmem:[%s167 + $0x1c] sm:$0xf]
      %v185 = vld [vmem:[%s1] sm:$0xff]
      %v186 = vld [vmem:[%s2] sm:$0x3]
      %v188 = vlaneseq
      %v189 = vshrl.u32 %v188, 7
      %v190 = vsub.s32 0, %v189
      %v191 = vrot.slane %v186, %v190
      %v192 = vlaneseq
      %v193 = vshrl.u32 %v192, 7
      %v194 = vsub.s32 1, %v193
      %v195 = vrot.slane %v186, %v194
      %v206 = vunpack.c.l.b16 %v177
      %v207 = vunpack.c.l.b16 %v178
      %v208 = vunpack.c.l.b16 %v179
      %v209 = vunpack.c.l.b16 %v180
      %v210 = vunpack.c.l.b16 %v181
      %v211 = vunpack.c.l.b16 %v182
      %v212 = vunpack.c.l.b16 %v183
      %v213 = vunpack.c.l.b16 %v184
      %v214 = vpack.c.b16 %v207, %v206
      %v215 = vpack.c.b16 %v209, %v208
      %v216 = vpack.c.b16 %v211, %v210
      %v217 = vpack.c.b16 %v213, %v212
      %v219 = vunpack.c.l.b16 %v185
      %v220 = vunpack.c.h.b16 %v185
      %v221 = vpack.c.b16 %v219, %v219
      %v222 = vpack.c.b16 %v220, %v220
      %vm223 = vcmask 64512
      %v225 = vsel %vm223, %v214, 0
      %v228 = vsel %vm223, %v215, 0
      %v231 = vsel %vm223, %v216, 0
      %v234 = vsel %vm223, %v217, 0
      %vm236 = vcmask 1043456
      %v238 = vsel %vm236, %v221, 0
      %v241 = vsel %vm236, %v222, 0
      %243 = vmatprep.subr.bf16.mxu0 %v241
      %244 = vmatpush1.bf16.msra.mxu0 %v238
      %245 = vmatprep.subr.bf16.mxu0 0
      %246 = vmatpush1.bf16.msra.mxu0 0
      %247 = vmatprep.subr.bf16.mxu0 0
      %248 = vmatpush1.bf16.msra.mxu0 0
      %249 = vmatprep.subr.bf16.mxu0 0
      %250 = vmatpush1.bf16.msra.mxu0 0
      %251 = vmatprep.subr.bf16.mxu0 0
      %252 = vmatpush1.bf16.msra.mxu0 0
      %253 = vmatprep.subr.bf16.mxu0 0
      %254 = vmatpush1.bf16.msra.mxu0 0
      %255 = vmatprep.subr.bf16.mxu0 0
      %256 = vmatpush1.bf16.msra.mxu0 0
      %257 = vmatprep.subr.bf16.mxu0 0
      %258 = vmatpush1.bf16.msra.mxu0 0
      %259 = vmatprep.subr.bf16.mxu0 0
      %260 = vmatpush1.bf16.msra.mxu0 0
      %261 = vmatprep.subr.bf16.mxu0 0
      %262 = vmatpush1.bf16.msra.mxu0 0
      %263 = vmatprep.subr.bf16.mxu0 0
      %264 = vmatpush1.bf16.msra.mxu0 0
      %265 = vmatprep.subr.bf16.mxu0 0
      %266 = vmatpush1.bf16.msra.mxu0 0
      %267 = vmatprep.subr.bf16.mxu0 0
      %268 = vmatpush1.bf16.msra.mxu0 0
      %269 = vmatprep.subr.bf16.mxu0 0
      %270 = vmatpush1.bf16.msra.mxu0 0
      %271 = vmatprep.subr.bf16.mxu0 0
      %272 = vmatpush1.bf16.msra.mxu0 0
      %273 = vmatprep.subr.bf16.mxu0 0
      %274 = vmatpush1.bf16.msra.mxu0 0
      %275 = vmatprep.mubr.bf16.mxu0 0
      %276 = vmatmul.mubr.bf16.gmra.mrb[0].mxu0 %v225
      %v277 = vpop.f32.mrb[0].mxu0
      %v278 = vadd.f32 %v191, %v277
      %v279 = vpop.f32.mrb[0].mxu0
      %v280 = vadd.f32 %v195, %v279
      %v281 = vpop.f32.mrb[0].mxu0
      %v282 = vadd.f32 %v191, %v281
      %v283 = vpop.f32.mrb[0].mxu0
      %v284 = vadd.f32 %v195, %v283
      %285 = vmatprep.mubr.bf16.mxu0 0
      %286 = vmatmul.mubr.bf16.gmra.mrb[0].mxu0 %v228
      %v287 = vpop.f32.mrb[0].mxu0
      %v288 = vadd.f32 %v191, %v287
      %v289 = vpop.f32.mrb[0].mxu0
      %v290 = vadd.f32 %v195, %v289
      %v291 = vpop.f32.mrb[0].mxu0
      %v292 = vadd.f32 %v191, %v291
      %v293 = vpop.f32.mrb[0].mxu0
      %v294 = vadd.f32 %v195, %v293
      %295 = vmatprep.mubr.bf16.mxu0 0
      %296 = vmatmul.mubr.bf16.gmra.mrb[0].mxu0 %v231
      %v297 = vpop.f32.mrb[0].mxu0
      %v298 = vadd.f32 %v191, %v297
      %v299 = vpop.f32.mrb[0].mxu0
      %v300 = vadd.f32 %v195, %v299
      %v301 = vpop.f32.mrb[0].mxu0
      %v302 = vadd.f32 %v191, %v301
      %v303 = vpop.f32.mrb[0].mxu0
      %v304 = vadd.f32 %v195, %v303
      %305 = vmatprep.mubr.bf16.mxu0 0
      %306 = vmatmul.mubr.bf16.gmra.mrb[0].mxu0 %v234
      %v307 = vpop.f32.mrb[0].mxu0
      %v308 = vadd.f32 %v191, %v307
      %v309 = vpop.f32.mrb[0].mxu0
      %v310 = vadd.f32 %v195, %v309
      %v311 = vpop.f32.mrb[0].mxu0
      %v312 = vadd.f32 %v191, %v311
      %v313 = vpop.f32.mrb[0].mxu0
      %v314 = vadd.f32 %v195, %v313
      %315 = vdwg.mxu0
      %v316 = vpack.c.bf16 %v278, %v278
      %v317 = vpack.c.bf16 %v282, %v282
      %v318 = vpack.c.bf16 %v288, %v288
      %v319 = vpack.c.bf16 %v292, %v292
      %v320 = vpack.c.bf16 %v298, %v298
      %v321 = vpack.c.bf16 %v302, %v302
      %v322 = vpack.c.bf16 %v308, %v308
      %v323 = vpack.c.bf16 %v312, %v312
      %324 = vst [vmem:[%s174] sm:$0xf] %v316
      %325 = vst [vmem:[%s174 + $0x8] sm:$0xf] %v317
      %326 = vst [vmem:[%s174 + $0x10] sm:$0xf] %v318
      %327 = vst [vmem:[%s174 + $0x18] sm:$0xf] %v319
      %328 = vst [vmem:[%s174 + $0x20] sm:$0xf] %v320
      %329 = vst [vmem:[%s174 + $0x28] sm:$0xf] %v321
      %330 = vst [vmem:[%s174 + $0x30] sm:$0xf] %v322
      %331 = vst [vmem:[%s174 + $0x38] sm:$0xf] %v323
      %v332 = vpack.c.bf16 %v280, %v280
      %v333 = vpack.c.bf16 %v284, %v284
      %v334 = vpack.c.bf16 %v290, %v290
      %v335 = vpack.c.bf16 %v294, %v294
      %v336 = vpack.c.bf16 %v300, %v300
      %v337 = vpack.c.bf16 %v304, %v304
      %v338 = vpack.c.bf16 %v310, %v310
      %v339 = vpack.c.bf16 %v314, %v314
      %s340 = scalar_lea.vmem %s174, 4
      %341 = vst [vmem:[%s340] sm:$0xf] %v332
      %342 = vst [vmem:[%s340 + $0x8] sm:$0xf] %v333
      %343 = vst [vmem:[%s340 + $0x10] sm:$0xf] %v334
      %344 = vst [vmem:[%s340 + $0x18] sm:$0xf] %v335
      %345 = vst [vmem:[%s340 + $0x20] sm:$0xf] %v336
      %346 = vst [vmem:[%s340 + $0x28] sm:$0xf] %v337
      %347 = vst [vmem:[%s340 + $0x30] sm:$0xf] %v338
      %348 = vst [vmem:[%s340 + $0x38] sm:$0xf] %v339
      %s349 = smul.u32 8, %s14
      %p350 = scmp.lt.s32.totalorder %s349, 15
      %s351 = scalar_select %p350, %s349, 15
      %s352 = smul.addr %s351, 2
      %s353 = smul.addr %s352, 4
      %s354 = scalar_lea.vmem %s3, %s353
      // Predicated region
      $region33: #{up_forward.3} parent=31 // pred_check
        %p355 = pneg %p100
      $region34: #{up_forward.3} parent=31 // pred_check_branch
        %357 = sbr.rel (%p355) target = $region36
      $region35: #{up_forward.3} parent=31 // pred_region
        %s358 = smul.u32 8, %s14
      $region36: #{up_forward.3} parent=31 // pred_fallthru
        _
    $region32: #{up_forward.3} parent=5 // pred_fallthru
      _
    %p359 = scmp.le.s32.totalorder 2, %s9
    // Predicated region
    $region37: #{up_forward.3} parent=5 // pred_check
      %p360 = pneg %p359
    $region38: #{up_forward.3} parent=5 // pred_check_branch
      %362 = sbr.rel (%p360) target = $region40
    $region39: #{up_forward.3} parent=5 // pred_region
      %s363 = ssub.s32 %s9, 2
      // Predicated region
      $region41: #{up_forward.3} parent=39 // pred_check
        %p364 = pneg %p106
      $region42: #{up_forward.3} parent=39 // pred_check_branch
        %366 = sbr.rel (%p364) target = $region44
      $region43: #{up_forward.3} parent=39 // pred_region
        %s367 = smul.u32 8, %s15
        %p368 = scmp.lt.s32.totalorder %s367, 15
        %s369 = scalar_select %p368, %s367, 15
        %s370 = smul.addr %s369, 2
        %s371 = smul.addr %s370, 4
        %s372 = scalar_lea.vmem %s3, %s371
      $region44: #{up_forward.3} parent=39 // pred_fallthru
        _
    $region40: #{up_forward.3} parent=5 // pred_fallthru
      _
  $region6: #{up_forward.3} parent=0 // loop_footer
    %s13 = sadd.s32 1, %s9
  $region7: #{up_forward.3} parent=0 // loop_footer_branch
    %8 = sbr.rel target = $region3
  $region8: #{up_forward.3} parent=0 // loop_exit
    _

// kernel: up_forward.4
$region0: #{up_forward.4}
  #allocation0 [shape = 'u32[]', space=smem, size = 0x4, offset = 0x4, fixed_abs, tag = 'smem constant byte address 0x4 - core index']
  #allocation1 [shape = 'u32[144,128]{1,0:T(1,128)}', space=vmem, size = 0x12000, scoped, tag = 'internal scratch']
  %s0 = inlined_call_operand.vmem [shape: bf16[2,16,16,4], index: 0, kind: input, shape index: {}]
  %s1 = inlined_call_operand.vmem [shape: bf16[2,16,16,64], index: 1, kind: input, shape index: {}]
  %s2 = inlined_call_operand.vmem [shape: bf16[3,12,128], index: 2, kind: input, shape index: {}]
  %s3 = inlined_call_operand.vmem [shape: bf16[3,192,128], index: 3, kind: input, shape index: {}]
  %s4 = inlined_call_operand.vmem [shape: f32[1,128], index: 4, kind: input, shape index: {}]
  %s5 = inlined_call_operand.vmem [shape: bf16[2,16,16,128], index: 5, kind: output, shape index: {}]
  %s6 = sld [smem:[#allocation0]]
  $region53: #{up_forward.4} parent=0
    _
  %s8 = ssub.s32 1, %s6
  %s9 = scalar_select 0, %s8, %s6
  loop: start=0, step=1, limit=6
  $region2: #{up_forward.4} parent=0 // loop_pre_header
    _
  $region3: #{up_forward.4} parent=0 // loop_header
    %s11 = sphi 0, %s15
    %p12 = scmp.ge.s32.totalorder %s11, 6
    %s18 = sphi 0, %s37
    %s19 = sphi 0, %s33
    %s20 = sphi 0, %s29
    %s21 = sphi 0, %s18
    %s22 = sphi 0, %s19
    %s23 = sphi 0, %s20
    %s24 = sphi 0, %s21
    %s25 = sphi 0, %s22
    %s26 = sphi 0, %s23
    %s40 = sphi 0, %s42
    %s43 = sphi 0, %s40
    %s44 = sphi 0, %s43
    %s60 = sphi 0, %s44
    %s66 = sphi 0, %s68
    %s69 = sphi 0, %s66
    %s70 = sphi 0, %s69
    %s86 = sphi 0, %s70
    %s92 = sphi 0, %s94
    %s95 = sphi 0, %s92
    %s96 = sphi 0, %s95
    %s112 = sphi 0, %s96
    %s118 = sphi 0, %s120
    %s121 = sphi 0, %s118
    %s122 = sphi 0, %s121
    %s138 = sphi 0, %s122
    %s144 = sphi 0, %s146
    %s147 = sphi 0, %s144
    %s148 = sphi 0, %s147
    %s164 = sphi 0, %s148
    %s174 = sphi 0, %s176
    %s177 = sphi 0, %s174
    %s178 = sphi 0, %s177
    %s194 = sphi 0, %s178
  $region4: #{up_forward.4} parent=0 // loop_header_branch
    %14 = sbr.rel (%p12) target = $region8
  $region5: #{up_forward.4} parent=0 // loop_body
    %s16 = ssub.s32 %s11, 1
    %s17 = ssub.s32 %s11, 2
    %s27 = sadd.s32 1, %s20
    %p28 = scmp.ge.s32.totalorder %s27, 2
    %s29 = scalar_select %p28, 0, %s27
    %s30 = sadd.s32 1, %s19
    %s31 = scalar_select %p28, %s30, %s19
    %p32 = scmp.ge.s32.totalorder %s31, 1
    %s33 = scalar_select %p32, 0, %s31
    %s34 = sadd.s32 1, %s18
    %s35 = scalar_select %p32, %s34, %s18
    %p36 = scmp.ge.s32.totalorder %s35, 2
    %s37 = scalar_select %p36, 0, %s35
    %s38 = ssub.s32 %s18, %s37
    %p39 = scmp.eq.s32.totalorder %s38, 0
    %s41 = sadd.s32 %s40, 1
    %s42 = scalar_select %p39, %s40, %s41
    %p45 = pneg %p39
    %p46 = scmp.eq.s32.totalorder %s11, 3
    %p47 = por %p45, %p46
    %p48 = scmp.ne.s32.totalorder %s40, %s43
    %p49 = scmp.eq.s32.totalorder %s11, 0
    %p50 = por %p48, %p49
    %p51 = scmp.ne.s32.totalorder %s40, %s43
    %p52 = scmp.eq.s32.totalorder %s16, 3
    %p53 = por %p51, %p52
    %p54 = scmp.ne.s32.totalorder %s43, %s44
    %p55 = scmp.eq.s32.totalorder %s16, 0
    %p56 = por %p54, %p55
    %p57 = scmp.ne.s32.totalorder %s43, %s44
    %p58 = scmp.eq.s32.totalorder %s17, 3
    %p59 = por %p57, %p58
    %p61 = scmp.ne.s32.totalorder %s44, %s60
    %p62 = scmp.eq.s32.totalorder %s17, 0
    %p63 = por %p61, %p62
    %s64 = ssub.s32 %s18, %s37
    %p65 = scmp.eq.s32.totalorder %s64, 0
    %s67 = sadd.s32 %s66, 1
    %s68 = scalar_select %p65, %s66, %s67
    %p71 = pneg %p65
    %p72 = scmp.eq.s32.totalorder %s11, 3
    %p73 = por %p71, %p72
    %p74 = scmp.ne.s32.totalorder %s66, %s69
    %p75 = scmp.eq.s32.totalorder %s11, 0
    %p76 = por %p74, %p75
    %p77 = scmp.ne.s32.totalorder %s66, %s69
    %p78 = scmp.eq.s32.totalorder %s16, 3
    %p79 = por %p77, %p78
    %p80 = scmp.ne.s32.totalorder %s69, %s70
    %p81 = scmp.eq.s32.totalorder %s16, 0
    %p82 = por %p80, %p81
    %p83 = scmp.ne.s32.totalorder %s69, %s70
    %p84 = scmp.eq.s32.totalorder %s17, 3
    %p85 = por %p83, %p84
    %p87 = scmp.ne.s32.totalorder %s70, %s86
    %p88 = scmp.eq.s32.totalorder %s17, 0
    %p89 = por %p87, %p88
    %s90 = ssub.s32 %s19, %s33
    %p91 = scmp.eq.s32.totalorder %s90, 0
    %s93 = sadd.s32 %s92, 1
    %s94 = scalar_select %p91, %s92, %s93
    %p97 = pneg %p91
    %p98 = scmp.eq.s32.totalorder %s11, 3
    %p99 = por %p97, %p98
    %p100 = scmp.ne.s32.totalorder %s92, %s95
    %p101 = scmp.eq.s32.totalorder %s11, 0
    %p102 = por %p100, %p101
    %p103 = scmp.ne.s32.totalorder %s92, %s95
    %p104 = scmp.eq.s32.totalorder %s16, 3
    %p105 = por %p103, %p104
    %p106 = scmp.ne.s32.totalorder %s95, %s96
    %p107 = scmp.eq.s32.totalorder %s16, 0
    %p108 = por %p106, %p107
    %p109 = scmp.ne.s32.totalorder %s95, %s96
    %p110 = scmp.eq.s32.totalorder %s17, 3
    %p111 = por %p109, %p110
    %p113 = scmp.ne.s32.totalorder %s96, %s112
    %p114 = scmp.eq.s32.totalorder %s17, 0
    %p115 = por %p113, %p114
    %s116 = ssub.s32 %s19, %s33
    %p117 = scmp.eq.s32.totalorder %s116, 0
    %s119 = sadd.s32 %s118, 1
    %s120 = scalar_select %p117, %s118, %s119
    %p123 = pneg %p117
    %p124 = scmp.eq.s32.totalorder %s11, 3
    %p125 = por %p123, %p124
    %p126 = scmp.ne.s32.totalorder %s118, %s121
    %p127 = scmp.eq.s32.totalorder %s11, 0
    %p128 = por %p126, %p127
    %p129 = scmp.ne.s32.totalorder %s118, %s121
    %p130 = scmp.eq.s32.totalorder %s16, 3
    %p131 = por %p129, %p130
    %p132 = scmp.ne.s32.totalorder %s121, %s122
    %p133 = scmp.eq.s32.totalorder %s16, 0
    %p134 = por %p132, %p133
    %p135 = scmp.ne.s32.totalorder %s121, %s122
    %p136 = scmp.eq.s32.totalorder %s17, 3
    %p137 = por %p135, %p136
    %p139 = scmp.ne.s32.totalorder %s122, %s138
    %p140 = scmp.eq.s32.totalorder %s17, 0
    %p141 = por %p139, %p140
    %s142 = ssub.s32 %s19, %s33
    %p143 = scmp.eq.s32.totalorder %s142, 0
    %s145 = sadd.s32 %s144, 1
    %s146 = scalar_select %p143, %s144, %s145
    %p149 = pneg %p143
    %p150 = scmp.eq.s32.totalorder %s11, 3
    %p151 = por %p149, %p150
    %p152 = scmp.ne.s32.totalorder %s144, %s147
    %p153 = scmp.eq.s32.totalorder %s11, 0
    %p154 = por %p152, %p153
    %p155 = scmp.ne.s32.totalorder %s144, %s147
    %p156 = scmp.eq.s32.totalorder %s16, 3
    %p157 = por %p155, %p156
    %p158 = scmp.ne.s32.totalorder %s147, %s148
    %p159 = scmp.eq.s32.totalorder %s16, 0
    %p160 = por %p158, %p159
    %p161 = scmp.ne.s32.totalorder %s147, %s148
    %p162 = scmp.eq.s32.totalorder %s17, 3
    %p163 = por %p161, %p162
    %p165 = scmp.ne.s32.totalorder %s148, %s164
    %p166 = scmp.eq.s32.totalorder %s17, 0
    %p167 = por %p165, %p166
    %s168 = ssub.s32 %s18, %s37
    %s169 = ssub.s32 %s20, %s29
    %s170 = sor.u32 %s168, %s169
    %s171 = ssub.s32 %s19, %s33
    %s172 = sor.u32 %s170, %s171
    %p173 = scmp.eq.s32.totalorder %s172, 0
    %s175 = sadd.s32 %s174, 1
    %s176 = scalar_select %p173, %s174, %s175
    %p179 = pneg %p173
    %p180 = scmp.eq.s32.totalorder %s11, 3
    %p181 = por %p179, %p180
    %p182 = scmp.ne.s32.totalorder %s174, %s177
    %p183 = scmp.eq.s32.totalorder %s11, 0
    %p184 = por %p182, %p183
    %p185 = scmp.ne.s32.totalorder %s174, %s177
    %p186 = scmp.eq.s32.totalorder %s16, 3
    %p187 = por %p185, %p186
    %p188 = scmp.ne.s32.totalorder %s177, %s178
    %p189 = scmp.eq.s32.totalorder %s16, 0
    %p190 = por %p188, %p189
    %p191 = scmp.ne.s32.totalorder %s177, %s178
    %p192 = scmp.eq.s32.totalorder %s17, 3
    %p193 = por %p191, %p192
    %p195 = scmp.ne.s32.totalorder %s178, %s194
    %p196 = scmp.eq.s32.totalorder %s17, 0
    %p197 = por %p195, %p196
    %p198 = scmp.le.s32.totalorder 1, %s11
    %p199 = scmp.lt.s32.totalorder %s11, 5
    %p200 = pnand %p198, %p199
    %p201 = pneg %p200
    // Predicated region
    $region9: #{up_forward.4} parent=5 // pred_check
      _
    $region10: #{up_forward.4} parent=5 // pred_check_branch
      %203 = sbr.rel (%p200) target = $region12
    $region11: #{up_forward.4} parent=5 // pred_region
      %s204 = ssub.s32 %s11, 1
      // Predicated region
      $region13: #{up_forward.4} parent=11 // pred_check
        %p205 = pneg %p108
      $region14: #{up_forward.4} parent=11 // pred_check_branch
        %207 = sbr.rel (%p205) target = $region16
      $region15: #{up_forward.4} parent=11 // pred_region
        %p208 = scmp.lt.s32.totalorder %s22, 0
        %s209 = scalar_select %p208, %s22, 0
        %s210 = smul.addr %s209, 4
        %s211 = scalar_lea.vmem %s2, %s210
      $region16: #{up_forward.4} parent=11 // pred_fallthru
        _
      // Predicated region
      $region17: #{up_forward.4} parent=11 // pred_check
        %p212 = pneg %p134
      $region18: #{up_forward.4} parent=11 // pred_check_branch
        %214 = sbr.rel (%p212) target = $region20
      $region19: #{up_forward.4} parent=11 // pred_region
        %p215 = scmp.lt.s32.totalorder %s22, 0
        %s216 = scalar_select %p215, %s22, 0
        %s217 = smul.addr %s216, 4
        %s218 = scalar_lea.vmem %s3, %s217
      $region20: #{up_forward.4} parent=11 // pred_fallthru
        _
      // Predicated region
      $region21: #{up_forward.4} parent=11 // pred_check
        %p219 = pneg %p160
      $region22: #{up_forward.4} parent=11 // pred_check_branch
        %221 = sbr.rel (%p219) target = $region24
      $region23: #{up_forward.4} parent=11 // pred_region
        %p222 = scmp.lt.s32.totalorder %s22, 0
        %s223 = scalar_select %p222, %s22, 0
        %s224 = scalar_lea.vmem %s4, %s223
      $region24: #{up_forward.4} parent=11 // pred_fallthru
        _
    $region12: #{up_forward.4} parent=5 // pred_fallthru
      _
    %p225 = scmp.lt.s32.totalorder %s11, 4
    // Predicated region
    $region25: #{up_forward.4} parent=5 // pred_check
      %p226 = pneg %p225
    $region26: #{up_forward.4} parent=5 // pred_check_branch
      %228 = sbr.rel (%p226) target = $region28
    $region27: #{up_forward.4} parent=5 // pred_region
      // Predicated region
      $region29: #{up_forward.4} parent=27 // pred_check
        %p229 = pneg %p50
      $region30: #{up_forward.4} parent=27 // pred_check_branch
        %231 = sbr.rel (%p229) target = $region32
      $region31: #{up_forward.4} parent=27 // pred_region
        %p232 = scmp.lt.s32.totalorder %s18, 1
        %s233 = scalar_select %p232, %s18, 1
        %s234 = smul.addr %s233, 32
        %s235 = smul.addr %s234, 4
        %s236 = scalar_lea.vmem %s0, %s235
      $region32: #{up_forward.4} parent=27 // pred_fallthru
        _
      // Predicated region
      $region33: #{up_forward.4} parent=27 // pred_check
        %p237 = pneg %p76
      $region34: #{up_forward.4} parent=27 // pred_check_branch
        %239 = sbr.rel (%p237) target = $region36
      $region35: #{up_forward.4} parent=27 // pred_region
        %p240 = scmp.lt.s32.totalorder %s18, 1
        %s241 = scalar_select %p240, %s18, 1
        %s242 = smul.addr %s241, 32
        %s243 = smul.addr %s242, 4
        %s244 = scalar_lea.vmem %s1, %s243
      $region36: #{up_forward.4} parent=27 // pred_fallthru
        _
    $region28: #{up_forward.4} parent=5 // pred_fallthru
      _
    %p245 = scmp.le.s32.totalorder 1, %s11
    %p246 = scmp.lt.s32.totalorder %s11, 5
    %p247 = pnand %p245, %p246
    %p248 = pneg %p247
    // Predicated region
    $region37: #{up_forward.4} parent=5 // pred_check
      _
    $region38: #{up_forward.4} parent=5 // pred_check_branch
      %250 = sbr.rel (%p247) target = $region40
    $region39: #{up_forward.4} parent=5 // pred_region
      %s251 = ssub.s32 %s11, 1
      %p252 = scmp.lt.s32.totalorder %s21, 1
      %s253 = scalar_select %p252, %s21, 1
      %s254 = smul.addr %s253, 32
      %s255 = smul.addr %s254, 4
      %s256 = scalar_lea.vmem %s0, %s255
      %p257 = pneg %p56
      %p258 = pneg %p53
      %p259 = scmp.lt.s32.totalorder %s21, 1
      %s260 = scalar_select %p259, %s21, 1
      %s261 = smul.addr %s260, 32
      %s262 = smul.addr %s261, 4
      %s263 = scalar_lea.vmem %s1, %s262
      %p264 = pneg %p82
      %p265 = pneg %p79
      %p266 = scmp.lt.s32.totalorder %s22, 0
      %s267 = scalar_select %p266, %s22, 0
      %s268 = smul.addr %s267, 4
      %s269 = scalar_lea.vmem %s2, %s268
      %p270 = pneg %p108
      %p271 = pneg %p105
      %p272 = scmp.lt.s32.totalorder %s22, 0
      %s273 = scalar_select %p272, %s22, 0
      %s274 = smul.addr %s273, 4
      %s275 = scalar_lea.vmem %s3, %s274
      %p276 = pneg %p134
      %p277 = pneg %p131
      %p278 = scmp.lt.s32.totalorder %s22, 0
      %s279 = scalar_select %p278, %s22, 0
      %s280 = scalar_lea.vmem %s4, %s279
      %p281 = pneg %p160
      %p282 = pneg %p157
      %p283 = pneg %p190
      %p284 = pneg %p187
      %s285 = smul.u32 8, %s23
      %p286 = scmp.lt.s32.totalorder %s21, 1
      %s287 = scalar_select %p286, %s21, 1
      %p288 = scmp.lt.s32.totalorder %s285, 15
      %s289 = scalar_select %p288, %s285, 15
      %p290 = scmp.lt.s32.totalorder %s22, 0
      %s291 = scalar_select %p290, %s22, 0
      %s292 = smul.addr %s289, 2
      %s293 = sadd.s32 %s291, %s292
      %s294 = smul.addr %s287, 32
      %s295 = sadd.s32 %s293, %s294
      %s296 = smul.addr %s295, 4
      %s297 = scalar_lea.vmem %s5, %s296
      %p298 = scmp.lt.s32.totalorder %s21, 1
      %s299 = scalar_select %p298, %s21, 1
      %s300 = smul.addr %s299, 32
      %s301 = smul.addr %s300, 4
      %s302 = scalar_lea.vmem %s0, %s301
      %p303 = scmp.lt.s32.totalorder %s21, 1
      %s304 = scalar_select %p303, %s21, 1
      %s305 = smul.addr %s304, 32
      %s306 = smul.addr %s305, 4
      %s307 = scalar_lea.vmem %s1, %s306
      %p308 = scmp.lt.s32.totalorder %s22, 0
      %s309 = scalar_select %p308, %s22, 0
      %s310 = smul.addr %s309, 4
      %s311 = scalar_lea.vmem %s2, %s310
      %p312 = scmp.lt.s32.totalorder %s22, 0
      %s313 = scalar_select %p312, %s22, 0
      %s314 = smul.addr %s313, 4
      %s315 = scalar_lea.vmem %s3, %s314
      %p316 = scmp.lt.s32.totalorder %s22, 0
      %s317 = scalar_select %p316, %s22, 0
      %s318 = scalar_lea.vmem %s4, %s317
      %s319 = smul.u32 8, %s23
      %p320 = scmp.lt.s32.totalorder %s21, 1
      %s321 = scalar_select %p320, %s21, 1
      %p322 = scmp.lt.s32.totalorder %s319, 15
      %s323 = scalar_select %p322, %s319, 15
      %p324 = scmp.lt.s32.totalorder %s22, 0
      %s325 = scalar_select %p324, %s22, 0
      %s326 = smul.addr %s323, 2
      %s327 = sadd.s32 %s325, %s326
      %s328 = smul.addr %s321, 32
      %s329 = sadd.s32 %s327, %s328
      %s330 = smul.addr %s329, 4
      %s331 = scalar_lea.vmem %s5, %s330
      %s332 = smul.u32 8, %s23
      %s334 = smul.u32 %s23, 8
      %v335 = vlaneseq
      %v336 = vshrl.u32 %v335, 7
      %v337 = vadd.s32 %v336, 8
      %vm338 = vcmp.ne.s32.totalorder %v336, 0
      %vm339 = vcmp.ne.s32.totalorder %v337, 0
      %vm340 = vcmp.ne.s32.totalorder %v336, 15
      %vm341 = vcmp.ne.s32.totalorder %v337, 15
      %s342 = smul.u32 %s334, 2
      %s343 = smul.addr %s342, 4
      %s344 = scalar_lea.vmem %s302, %s343
      %v345 = vld [vmem:[%s344] sm:$0xf]
      %v346 = vld [vmem:[%s344 + $0x4] sm:$0xf]
      %v347 = vld [vmem:[%s344 + $0x8] sm:$0xf]
      %v348 = vld [vmem:[%s344 + $0xc] sm:$0xf]
      %v349 = vld [vmem:[%s344 + $0x10] sm:$0xf]
      %v350 = vld [vmem:[%s344 + $0x14] sm:$0xf]
      %v351 = vld [vmem:[%s344 + $0x18] sm:$0xf]
      %v352 = vld [vmem:[%s344 + $0x1c] sm:$0xf]
      %v353 = vld [vmem:[%s344 + $0x20] sm:$0xf]
      %v354 = vld [vmem:[%s344 + $0x24] sm:$0xf]
      %v355 = vld [vmem:[%s344 + $0x28] sm:$0xf]
      %v356 = vld [vmem:[%s344 + $0x2c] sm:$0xf]
      %v357 = vld [vmem:[%s344 + $0x30] sm:$0xf]
      %v358 = vld [vmem:[%s344 + $0x34] sm:$0xf]
      %v359 = vld [vmem:[%s344 + $0x38] sm:$0xf]
      %v360 = vld [vmem:[%s344 + $0x3c] sm:$0xf]
      %s361 = ssub.s32 %s334, 1
      %p362 = scmp.gt.s32.totalorder %s361, 0
      %s363 = scalar_select %p362, %s361, 0
      %s364 = smul.u32 %s363, 2
      %s365 = smul.addr %s364, 4
      %s366 = scalar_lea.vmem %s302, %s365
      %v367 = vld [vmem:[%s366] sm:$0xf]
      %v368 = vld [vmem:[%s366 + $0x4] sm:$0xf]
      %s369 = sadd.s32 %s334, 8
      %p370 = scmp.lt.s32.totalorder %s369, 15
      %s371 = scalar_select %p370, %s369, 15
      %s372 = smul.u32 %s371, 2
      %s373 = smul.addr %s372, 4
      %s374 = scalar_lea.vmem %s302, %s373
      %v375 = vld [vmem:[%s374] sm:$0xf]
      %v376 = vld [vmem:[%s374 + $0x4] sm:$0xf]
      %p377 = scmp.gt.s32.totalorder %s334, 0
      %s378 = scalar_select %p377, 1, 0
      %v379 = vstv %s378
      %vm380 = vcmp.eq.s32.totalorder %v379, 1
      %v381 = vsel %vm380, %v367, 0
      %v382 = vsel %vm380, %v368, 0
      %p383 = scmp.lt.s32.totalorder %s369, 16
      %s384 = scalar_select %p383, 1, 0
      %v385 = vstv %s384
      %vm386 = vcmp.eq.s32.totalorder %v385, 1
      %v387 = vsel %vm386, %v375, 0
      %v388 = vsel %vm386, %v376, 0
      %v391 = vunpack.c.l.b16 %v381
      %v392 = vunpack.c.l.b16 %v382
      %v393 = vpack.c.b16 %v392, %v391
      %v395 = vshrl.u32 %v393, 16
      %v397 = vrot.slane %v395, 7
      %v398 = vshll.u32 %v393, 16
      %v400 = vor.u32 %v397, %v398
      %v419 = vunpack.c.l.b16 %v345
      %v420 = vunpack.c.l.b16 %v346
      %v421 = vunpack.c.l.b16 %v347
      %v422 = vunpack.c.l.b16 %v348
      %v423 = vunpack.c.l.b16 %v349
      %v424 = vunpack.c.l.b16 %v350
      %v425 = vunpack.c.l.b16 %v351
      %v426 = vunpack.c.l.b16 %v352
      %v427 = vunpack.c.l.b16 %v353
      %v428 = vunpack.c.l.b16 %v354
      %v429 = vunpack.c.l.b16 %v355
      %v430 = vunpack.c.l.b16 %v356
      %v431 = vunpack.c.l.b16 %v357
      %v432 = vunpack.c.l.b16 %v358
      %v433 = vunpack.c.l.b16 %v359
      %v434 = vunpack.c.l.b16 %v360
      %v435 = vpack.c.b16 %v420, %v419
      %v436 = vpack.c.b16 %v422, %v421
      %v437 = vpack.c.b16 %v424, %v423
      %v438 = vpack.c.b16 %v426, %v425
      %v439 = vpack.c.b16 %v428, %v427
      %v440 = vpack.c.b16 %v430, %v429
      %v441 = vpack.c.b16 %v432, %v431
      %v442 = vpack.c.b16 %v434, %v433
      %vm443 = vsmask.f32 256
      %v445 = vshrl.u32 %v435, 16
      %v447 = vrot.slane %v445, 7
      %v448 = vshll.u32 %v435, 16
      %v450 = vor.u32 %v447, %v448
      %v452 = vshrl.u32 %v436, 16
      %v454 = vrot.slane %v452, 7
      %v455 = vshll.u32 %v436, 16
      %v457 = vor.u32 %v454, %v455
      %v458 = vsel %vm443, %v447, %v457
      %v460 = vshrl.u32 %v437, 16
      %v462 = vrot.slane %v460, 7
      %v463 = vshll.u32 %v437, 16
      %v465 = vor.u32 %v462, %v463
      %v466 = vsel %vm443, %v454, %v465
      %v468 = vshrl.u32 %v438, 16
      %v470 = vrot.slane %v468, 7
      %v471 = vshll.u32 %v438, 16
      %v473 = vor.u32 %v470, %v471
      %v474 = vsel %vm443, %v462, %v473
      %v476 = vshrl.u32 %v439, 16
      %v478 = vrot.slane %v476, 7
      %v479 = vshll.u32 %v439, 16
      %v481 = vor.u32 %v478, %v479
      %v482 = vsel %vm443, %v470, %v481
      %v484 = vshrl.u32 %v440, 16
      %v486 = vrot.slane %v484, 7
      %v487 = vshll.u32 %v440, 16
      %v489 = vor.u32 %v486, %v487
      %v490 = vsel %vm443, %v478, %v489
      %v492 = vshrl.u32 %v441, 16
      %v494 = vrot.slane %v492, 7
      %v495 = vshll.u32 %v441, 16
      %v497 = vor.u32 %v494, %v495
      %v498 = vsel %vm443, %v486, %v497
      %v500 = vshrl.u32 %v442, 16
      %v502 = vrot.slane %v500, 7
      %v503 = vshll.u32 %v442, 16
      %v505 = vor.u32 %v502, %v503
      %v506 = vsel %vm443, %v494, %v505
      %v511 = vunpack.c.l.b16 %v387
      %v512 = vunpack.c.l.b16 %v388
      %v513 = vpack.c.b16 %v512, %v511
      %v515 = vshrl.u32 %v513, 16
      %v517 = vrot.slane %v515, 7
      %v518 = vshll.u32 %v513, 16
      %v520 = vor.u32 %v517, %v518
      %vm523 = vcmask 1040384
      %vm524 = vmand %vm523, %vm443
      %v525 = vsel %vm524, 0, %v400
      %v526 = vsel %vm524, %v397, %v450
      %v527 = vsel %vm524, %v502, %v520
      %v528 = vsel %vm524, %v517, 0
      %530 = vrot.lane.b32.xlu0 %v526, 4
      %v531 = vpop.permute.xlu0 %530
      %532 = vrot.lane.b32.xlu0 %v458, 4
      %v533 = vpop.permute.xlu0 %532
      %534 = vrot.lane.b32.xlu0 %v466, 4
      %v535 = vpop.permute.xlu0 %534
      %536 = vrot.lane.b32.xlu0 %v474, 4
      %v537 = vpop.permute.xlu0 %536
      %538 = vrot.lane.b32.xlu0 %v482, 4
      %v539 = vpop.permute.xlu0 %538
      %540 = vrot.lane.b32.xlu0 %v490, 4
      %v541 = vpop.permute.xlu0 %540
      %542 = vrot.lane.b32.xlu0 %v498, 4
      %v543 = vpop.permute.xlu0 %542
      %544 = vrot.lane.b32.xlu0 %v506, 4
      %v545 = vpop.permute.xlu0 %544
      %547 = vrot.lane.b32.xlu0 %v458, 8
      %v548 = vpop.permute.xlu0 %547
      %549 = vrot.lane.b32.xlu0 %v466, 8
      %v550 = vpop.permute.xlu0 %549
      %551 = vrot.lane.b32.xlu0 %v474, 8
      %v552 = vpop.permute.xlu0 %551
      %553 = vrot.lane.b32.xlu0 %v482, 8
      %v554 = vpop.permute.xlu0 %553
      %555 = vrot.lane.b32.xlu0 %v490, 8
      %v556 = vpop.permute.xlu0 %555
      %557 = vrot.lane.b32.xlu0 %v498, 8
      %v558 = vpop.permute.xlu0 %557
      %559 = vrot.lane.b32.xlu0 %v506, 8
      %v560 = vpop.permute.xlu0 %559
      %561 = vrot.lane.b32.xlu0 %v527, 8
      %v562 = vpop.permute.xlu0 %561
      %vm563 = vcmask 31744
      %v566 = vsel %vm563, %v525, %v531
      %v569 = vsel %vm563, %v526, %v533
      %v572 = vsel %vm563, %v458, %v535
      %v575 = vsel %vm563, %v466, %v537
      %v578 = vsel %vm563, %v474, %v539
      %v581 = vsel %vm563, %v482, %v541
      %v584 = vsel %vm563, %v490, %v543
      %v587 = vsel %vm563, %v498, %v545
      %vm588 = vcmask 64512
      %v590 = vsel %vm588, %v566, %v548
      %v592 = vsel %vm588, %v569, %v550
      %v594 = vsel %vm588, %v572, %v552
      %v596 = vsel %vm588, %v575, %v554
      %v598 = vsel %vm588, %v578, %v556
      %v600 = vsel %vm588, %v581, %v558
      %v602 = vsel %vm588, %v584, %v560
      %v604 = vsel %vm588, %v587, %v562
      %v605 = vld [vmem:[%s311] sm:$0xf]
      %v606 = vld [vmem:[%s311 + $0x4] sm:$0x3]
      %v609 = vunpack.c.l.b16 %v605
      %v610 = vunpack.c.l.b16 %v606
      %v611 = vpack.c.b16 %v610, %v609
      %vm612 = vcmask 97280
      %v613 = vsel %vm612, %v590, 0
      %v615 = vsel %vm612, %v592, 0
      %v617 = vsel %vm612, %v594, 0
      %v619 = vsel %vm612, %v596, 0
      %v621 = vsel %vm612, %v598, 0
      %v623 = vsel %vm612, %v600, 0
      %v625 = vsel %vm612, %v602, 0
      %v627 = vsel %vm612, %v604, 0
      %vm629 = vcmask 1045504
      %v631 = vsel %vm629, %v611, 0
      %633 = vmatprep.subr.bf16.mxu0 0
      %634 = vmatpush1.bf16.msra.mxu0 %v631
      %635 = vmatprep.subr.bf16.mxu0 0
      %636 = vmatpush1.bf16.msra.mxu0 0
      %637 = vmatprep.subr.bf16.mxu0 0
      %638 = vmatpush1.bf16.msra.mxu0 0
      %639 = vmatprep.subr.bf16.mxu0 0
      %640 = vmatpush1.bf16.msra.mxu0 0
      %641 = vmatprep.subr.bf16.mxu0 0
      %642 = vmatpush1.bf16.msra.mxu0 0
      %643 = vmatprep.subr.bf16.mxu0 0
      %644 = vmatpush1.bf16.msra.mxu0 0
      %645 = vmatprep.subr.bf16.mxu0 0
      %646 = vmatpush1.bf16.msra.mxu0 0
      %647 = vmatprep.subr.bf16.mxu0 0
      %648 = vmatpush1.bf16.msra.mxu0 0
      %649 = vmatprep.subr.bf16.mxu0 0
      %650 = vmatpush1.bf16.msra.mxu0 0
      %651 = vmatprep.subr.bf16.mxu0 0
      %652 = vmatpush1.bf16.msra.mxu0 0
      %653 = vmatprep.subr.bf16.mxu0 0
      %654 = vmatpush1.bf16.msra.mxu0 0
      %655 = vmatprep.subr.bf16.mxu0 0
      %656 = vmatpush1.bf16.msra.mxu0 0
      %657 = vmatprep.subr.bf16.mxu0 0
      %658 = vmatpush1.bf16.msra.mxu0 0
      %659 = vmatprep.subr.bf16.mxu0 0
      %660 = vmatpush1.bf16.msra.mxu0 0
      %661 = vmatprep.subr.bf16.mxu0 0
      %662 = vmatpush1.bf16.msra.mxu0 0
      %663 = vmatprep.subr.bf16.mxu0 0
      %664 = vmatpush1.bf16.msra.mxu0 0
      %665 = vmatprep.mubr.bf16.mxu0 0
      %666 = vmatmul.mubr.bf16.gmra.mrb[0].mxu0 %v613
      %v667 = vpop.f32.mrb[0].mxu0
      %v668 = vadd.f32 0.0, %v667
      %v669 = vpop.f32.mrb[0].mxu0
      %v670 = vpop.f32.mrb[0].mxu0
      %v671 = vadd.f32 0.0, %v670
      %v672 = vpop.f32.mrb[0].mxu0
      %673 = vmatprep.mubr.bf16.mxu0 0
      %674 = vmatmul.mubr.bf16.gmra.mrb[0].mxu0 %v615
      %v675 = vpop.f32.mrb[0].mxu0
      %v676 = vadd.f32 0.0, %v675
      %v677 = vpop.f32.mrb[0].mxu0
      %v678 = vpop.f32.mrb[0].mxu0
      %v679 = vadd.f32 0.0, %v678
      %v680 = vpop.f32.mrb[0].mxu0
      %681 = vmatprep.mubr.bf16.mxu0 0
      %682 = vmatmul.mubr.bf16.gmra.mrb[0].mxu0 %v617
      %v683 = vpop.f32.mrb[0].mxu0
      %v684 = vadd.f32 0.0, %v683
      %v685 = vpop.f32.mrb[0].mxu0
      %v686 = vpop.f32.mrb[0].mxu0
      %v687 = vadd.f32 0.0, %v686
      %v688 = vpop.f32.mrb[0].mxu0
      %689 = vmatprep.mubr.bf16.mxu0 0
      %690 = vmatmul.mubr.bf16.gmra.mrb[0].mxu0 %v619
      %v691 = vpop.f32.mrb[0].mxu0
      %v692 = vadd.f32 0.0, %v691
      %v693 = vpop.f32.mrb[0].mxu0
      %v694 = vpop.f32.mrb[0].mxu0
      %v695 = vadd.f32 0.0, %v694
      %v696 = vpop.f32.mrb[0].mxu0
      %697 = vmatprep.mubr.bf16.mxu0 0
      %698 = vmatmul.mubr.bf16.gmra.mrb[0].mxu0 %v621
      %v699 = vpop.f32.mrb[0].mxu0
      %v700 = vadd.f32 0.0, %v699
      %v701 = vpop.f32.mrb[0].mxu0
      %v702 = vpop.f32.mrb[0].mxu0
      %v703 = vadd.f32 0.0, %v702
      %v704 = vpop.f32.mrb[0].mxu0
      %705 = vmatprep.mubr.bf16.mxu0 0
      %706 = vmatmul.mubr.bf16.gmra.mrb[0].mxu0 %v623
      %v707 = vpop.f32.mrb[0].mxu0
      %v708 = vadd.f32 0.0, %v707
      %v709 = vpop.f32.mrb[0].mxu0
      %v710 = vpop.f32.mrb[0].mxu0
      %v711 = vadd.f32 0.0, %v710
      %v712 = vpop.f32.mrb[0].mxu0
      %713 = vmatprep.mubr.bf16.mxu0 0
      %714 = vmatmul.mubr.bf16.gmra.mrb[0].mxu0 %v625
      %v715 = vpop.f32.mrb[0].mxu0
      %v716 = vadd.f32 0.0, %v715
      %v717 = vpop.f32.mrb[0].mxu0
      %v718 = vpop.f32.mrb[0].mxu0
      %v719 = vadd.f32 0.0, %v718
      %v720 = vpop.f32.mrb[0].mxu0
      %721 = vmatprep.mubr.bf16.mxu0 0
      %722 = vmatmul.mubr.bf16.gmra.mrb[0].mxu0 %v627
      %v723 = vpop.f32.mrb[0].mxu0
      %v724 = vadd.f32 0.0, %v723
      %v725 = vpop.f32.mrb[0].mxu0
      %v726 = vpop.f32.mrb[0].mxu0
      %v727 = vadd.f32 0.0, %v726
      %v728 = vpop.f32.mrb[0].mxu0
      %729 = vdwg.mxu0
      %v730 = vsel %vm338, 1, 0
      %v731 = vsel %vm339, 1, 0
      %vm732 = vcmp.eq.s32.totalorder %v730, 1
      %vm733 = vcmp.eq.s32.totalorder %v731, 1
      %v734 = vsel %vm732, %v668, 0.0
      %v735 = vsel %vm733, %v671, 0.0
      %v736 = vsel %vm732, %v676, 0.0
      %v737 = vsel %vm733, %v679, 0.0
      %v738 = vsel %vm732, %v684, 0.0
      %v739 = vsel %vm733, %v687, 0.0
      %v740 = vsel %vm732, %v692, 0.0
      %v741 = vsel %vm733, %v695, 0.0
      %v742 = vsel %vm732, %v700, 0.0
      %v743 = vsel %vm733, %v703, 0.0
      %v744 = vsel %vm732, %v708, 0.0
      %v745 = vsel %vm733, %v711, 0.0
      %v746 = vsel %vm732, %v716, 0.0
      %v747 = vsel %vm733, %v719, 0.0
      %v748 = vsel %vm732, %v724, 0.0
      %v749 = vsel %vm733, %v727, 0.0
      %750 = vrot.lane.b32.xlu0 %v527, 4
      %v751 = vpop.permute.xlu0 %750
      %753 = vrot.lane.b32.xlu0 %v528, 8
      %v754 = vpop.permute.xlu0 %753
      %v757 = vsel %vm563, %v506, %v751
      %v759 = vsel %vm588, %v757, %v754
      %s760 = scalar_lea.vmem %s311, 8
      %v761 = vld [vmem:[%s760] sm:$0xf]
      %v762 = vld [vmem:[%s760 + $0x4] sm:$0x3]
      %vm763 = vsmask.f32 7424
      %v764 = vshrl.u32 %v590, 16
      %v766 = vshll.u32 %v590, 16
      %v768 = vrot.slane %v766, 1
      %v769 = vor.u32 %v764, %v768
      %v770 = vshll.u32 %v592, 16
      %v772 = vrot.slane %v770, 1
      %v773 = vsel %vm763, %v769, %v772
      %v774 = vshrl.u32 %v592, 16
      %v776 = vor.u32 %v774, %v772
      %v777 = vshll.u32 %v594, 16
      %v779 = vrot.slane %v777, 1
      %v780 = vsel %vm763, %v776, %v779
      %v781 = vshrl.u32 %v594, 16
      %v783 = vor.u32 %v781, %v779
      %v784 = vshll.u32 %v596, 16
      %v786 = vrot.slane %v784, 1
      %v787 = vsel %vm763, %v783, %v786
      %v788 = vshrl.u32 %v596, 16
      %v790 = vor.u32 %v788, %v786
      %v791 = vshll.u32 %v598, 16
      %v793 = vrot.slane %v791, 1
      %v794 = vsel %vm763, %v790, %v793
      %v795 = vshrl.u32 %v598, 16
      %v797 = vor.u32 %v795, %v793
      %v798 = vshll.u32 %v600, 16
      %v800 = vrot.slane %v798, 1
      %v801 = vsel %vm763, %v797, %v800
      %v802 = vshrl.u32 %v600, 16
      %v804 = vor.u32 %v802, %v800
      %v805 = vshll.u32 %v602, 16
      %v807 = vrot.slane %v805, 1
      %v808 = vsel %vm763, %v804, %v807
      %v809 = vshrl.u32 %v602, 16
      %v811 = vor.u32 %v809, %v807
      %v812 = vshll.u32 %v604, 16
      %v814 = vrot.slane %v812, 1
      %v815 = vsel %vm763, %v811, %v814
      %v816 = vshrl.u32 %v604, 16
      %v818 = vor.u32 %v816, %v814
      %v819 = vshll.u32 %v759, 16
      %v821 = vrot.slane %v819, 1
      %v822 = vsel %vm763, %v818, %v821
      %v825 = vunpack.c.l.b16 %v761
      %v826 = vunpack.c.l.b16 %v762
      %v827 = vpack.c.b16 %v826, %v825
      %v829 = vsel %vm612, %v773, 0
      %v832 = vsel %vm612, %v780, 0
      %v835 = vsel %vm612, %v787, 0
      %v838 = vsel %vm612, %v794, 0
      %v841 = vsel %vm612, %v801, 0
      %v844 = vsel %vm612, %v808, 0
      %v847 = vsel %vm612, %v815, 0
      %v850 = vsel %vm612, %v822, 0
      %v853 = vsel %vm629, %v827, 0
      %855 = vmatprep.subr.bf16.mxu0 0
      %856 = vmatpush1.bf16.msra.mxu0 %v853
      %857 = vmatprep.subr.bf16.mxu0 0
      %858 = vmatpush1.bf16.msra.mxu0 0
      %859 = vmatprep.subr.bf16.mxu0 0
      %860 = vmatpush1.bf16.msra.mxu0 0
      %861 = vmatprep.subr.bf16.mxu0 0
      %862 = vmatpush1.bf16.msra.mxu0 0
      %863 = vmatprep.subr.bf16.mxu0 0
      %864 = vmatpush1.bf16.msra.mxu0 0
      %865 = vmatprep.subr.bf16.mxu0 0
      %866 = vmatpush1.bf16.msra.mxu0 0
      %867 = vmatprep.subr.bf16.mxu0 0
      %868 = vmatpush1.bf16.msra.mxu0 0
      %869 = vmatprep.subr.bf16.mxu0 0
      %870 = vmatpush1.bf16.msra.mxu0 0
      %871 = vmatprep.subr.bf16.mxu0 0
      %872 = vmatpush1.bf16.msra.mxu0 0
      %873 = vmatprep.subr.bf16.mxu0 0
      %874 = vmatpush1.bf16.msra.mxu0 0
      %875 = vmatprep.subr.bf16.mxu0 0
      %876 = vmatpush1.bf16.msra.mxu0 0
      %877 = vmatprep.subr.bf16.mxu0 0
      %878 = vmatpush1.bf16.msra.mxu0 0
      %879 = vmatprep.subr.bf16.mxu0 0
      %880 = vmatpush1.bf16.msra.mxu0 0
      %881 = vmatprep.subr.bf16.mxu0 0
      %882 = vmatpush1.bf16.msra.mxu0 0
      %883 = vmatprep.subr.bf16.mxu0 0
      %884 = vmatpush1.bf16.msra.mxu0 0
      %885 = vmatprep.subr.bf16.mxu0 0
      %886 = vmatpush1.bf16.msra.mxu0 0
      %887 = vmatprep.mubr.bf16.mxu0 0
      %888 = vmatmul.mubr.bf16.gmra.mrb[0].mxu0 %v829
      %v889 = vpop.f32.mrb[0].mxu0
      %v890 = vadd.f32 0.0, %v889
      %v891 = vpop.f32.mrb[0].mxu0
      %v892 = vpop.f32.mrb[0].mxu0
      %v893 = vadd.f32 0.0, %v892
      %v894 = vpop.f32.mrb[0].mxu0
      %895 = vmatprep.mubr.bf16.mxu0 0
      %896 = vmatmul.mubr.bf16.gmra.mrb[0].mxu0 %v832
      %v897 = vpop.f32.mrb[0].mxu0
      %v898 = vadd.f32 0.0, %v897
      %v899 = vpop.f32.mrb[0].mxu0
      %v900 = vpop.f32.mrb[0].mxu0
      %v901 = vadd.f32 0.0, %v900
      %v902 = vpop.f32.mrb[0].mxu0
      %903 = vmatprep.mubr.bf16.mxu0 0
      %904 = vmatmul.mubr.bf16.gmra.mrb[0].mxu0 %v835
      %v905 = vpop.f32.mrb[0].mxu0
      %v906 = vadd.f32 0.0, %v905
      %v907 = vpop.f32.mrb[0].mxu0
      %v908 = vpop.f32.mrb[0].mxu0
      %v909 = vadd.f32 0.0, %v908
      %v910 = vpop.f32.mrb[0].mxu0
      %911 = vmatprep.mubr.bf16.mxu0 0
      %912 = vmatmul.mubr.bf16.gmra.mrb[0].mxu0 %v838
      %v913 = vpop.f32.mrb[0].mxu0
      %v914 = vadd.f32 0.0, %v913
      %v915 = vpop.f32.mrb[0].mxu0
      %v916 = vpop.f32.mrb[0].mxu0
      %v917 = vadd.f32 0.0, %v916
      %v918 = vpop.f32.mrb[0].mxu0
      %919 = vmatprep.mubr.bf16.mxu0 0
      %920 = vmatmul.mubr.bf16.gmra.mrb[0].mxu0 %v841
      %v921 = vpop.f32.mrb[0].mxu0
      %v922 = vadd.f32 0.0, %v921
      %v923 = vpop.f32.mrb[0].mxu0
      %v924 = vpop.f32.mrb[0].mxu0
      %v925 = vadd.f32 0.0, %v924
      %v926 = vpop.f32.mrb[0].mxu0
      %927 = vmatprep.mubr.bf16.mxu0 0
      %928 = vmatmul.mubr.bf16.gmra.mrb[0].mxu0 %v844
      %v929 = vpop.f32.mrb[0].mxu0
      %v930 = vadd.f32 0.0, %v929
      %v931 = vpop.f32.mrb[0].mxu0
      %v932 = vpop.f32.mrb[0].mxu0
      %v933 = vadd.f32 0.0, %v932
      %v934 = vpop.f32.mrb[0].mxu0
      %935 = vmatprep.mubr.bf16.mxu0 0
      %936 = vmatmul.mubr.bf16.gmra.mrb[0].mxu0 %v847
      %v937 = vpop.f32.mrb[0].mxu0
      %v938 = vadd.f32 0.0, %v937
      %v939 = vpop.f32.mrb[0].mxu0
      %v940 = vpop.f32.mrb[0].mxu0
      %v941 = vadd.f32 0.0, %v940
      %v942 = vpop.f32.mrb[0].mxu0
      %943 = vmatprep.mubr.bf16.mxu0 0
      %944 = vmatmul.mubr.bf16.gmra.mrb[0].mxu0 %v850
      %v945 = vpop.f32.mrb[0].mxu0
      %v946 = vadd.f32 0.0, %v945
      %v947 = vpop.f32.mrb[0].mxu0
      %v948 = vpop.f32.mrb[0].mxu0
      %v949 = vadd.f32 0.0, %v948
      %v950 = vpop.f32.mrb[0].mxu0
      %951 = vdwg.mxu0
      %v952 = vadd.f32 %v734, %v890
      %v953 = vadd.f32 %v735, %v893
      %v954 = vadd.f32 %v736, %v898
      %v955 = vadd.f32 %v737, %v901
      %v956 = vadd.f32 %v738, %v906
      %v957 = vadd.f32 %v739, %v909
      %v958 = vadd.f32 %v740, %v914
      %v959 = vadd.f32 %v741, %v917
      %v960 = vadd.f32 %v742, %v922
      %v961 = vadd.f32 %v743, %v925
      %v962 = vadd.f32 %v744, %v930
      %v963 = vadd.f32 %v745, %v933
      %v964 = vadd.f32 %v746, %v938
      %v965 = vadd.f32 %v747, %v941
      %v966 = vadd.f32 %v748, %v946
      %v967 = vadd.f32 %v749, %v949
      %s968 = scalar_lea.vmem %s311, 16
      %v969 = vld [vmem:[%s968] sm:$0xf]
      %v970 = vld [vmem:[%s968 + $0x4] sm:$0x3]
      %vm980 = vcmask 1046528
      %v981 = vrot.slane %v590, 1
      %v982 = vrot.slane %v592, 1
      %v983 = vsel %vm980, %v981, %v982
      %v984 = vrot.slane %v594, 1
      %v985 = vsel %vm980, %v982, %v984
      %v986 = vrot.slane %v596, 1
      %v987 = vsel %vm980, %v984, %v986
      %v988 = vrot.slane %v598, 1
      %v989 = vsel %vm980, %v986, %v988
      %v990 = vrot.slane %v600, 1
      %v991 = vsel %vm980, %v988, %v990
      %v992 = vrot.slane %v602, 1
      %v993 = vsel %vm980, %v990, %v992
      %v994 = vrot.slane %v604, 1
      %v995 = vsel %vm980, %v992, %v994
      %v996 = vrot.slane %v759, 1
      %v997 = vsel %vm980, %v994, %v996
      %v1000 = vunpack.c.l.b16 %v969
      %v1001 = vunpack.c.l.b16 %v970
      %v1002 = vpack.c.b16 %v1001, %v1000
      %v1004 = vsel %vm612, %v983, 0
      %v1007 = vsel %vm612, %v985, 0
      %v1010 = vsel %vm612, %v987, 0
      %v1013 = vsel %vm612, %v989, 0
      %v1016 = vsel %vm612, %v991, 0
      %v1019 = vsel %vm612, %v993, 0
      %v1022 = vsel %vm612, %v995, 0
      %v1025 = vsel %vm612, %v997, 0
      %v1028 = vsel %vm629, %v1002, 0
      %1030 = vmatprep.subr.bf16.mxu0 0
      %1031 = vmatpush1.bf16.msra.mxu0 %v1028
      %1032 = vmatprep.subr.bf16.mxu0 0
      %1033 = vmatpush1.bf16.msra.mxu0 0
      %1034 = vmatprep.subr.bf16.mxu0 0
      %1035 = vmatpush1.bf16.msra.mxu0 0
      %1036 = vmatprep.subr.bf16.mxu0 0
      %1037 = vmatpush1.bf16.msra.mxu0 0
      %1038 = vmatprep.subr.bf16.mxu0 0
      %1039 = vmatpush1.bf16.msra.mxu0 0
      %1040 = vmatprep.subr.bf16.mxu0 0
      %1041 = vmatpush1.bf16.msra.mxu0 0
      %1042 = vmatprep.subr.bf16.mxu0 0
      %1043 = vmatpush1.bf16.msra.mxu0 0
      %1044 = vmatprep.subr.bf16.mxu0 0
      %1045 = vmatpush1.bf16.msra.mxu0 0
      %1046 = vmatprep.subr.bf16.mxu0 0
      %1047 = vmatpush1.bf16.msra.mxu0 0
      %1048 = vmatprep.subr.bf16.mxu0 0
      %1049 = vmatpush1.bf16.msra.mxu0 0
      %1050 = vmatprep.subr.bf16.mxu0 0
      %1051 = vmatpush1.bf16.msra.mxu0 0
      %1052 = vmatprep.subr.bf16.mxu0 0
      %1053 = vmatpush1.bf16.msra.mxu0 0
      %1054 = vmatprep.subr.bf16.mxu0 0
      %1055 = vmatpush1.bf16.msra.mxu0 0
      %1056 = vmatprep.subr.bf16.mxu0 0
      %1057 = vmatpush1.bf16.msra.mxu0 0
      %1058 = vmatprep.subr.bf16.mxu0 0
      %1059 = vmatpush1.bf16.msra.mxu0 0
      %1060 = vmatprep.subr.bf16.mxu0 0
      %1061 = vmatpush1.bf16.msra.mxu0 0
      %1062 = vmatprep.mubr.bf16.mxu0 0
      %1063 = vmatmul.mubr.bf16.gmra.mrb[0].mxu0 %v1004
      %v1064 = vpop.f32.mrb[0].mxu0
      %v1065 = vadd.f32 0.0, %v1064
      %v1066 = vpop.f32.mrb[0].mxu0
      %v1067 = vpop.f32.mrb[0].mxu0
      %v1068 = vadd.f32 0.0, %v1067
      %v1069 = vpop.f32.mrb[0].mxu0
      %1070 = vmatprep.mubr.bf16.mxu0 0
      %1071 = vmatmul.mubr.bf16.gmra.mrb[0].mxu0 %v1007
      %v1072 = vpop.f32.mrb[0].mxu0
      %v1073 = vadd.f32 0.0, %v1072
      %v1074 = vpop.f32.mrb[0].mxu0
      %v1075 = vpop.f32.mrb[0].mxu0
      %v1076 = vadd.f32 0.0, %v1075
      %v1077 = vpop.f32.mrb[0].mxu0
      %1078 = vmatprep.mubr.bf16.mxu0 0
      %1079 = vmatmul.mubr.bf16.gmra.mrb[0].mxu0 %v1010
      %v1080 = vpop.f32.mrb[0].mxu0
      %v1081 = vadd.f32 0.0, %v1080
      %v1082 = vpop.f32.mrb[0].mxu0
      %v1083 = vpop.f32.mrb[0].mxu0
      %v1084 = vadd.f32 0.0, %v1083
      %v1085 = vpop.f32.mrb[0].mxu0
      %1086 = vmatprep.mubr.bf16.mxu0 0
      %1087 = vmatmul.mubr.bf16.gmra.mrb[0].mxu0 %v1013
      %v1088 = vpop.f32.mrb[0].mxu0
      %v1089 = vadd.f32 0.0, %v1088
      %v1090 = vpop.f32.mrb[0].mxu0
      %v1091 = vpop.f32.mrb[0].mxu0
      %v1092 = vadd.f32 0.0, %v1091
      %v1093 = vpop.f32.mrb[0].mxu0
      %1094 = vmatprep.mubr.bf16.mxu0 0
      %1095 = vmatmul.mubr.bf16.gmra.mrb[0].mxu0 %v1016
      %v1096 = vpop.f32.mrb[0].mxu0
      %v1097 = vadd.f32 0.0, %v1096
      %v1098 = vpop.f32.mrb[0].mxu0
      %v1099 = vpop.f32.mrb[0].mxu0
      %v1100 = vadd.f32 0.0, %v1099
      %v1101 = vpop.f32.mrb[0].mxu0
      %1102 = vmatprep.mubr.bf16.mxu0 0
      %1103 = vmatmul.mubr.bf16.gmra.mrb[0].mxu0 %v1019
      %v1104 = vpop.f32.mrb[0].mxu0
      %v1105 = vadd.f32 0.0, %v1104
      %v1106 = vpop.f32.mrb[0].mxu0
      %v1107 = vpop.f32.mrb[0].mxu0
      %v1108 = vadd.f32 0.0, %v1107
      %v1109 = vpop.f32.mrb[0].mxu0
      %1110 = vmatprep.mubr.bf16.mxu0 0
      %1111 = vmatmul.mubr.bf16.gmra.mrb[0].mxu0 %v1022
      %v1112 = vpop.f32.mrb[0].mxu0
      %v1113 = vadd.f32 0.0, %v1112
      %v1114 = vpop.f32.mrb[0].mxu0
      %v1115 = vpop.f32.mrb[0].mxu0
      %v1116 = vadd.f32 0.0, %v1115
      %v1117 = vpop.f32.mrb[0].mxu0
      %1118 = vmatprep.mubr.bf16.mxu0 0
      %1119 = vmatmul.mubr.bf16.gmra.mrb[0].mxu0 %v1025
      %v1120 = vpop.f32.mrb[0].mxu0
      %v1121 = vadd.f32 0.0, %v1120
      %v1122 = vpop.f32.mrb[0].mxu0
      %v1123 = vpop.f32.mrb[0].mxu0
      %v1124 = vadd.f32 0.0, %v1123
      %v1125 = vpop.f32.mrb[0].mxu0
      %1126 = vdwg.mxu0
      %v1127 = vsel %vm340, 1, 0
      %v1128 = vsel %vm341, 1, 0
      %vm1129 = vcmp.eq.s32.totalorder %v1127, 1
      %vm1130 = vcmp.eq.s32.totalorder %v1128, 1
      %v1131 = vsel %vm1129, %v1065, 0.0
      %v1132 = vsel %vm1130, %v1068, 0.0
      %v1133 = vsel %vm1129, %v1073, 0.0
      %v1134 = vsel %vm1130, %v1076, 0.0
      %v1135 = vsel %vm1129, %v1081, 0.0
      %v1136 = vsel %vm1130, %v1084, 0.0
      %v1137 = vsel %vm1129, %v1089, 0.0
      %v1138 = vsel %vm1130, %v1092, 0.0
      %v1139 = vsel %vm1129, %v1097, 0.0
      %v1140 = vsel %vm1130, %v1100, 0.0
      %v1141 = vsel %vm1129, %v1105, 0.0
      %v1142 = vsel %vm1130, %v1108, 0.0
      %v1143 = vsel %vm1129, %v1113, 0.0
      %v1144 = vsel %vm1130, %v1116, 0.0
      %v1145 = vsel %vm1129, %v1121, 0.0
      %v1146 = vsel %vm1130, %v1124, 0.0
      %v1147 = vadd.f32 %v952, %v1131
      %v1148 = vadd.f32 %v953, %v1132
      %v1149 = vadd.f32 %v954, %v1133
      %v1150 = vadd.f32 %v955, %v1134
      %v1151 = vadd.f32 %v956, %v1135
      %v1152 = vadd.f32 %v957, %v1136
      %v1153 = vadd.f32 %v958, %v1137
      %v1154 = vadd.f32 %v959, %v1138
      %v1155 = vadd.f32 %v960, %v1139
      %v1156 = vadd.f32 %v961, %v1140
      %v1157 = vadd.f32 %v962, %v1141
      %v1158 = vadd.f32 %v963, %v1142
      %v1159 = vadd.f32 %v964, %v1143
      %v1160 = vadd.f32 %v965, %v1144
      %v1161 = vadd.f32 %v966, %v1145
      %v1162 = vadd.f32 %v967, %v1146
      %s1163 = smul.addr %s342, 4
      %s1164 = scalar_lea.vmem %s307, %s1163
      %v1165 = vld [vmem:[%s1164] sm:$0xf]
      %v1166 = vld [vmem:[%s1164 + $0x4] sm:$0xf]
      %v1167 = vld [vmem:[%s1164 + $0x8] sm:$0xf]
      %v1168 = vld [vmem:[%s1164 + $0xc] sm:$0xf]
      %v1169 = vld [vmem:[%s1164 + $0x10] sm:$0xf]
      %v1170 = vld [vmem:[%s1164 + $0x14] sm:$0xf]
      %v1171 = vld [vmem:[%s1164 + $0x18] sm:$0xf]
      %v1172 = vld [vmem:[%s1164 + $0x1c] sm:$0xf]
      %v1173 = vld [vmem:[%s1164 + $0x20] sm:$0xf]
      %v1174 = vld [vmem:[%s1164 + $0x24] sm:$0xf]
      %v1175 = vld [vmem:[%s1164 + $0x28] sm:$0xf]
      %v1176 = vld [vmem:[%s1164 + $0x2c] sm:$0xf]
      %v1177 = vld [vmem:[%s1164 + $0x30] sm:$0xf]
      %v1178 = vld [vmem:[%s1164 + $0x34] sm:$0xf]
      %v1179 = vld [vmem:[%s1164 + $0x38] sm:$0xf]
      %v1180 = vld [vmem:[%s1164 + $0x3c] sm:$0xf]
      %s1181 = smul.addr %s364, 4
      %s1182 = scalar_lea.vmem %s307, %s1181
      %v1183 = vld [vmem:[%s1182] sm:$0xf]
      %v1184 = vld [vmem:[%s1182 + $0x4] sm:$0xf]
      %s1185 = smul.addr %s372, 4
      %s1186 = scalar_lea.vmem %s307, %s1185
      %v1187 = vld [vmem:[%s1186] sm:$0xf]
      %v1188 = vld [vmem:[%s1186 + $0x4] sm:$0xf]
      %v1189 = vsel %vm380, %v1183, 0
      %v1190 = vsel %vm380, %v1184, 0
      %v1191 = vsel %vm386, %v1187, 0
      %v1192 = vsel %vm386, %v1188, 0
      %v1195 = vunpack.c.l.b16 %v1189
      %v1196 = vunpack.c.l.b16 %v1190
      %v1197 = vpack.c.b16 %v1196, %v1195
      %v1199 = vshrl.u32 %v1197, 16
      %v1201 = vrot.slane %v1199, 7
      %v1202 = vshll.u32 %v1197, 16
      %v1204 = vor.u32 %v1201, %v1202
      %v1223 = vunpack.c.l.b16 %v1165
      %v1224 = vunpack.c.l.b16 %v1166
      %v1225 = vunpack.c.l.b16 %v1167
      %v1226 = vunpack.c.l.b16 %v1168
      %v1227 = vunpack.c.l.b16 %v1169
      %v1228 = vunpack.c.l.b16 %v1170
      %v1229 = vunpack.c.l.b16 %v1171
      %v1230 = vunpack.c.l.b16 %v1172
      %v1231 = vunpack.c.l.b16 %v1173
      %v1232 = vunpack.c.l.b16 %v1174
      %v1233 = vunpack.c.l.b16 %v1175
      %v1234 = vunpack.c.l.b16 %v1176
      %v1235 = vunpack.c.l.b16 %v1177
      %v1236 = vunpack.c.l.b16 %v1178
      %v1237 = vunpack.c.l.b16 %v1179
      %v1238 = vunpack.c.l.b16 %v1180
      %v1239 = vpack.c.b16 %v1224, %v1223
      %v1240 = vpack.c.b16 %v1226, %v1225
      %v1241 = vpack.c.b16 %v1228, %v1227
      %v1242 = vpack.c.b16 %v1230, %v1229
      %v1243 = vpack.c.b16 %v1232, %v1231
      %v1244 = vpack.c.b16 %v1234, %v1233
      %v1245 = vpack.c.b16 %v1236, %v1235
      %v1246 = vpack.c.b16 %v1238, %v1237
      %v1248 = vshrl.u32 %v1239, 16
      %v1250 = vrot.slane %v1248, 7
      %v1251 = vshll.u32 %v1239, 16
      %v1253 = vor.u32 %v1250, %v1251
      %v1255 = vshrl.u32 %v1240, 16
      %v1257 = vrot.slane %v1255, 7
      %v1258 = vshll.u32 %v1240, 16
      %v1260 = vor.u32 %v1257, %v1258
      %v1261 = vsel %vm443, %v1250, %v1260
      %v1263 = vshrl.u32 %v1241, 16
      %v1265 = vrot.slane %v1263, 7
      %v1266 = vshll.u32 %v1241, 16
      %v1268 = vor.u32 %v1265, %v1266
      %v1269 = vsel %vm443, %v1257, %v1268
      %v1271 = vshrl.u32 %v1242, 16
      %v1273 = vrot.slane %v1271, 7
      %v1274 = vshll.u32 %v1242, 16
      %v1276 = vor.u32 %v1273, %v1274
      %v1277 = vsel %vm443, %v1265, %v1276
      %v1279 = vshrl.u32 %v1243, 16
      %v1281 = vrot.slane %v1279, 7
      %v1282 = vshll.u32 %v1243, 16
      %v1284 = vor.u32 %v1281, %v1282
      %v1285 = vsel %vm443, %v1273, %v1284
      %v1287 = vshrl.u32 %v1244, 16
      %v1289 = vrot.slane %v1287, 7
      %v1290 = vshll.u32 %v1244, 16
      %v1292 = vor.u32 %v1289, %v1290
      %v1293 = vsel %vm443, %v1281, %v1292
      %v1295 = vshrl.u32 %v1245, 16
      %v1297 = vrot.slane %v1295, 7
      %v1298 = vshll.u32 %v1245, 16
      %v1300 = vor.u32 %v1297, %v1298
      %v1301 = vsel %vm443, %v1289, %v1300
      %v1303 = vshrl.u32 %v1246, 16
      %v1305 = vrot.slane %v1303, 7
      %v1306 = vshll.u32 %v1246, 16
      %v1308 = vor.u32 %v1305, %v1306
      %v1309 = vsel %vm443, %v1297, %v1308
      %v1314 = vunpack.c.l.b16 %v1191
      %v1315 = vunpack.c.l.b16 %v1192
      %v1316 = vpack.c.b16 %v1315, %v1314
      %v1318 = vshrl.u32 %v1316, 16
      %v1320 = vrot.slane %v1318, 7
      %v1321 = vshll.u32 %v1316, 16
      %v1323 = vor.u32 %v1320, %v1321
      %v1326 = vsel %vm524, 0, %v1204
      %v1327 = vsel %vm524, %v1201, %v1253
      %v1328 = vsel %vm524, %v1305, %v1323
      %v1329 = vsel %vm524, %v1320, 0
      %1331 = vrot.lane.b32.xlu0 %v1327, 64
      %v1332 = vpop.permute.xlu0 %1331
      %1333 = vrot.lane.b32.xlu0 %v1261, 64
      %v1334 = vpop.permute.xlu0 %1333
      %1335 = vrot.lane.b32.xlu0 %v1269, 64
      %v1336 = vpop.permute.xlu0 %1335
      %1337 = vrot.lane.b32.xlu0 %v1277, 64
      %v1338 = vpop.permute.xlu0 %1337
      %1339 = vrot.lane.b32.xlu0 %v1285, 64
      %v1340 = vpop.permute.xlu0 %1339
      %1341 = vrot.lane.b32.xlu0 %v1293, 64
      %v1342 = vpop.permute.xlu0 %1341
      %1343 = vrot.lane.b32.xlu0 %v1301, 64
      %v1344 = vpop.permute.xlu0 %1343
      %1345 = vrot.lane.b32.xlu0 %v1309, 64
      %v1346 = vpop.permute.xlu0 %1345
      %vm1347 = vcmask 523264
      %v1350 = vsel %vm1347, %v1326, %v1332
      %v1354 = vsel %vm1347, %v1327, %v1334
      %v1358 = vsel %vm1347, %v1261, %v1336
      %v1362 = vsel %vm1347, %v1269, %v1338
      %v1366 = vsel %vm1347, %v1277, %v1340
      %v1370 = vsel %vm1347, %v1285, %v1342
      %v1374 = vsel %vm1347, %v1293, %v1344
      %v1378 = vsel %vm1347, %v1301, %v1346
      %v1380 = vld [vmem:[%s315] sm:$0xf]
      %v1381 = vld [vmem:[%s315 + $0x4] sm:$0xf]
      %v1382 = vld [vmem:[%s315 + $0x8] sm:$0xf]
      %v1383 = vld [vmem:[%s315 + $0xc] sm:$0xf]
      %v1384 = vld [vmem:[%s315 + $0x10] sm:$0xf]
      %v1385 = vld [vmem:[%s315 + $0x14] sm:$0xf]
      %v1386 = vld [vmem:[%s315 + $0x18] sm:$0xf]
      %v1387 = vld [vmem:[%s315 + $0x1c] sm:$0xf]
      %v1388 = vld [vmem:[%s315 + $0x20] sm:$0xf]
      %v1389 = vld [vmem:[%s315 + $0x24] sm:$0xf]
      %v1390 = vld [vmem:[%s315 + $0x28] sm:$0xf]
      %v1391 = vld [vmem:[%s315 + $0x2c] sm:$0xf]
      %v1392 = vld [vmem:[%s315 + $0x30] sm:$0xf]
      %v1393 = vld [vmem:[%s315 + $0x34] sm:$0xf]
      %v1394 = vld [vmem:[%s315 + $0x38] sm:$0xf]
      %v1395 = vld [vmem:[%s315 + $0x3c] sm:$0xf]
      %v1396 = vld [vmem:[%s315 + $0x40] sm:$0xf]
      %v1397 = vld [vmem:[%s315 + $0x44] sm:$0xf]
      %v1398 = vld [vmem:[%s315 + $0x48] sm:$0xf]
      %v1399 = vld [vmem:[%s315 + $0x4c] sm:$0xf]
      %v1400 = vld [vmem:[%s315 + $0x50] sm:$0xf]
      %v1401 = vld [vmem:[%s315 + $0x54] sm:$0xf]
      %v1402 = vld [vmem:[%s315 + $0x58] sm:$0xf]
      %v1403 = vld [vmem:[%s315 + $0x5c] sm:$0xf]
      %v1428 = vunpack.c.l.b16 %v1380
      %v1429 = vunpack.c.l.b16 %v1381
      %v1430 = vunpack.c.l.b16 %v1382
      %v1431 = vunpack.c.l.b16 %v1383
      %v1432 = vunpack.c.l.b16 %v1384
      %v1433 = vunpack.c.l.b16 %v1385
      %v1434 = vunpack.c.l.b16 %v1386
      %v1435 = vunpack.c.l.b16 %v1387
      %v1436 = vunpack.c.l.b16 %v1388
      %v1437 = vunpack.c.l.b16 %v1389
      %v1438 = vunpack.c.l.b16 %v1390
      %v1439 = vunpack.c.l.b16 %v1391
      %v1440 = vunpack.c.l.b16 %v1392
      %v1441 = vunpack.c.l.b16 %v1393
      %v1442 = vunpack.c.l.b16 %v1394
      %v1443 = vunpack.c.l.b16 %v1395
      %v1444 = vunpack.c.l.b16 %v1396
      %v1445 = vunpack.c.l.b16 %v1397
      %v1446 = vunpack.c.l.b16 %v1398
      %v1447 = vunpack.c.l.b16 %v1399
      %v1448 = vunpack.c.l.b16 %v1400
      %v1449 = vunpack.c.l.b16 %v1401
      %v1450 = vunpack.c.l.b16 %v1402
      %v1451 = vunpack.c.l.b16 %v1403
      %v1452 = vpack.c.b16 %v1429, %v1428
      %v1453 = vpack.c.b16 %v1431, %v1430
      %v1454 = vpack.c.b16 %v1433, %v1432
      %v1455 = vpack.c.b16 %v1435, %v1434
      %v1456 = vpack.c.b16 %v1437, %v1436
      %v1457 = vpack.c.b16 %v1439, %v1438
      %v1458 = vpack.c.b16 %v1441, %v1440
      %v1459 = vpack.c.b16 %v1443, %v1442
      %v1460 = vpack.c.b16 %v1445, %v1444
      %v1461 = vpack.c.b16 %v1447, %v1446
      %v1462 = vpack.c.b16 %v1449, %v1448
      %v1463 = vpack.c.b16 %v1451, %v1450
      %v1476 = vsel %vm1347, %v1261, 0
      %v1478 = vsel %vm1347, %v1269, 0
      %v1480 = vsel %vm1347, %v1277, 0
      %v1482 = vsel %vm1347, %v1285, 0
      %v1484 = vsel %vm1347, %v1293, 0
      %v1486 = vsel %vm1347, %v1301, 0
      %v1489 = vsel %vm1347, %v1309, 0
      %v1492 = vsel %vm1347, %v1328, 0
      %1494 = vmatprep.subr.bf16.mxu0 0
      %1495 = vmatpush1.bf16.msra.mxu0 %v1452
      %1496 = vmatprep.subr.bf16.mxu0 0
      %1497 = vmatpush1.bf16.msra.mxu0 %v1453
      %1498 = vmatprep.subr.bf16.mxu0 0
      %1499 = vmatpush1.bf16.msra.mxu0 %v1454
      %1500 = vmatprep.subr.bf16.mxu0 0
      %1501 = vmatpush1.bf16.msra.mxu0 %v1455
      %1502 = vmatprep.subr.bf16.mxu0 0
      %1503 = vmatpush1.bf16.msra.mxu0 %v1456
      %1504 = vmatprep.subr.bf16.mxu0 0
      %1505 = vmatpush1.bf16.msra.mxu0 %v1457
      %1506 = vmatprep.subr.bf16.mxu0 0
      %1507 = vmatpush1.bf16.msra.mxu0 %v1458
      %1508 = vmatprep.subr.bf16.mxu0 0
      %1509 = vmatpush1.bf16.msra.mxu0 %v1459
      %1510 = vmatprep.subr.bf16.mxu0 0
      %1511 = vmatpush1.bf16.msra.mxu0 %v1460
      %1512 = vmatprep.subr.bf16.mxu0 0
      %1513 = vmatpush1.bf16.msra.mxu0 %v1461
      %1514 = vmatprep.subr.bf16.mxu0 0
      %1515 = vmatpush1.bf16.msra.mxu0 %v1462
      %1516 = vmatprep.subr.bf16.mxu0 0
      %1517 = vmatpush1.bf16.msra.mxu0 %v1463
      %1518 = vmatprep.subr.bf16.mxu0 0
      %1519 = vmatpush1.bf16.msra.mxu0 0
      %1520 = vmatprep.subr.bf16.mxu0 0
      %1521 = vmatpush1.bf16.msra.mxu0 0
      %1522 = vmatprep.subr.bf16.mxu0 0
      %1523 = vmatpush1.bf16.msra.mxu0 0
      %1524 = vmatprep.subr.bf16.mxu0 0
      %1525 = vmatpush1.bf16.msra.mxu0 0
      %1526 = vmatprep.mubr.bf16.mxu0 %v1476
      %1527 = vmatmul.mubr.bf16.gmra.mrb[0].mxu0 %v1350
      %v1528 = vpop.f32.mrb[0].mxu0
      %v1529 = vadd.f32 0.0, %v1528
      %v1530 = vpop.f32.mrb[0].mxu0
      %v1531 = vpop.f32.mrb[0].mxu0
      %v1532 = vadd.f32 0.0, %v1531
      %v1533 = vpop.f32.mrb[0].mxu0
      %1534 = vmatprep.mubr.bf16.mxu0 %v1478
      %1535 = vmatmul.mubr.bf16.gmra.mrb[0].mxu0 %v1354
      %v1536 = vpop.f32.mrb[0].mxu0
      %v1537 = vadd.f32 0.0, %v1536
      %v1538 = vpop.f32.mrb[0].mxu0
      %v1539 = vpop.f32.mrb[0].mxu0
      %v1540 = vadd.f32 0.0, %v1539
      %v1541 = vpop.f32.mrb[0].mxu0
      %1542 = vmatprep.mubr.bf16.mxu0 %v1480
      %1543 = vmatmul.mubr.bf16.gmra.mrb[0].mxu0 %v1358
      %v1544 = vpop.f32.mrb[0].mxu0
      %v1545 = vadd.f32 0.0, %v1544
      %v1546 = vpop.f32.mrb[0].mxu0
      %v1547 = vpop.f32.mrb[0].mxu0
      %v1548 = vadd.f32 0.0, %v1547
      %v1549 = vpop.f32.mrb[0].mxu0
      %1550 = vmatprep.mubr.bf16.mxu0 %v1482
      %1551 = vmatmul.mubr.bf16.gmra.mrb[0].mxu0 %v1362
      %v1552 = vpop.f32.mrb[0].mxu0
      %v1553 = vadd.f32 0.0, %v1552
      %v1554 = vpop.f32.mrb[0].mxu0
      %v1555 = vpop.f32.mrb[0].mxu0
      %v1556 = vadd.f32 0.0, %v1555
      %v1557 = vpop.f32.mrb[0].mxu0
      %1558 = vmatprep.mubr.bf16.mxu0 %v1484
      %1559 = vmatmul.mubr.bf16.gmra.mrb[0].mxu0 %v1366
      %v1560 = vpop.f32.mrb[0].mxu0
      %v1561 = vadd.f32 0.0, %v1560
      %v1562 = vpop.f32.mrb[0].mxu0
      %v1563 = vpop.f32.mrb[0].mxu0
      %v1564 = vadd.f32 0.0, %v1563
      %v1565 = vpop.f32.mrb[0].mxu0
      %1566 = vmatprep.mubr.bf16.mxu0 %v1486
      %1567 = vmatmul.mubr.bf16.gmra.mrb[0].mxu0 %v1370
      %v1568 = vpop.f32.mrb[0].mxu0
      %v1569 = vadd.f32 0.0, %v1568
      %v1570 = vpop.f32.mrb[0].mxu0
      %v1571 = vpop.f32.mrb[0].mxu0
      %v1572 = vadd.f32 0.0, %v1571
      %v1573 = vpop.f32.mrb[0].mxu0
      %1574 = vmatprep.mubr.bf16.mxu0 %v1489
      %1575 = vmatmul.mubr.bf16.gmra.mrb[0].mxu0 %v1374
      %v1576 = vpop.f32.mrb[0].mxu0
      %v1577 = vadd.f32 0.0, %v1576
      %v1578 = vpop.f32.mrb[0].mxu0
      %v1579 = vpop.f32.mrb[0].mxu0
      %v1580 = vadd.f32 0.0, %v1579
      %v1581 = vpop.f32.mrb[0].mxu0
      %1582 = vmatprep.mubr.bf16.mxu0 %v1492
      %1583 = vmatmul.mubr.bf16.gmra.mrb[0].mxu0 %v1378
      %v1584 = vpop.f32.mrb[0].mxu0
      %v1585 = vadd.f32 0.0, %v1584
      %v1586 = vpop.f32.mrb[0].mxu0
      %v1587 = vpop.f32.mrb[0].mxu0
      %v1588 = vadd.f32 0.0, %v1587
      %v1589 = vpop.f32.mrb[0].mxu0
      %1590 = vdwg.mxu0
      %v1591 = vsel %vm732, %v1529, 0.0
      %v1592 = vsel %vm733, %v1532, 0.0
      %v1593 = vsel %vm732, %v1537, 0.0
      %v1594 = vsel %vm733, %v1540, 0.0
      %v1595 = vsel %vm732, %v1545, 0.0
      %v1596 = vsel %vm733, %v1548, 0.0
      %v1597 = vsel %vm732, %v1553, 0.0
      %v1598 = vsel %vm733, %v1556, 0.0
      %v1599 = vsel %vm732, %v1561, 0.0
      %v1600 = vsel %vm733, %v1564, 0.0
      %v1601 = vsel %vm732, %v1569, 0.0
      %v1602 = vsel %vm733, %v1572, 0.0
      %v1603 = vsel %vm732, %v1577, 0.0
      %v1604 = vsel %vm733, %v1580, 0.0
      %v1605 = vsel %vm732, %v1585, 0.0
      %v1606 = vsel %vm733, %v1588, 0.0
      %v1607 = vadd.f32 %v1147, %v1591
      %v1608 = vadd.f32 %v1148, %v1592
      %v1609 = vadd.f32 %v1149, %v1593
      %v1610 = vadd.f32 %v1150, %v1594
      %v1611 = vadd.f32 %v1151, %v1595
      %v1612 = vadd.f32 %v1152, %v1596
      %v1613 = vadd.f32 %v1153, %v1597
      %v1614 = vadd.f32 %v1154, %v1598
      %v1615 = vadd.f32 %v1155, %v1599
      %v1616 = vadd.f32 %v1156, %v1600
      %v1617 = vadd.f32 %v1157, %v1601
      %v1618 = vadd.f32 %v1158, %v1602
      %v1619 = vadd.f32 %v1159, %v1603
      %v1620 = vadd.f32 %v1160, %v1604
      %v1621 = vadd.f32 %v1161, %v1605
      %v1622 = vadd.f32 %v1162, %v1606
      %1624 = vrot.lane.b32.xlu0 %v1328, 64
      %v1625 = vpop.permute.xlu0 %1624
      %v1627 = vsel %vm1347, %v1309, %v1625
      %s1628 = scalar_lea.vmem %s315, 96
      %v1629 = vld [vmem:[%s1628] sm:$0xf]
      %v1630 = vld [vmem:[%s1628 + $0x4] sm:$0xf]
      %v1631 = vld [vmem:[%s1628 + $0x8] sm:$0xf]
      %v1632 = vld [vmem:[%s1628 + $0xc] sm:$0xf]
      %v1633 = vld [vmem:[%s1628 + $0x10] sm:$0xf]
      %v1634 = vld [vmem:[%s1628 + $0x14] sm:$0xf]
      %v1635 = vld [vmem:[%s1628 + $0x18] sm:$0xf]
      %v1636 = vld [vmem:[%s1628 + $0x1c] sm:$0xf]
      %v1637 = vld [vmem:[%s1628 + $0x20] sm:$0xf]
      %v1638 = vld [vmem:[%s1628 + $0x24] sm:$0xf]
      %v1639 = vld [vmem:[%s1628 + $0x28] sm:$0xf]
      %v1640 = vld [vmem:[%s1628 + $0x2c] sm:$0xf]
      %v1641 = vld [vmem:[%s1628 + $0x30] sm:$0xf]
      %v1642 = vld [vmem:[%s1628 + $0x34] sm:$0xf]
      %v1643 = vld [vmem:[%s1628 + $0x38] sm:$0xf]
      %v1644 = vld [vmem:[%s1628 + $0x3c] sm:$0xf]
      %v1645 = vld [vmem:[%s1628 + $0x40] sm:$0xf]
      %v1646 = vld [vmem:[%s1628 + $0x44] sm:$0xf]
      %v1647 = vld [vmem:[%s1628 + $0x48] sm:$0xf]
      %v1648 = vld [vmem:[%s1628 + $0x4c] sm:$0xf]
      %v1649 = vld [vmem:[%s1628 + $0x50] sm:$0xf]
      %v1650 = vld [vmem:[%s1628 + $0x54] sm:$0xf]
      %v1651 = vld [vmem:[%s1628 + $0x58] sm:$0xf]
      %v1652 = vld [vmem:[%s1628 + $0x5c] sm:$0xf]
      %v1653 = vshrl.u32 %v1350, 16
      %v1655 = vshll.u32 %v1350, 16
      %v1657 = vrot.slane %v1655, 1
      %v1658 = vor.u32 %v1653, %v1657
      %v1659 = vshll.u32 %v1354, 16
      %v1661 = vrot.slane %v1659, 1
      %v1662 = vsel %vm763, %v1658, %v1661
      %v1663 = vshrl.u32 %v1261, 16
      %v1665 = vshll.u32 %v1261, 16
      %v1667 = vrot.slane %v1665, 1
      %v1668 = vor.u32 %v1663, %v1667
      %v1669 = vshll.u32 %v1269, 16
      %v1671 = vrot.slane %v1669, 1
      %v1672 = vsel %vm763, %v1668, %v1671
      %v1673 = vshrl.u32 %v1354, 16
      %v1675 = vor.u32 %v1673, %v1661
      %v1676 = vshll.u32 %v1358, 16
      %v1678 = vrot.slane %v1676, 1
      %v1679 = vsel %vm763, %v1675, %v1678
      %v1680 = vshrl.u32 %v1269, 16
      %v1682 = vor.u32 %v1680, %v1671
      %v1683 = vshll.u32 %v1277, 16
      %v1685 = vrot.slane %v1683, 1
      %v1686 = vsel %vm763, %v1682, %v1685
      %v1687 = vshrl.u32 %v1358, 16
      %v1689 = vor.u32 %v1687, %v1678
      %v1690 = vshll.u32 %v1362, 16
      %v1692 = vrot.slane %v1690, 1
      %v1693 = vsel %vm763, %v1689, %v1692
      %v1694 = vshrl.u32 %v1277, 16
      %v1696 = vor.u32 %v1694, %v1685
      %v1697 = vshll.u32 %v1285, 16
      %v1699 = vrot.slane %v1697, 1
      %v1700 = vsel %vm763, %v1696, %v1699
      %v1701 = vshrl.u32 %v1362, 16
      %v1703 = vor.u32 %v1701, %v1692
      %v1704 = vshll.u32 %v1366, 16
      %v1706 = vrot.slane %v1704, 1
      %v1707 = vsel %vm763, %v1703, %v1706
      %v1708 = vshrl.u32 %v1285, 16
      %v1710 = vor.u32 %v1708, %v1699
      %v1711 = vshll.u32 %v1293, 16
      %v1713 = vrot.slane %v1711, 1
      %v1714 = vsel %vm763, %v1710, %v1713
      %v1715 = vshrl.u32 %v1366, 16
      %v1717 = vor.u32 %v1715, %v1706
      %v1718 = vshll.u32 %v1370, 16
      %v1720 = vrot.slane %v1718, 1
      %v1721 = vsel %vm763, %v1717, %v1720
      %v1722 = vshrl.u32 %v1293, 16
      %v1724 = vor.u32 %v1722, %v1713
      %v1725 = vshll.u32 %v1301, 16
      %v1727 = vrot.slane %v1725, 1
      %v1728 = vsel %vm763, %v1724, %v1727
      %v1729 = vshrl.u32 %v1370, 16
      %v1731 = vor.u32 %v1729, %v1720
      %v1732 = vshll.u32 %v1374, 16
      %v1734 = vrot.slane %v1732, 1
      %v1735 = vsel %vm763, %v1731, %v1734
      %v1736 = vshrl.u32 %v1301, 16
      %v1738 = vor.u32 %v1736, %v1727
      %v1739 = vshll.u32 %v1309, 16
      %v1741 = vrot.slane %v1739, 1
      %v1742 = vsel %vm763, %v1738, %v1741
      %v1743 = vshrl.u32 %v1374, 16
      %v1745 = vor.u32 %v1743, %v1734
      %v1746 = vshll.u32 %v1378, 16
      %v1748 = vrot.slane %v1746, 1
      %v1749 = vsel %vm763, %v1745, %v1748
      %v1750 = vshrl.u32 %v1309, 16
      %v1752 = vor.u32 %v1750, %v1741
      %v1753 = vshll.u32 %v1328, 16
      %v1755 = vrot.slane %v1753, 1
      %v1756 = vsel %vm763, %v1752, %v1755
      %v1757 = vshrl.u32 %v1378, 16
      %v1759 = vor.u32 %v1757, %v1748
      %v1760 = vshll.u32 %v1627, 16
      %v1762 = vrot.slane %v1760, 1
      %v1763 = vsel %vm763, %v1759, %v1762
      %v1764 = vshrl.u32 %v1328, 16
      %v1766 = vor.u32 %v1764, %v1755
      %v1768 = vshll.u32 %v1329, 16
      %v1770 = vrot.slane %v1768, 1
      %v1771 = vsel %vm763, %v1766, %v1770
      %v1804 = vunpack.c.l.b16 %v1629
      %v1805 = vunpack.c.l.b16 %v1630
      %v1806 = vunpack.c.l.b16 %v1631
      %v1807 = vunpack.c.l.b16 %v1632
      %v1808 = vunpack.c.l.b16 %v1633
      %v1809 = vunpack.c.l.b16 %v1634
      %v1810 = vunpack.c.l.b16 %v1635
      %v1811 = vunpack.c.l.b16 %v1636
      %v1812 = vunpack.c.l.b16 %v1637
      %v1813 = vunpack.c.l.b16 %v1638
      %v1814 = vunpack.c.l.b16 %v1639
      %v1815 = vunpack.c.l.b16 %v1640
      %v1816 = vunpack.c.l.b16 %v1641
      %v1817 = vunpack.c.l.b16 %v1642
      %v1818 = vunpack.c.l.b16 %v1643
      %v1819 = vunpack.c.l.b16 %v1644
      %v1820 = vunpack.c.l.b16 %v1645
      %v1821 = vunpack.c.l.b16 %v1646
      %v1822 = vunpack.c.l.b16 %v1647
      %v1823 = vunpack.c.l.b16 %v1648
      %v1824 = vunpack.c.l.b16 %v1649
      %v1825 = vunpack.c.l.b16 %v1650
      %v1826 = vunpack.c.l.b16 %v1651
      %v1827 = vunpack.c.l.b16 %v1652
      %v1828 = vpack.c.b16 %v1805, %v1804
      %v1829 = vpack.c.b16 %v1807, %v1806
      %v1830 = vpack.c.b16 %v1809, %v1808
      %v1831 = vpack.c.b16 %v1811, %v1810
      %v1832 = vpack.c.b16 %v1813, %v1812
      %v1833 = vpack.c.b16 %v1815, %v1814
      %v1834 = vpack.c.b16 %v1817, %v1816
      %v1835 = vpack.c.b16 %v1819, %v1818
      %v1836 = vpack.c.b16 %v1821, %v1820
      %v1837 = vpack.c.b16 %v1823, %v1822
      %v1838 = vpack.c.b16 %v1825, %v1824
      %v1839 = vpack.c.b16 %v1827, %v1826
      %v1853 = vsel %vm1347, %v1672, 0
      %v1856 = vsel %vm1347, %v1686, 0
      %v1859 = vsel %vm1347, %v1700, 0
      %v1862 = vsel %vm1347, %v1714, 0
      %v1865 = vsel %vm1347, %v1728, 0
      %v1868 = vsel %vm1347, %v1742, 0
      %v1871 = vsel %vm1347, %v1756, 0
      %v1874 = vsel %vm1347, %v1771, 0
      %1876 = vmatprep.subr.bf16.mxu0 0
      %1877 = vmatpush1.bf16.msra.mxu0 %v1828
      %1878 = vmatprep.subr.bf16.mxu0 0
      %1879 = vmatpush1.bf16.msra.mxu0 %v1829
      %1880 = vmatprep.subr.bf16.mxu0 0
      %1881 = vmatpush1.bf16.msra.mxu0 %v1830
      %1882 = vmatprep.subr.bf16.mxu0 0
      %1883 = vmatpush1.bf16.msra.mxu0 %v1831
      %1884 = vmatprep.subr.bf16.mxu0 0
      %1885 = vmatpush1.bf16.msra.mxu0 %v1832
      %1886 = vmatprep.subr.bf16.mxu0 0
      %1887 = vmatpush1.bf16.msra.mxu0 %v1833
      %1888 = vmatprep.subr.bf16.mxu0 0
      %1889 = vmatpush1.bf16.msra.mxu0 %v1834
      %1890 = vmatprep.subr.bf16.mxu0 0
      %1891 = vmatpush1.bf16.msra.mxu0 %v1835
      %1892 = vmatprep.subr.bf16.mxu0 0
      %1893 = vmatpush1.bf16.msra.mxu0 %v1836
      %1894 = vmatprep.subr.bf16.mxu0 0
      %1895 = vmatpush1.bf16.msra.mxu0 %v1837
      %1896 = vmatprep.subr.bf16.mxu0 0
      %1897 = vmatpush1.bf16.msra.mxu0 %v1838
      %1898 = vmatprep.subr.bf16.mxu0 0
      %1899 = vmatpush1.bf16.msra.mxu0 %v1839
      %1900 = vmatprep.subr.bf16.mxu0 0
      %1901 = vmatpush1.bf16.msra.mxu0 0
      %1902 = vmatprep.subr.bf16.mxu0 0
      %1903 = vmatpush1.bf16.msra.mxu0 0
      %1904 = vmatprep.subr.bf16.mxu0 0
      %1905 = vmatpush1.bf16.msra.mxu0 0
      %1906 = vmatprep.subr.bf16.mxu0 0
      %1907 = vmatpush1.bf16.msra.mxu0 0
      %1908 = vmatprep.mubr.bf16.mxu0 %v1853
      %1909 = vmatmul.mubr.bf16.gmra.mrb[0].mxu0 %v1662
      %v1910 = vpop.f32.mrb[0].mxu0
      %v1911 = vadd.f32 0.0, %v1910
      %v1912 = vpop.f32.mrb[0].mxu0
      %v1913 = vpop.f32.mrb[0].mxu0
      %v1914 = vadd.f32 0.0, %v1913
      %v1915 = vpop.f32.mrb[0].mxu0
      %1916 = vmatprep.mubr.bf16.mxu0 %v1856
      %1917 = vmatmul.mubr.bf16.gmra.mrb[0].mxu0 %v1679
      %v1918 = vpop.f32.mrb[0].mxu0
      %v1919 = vadd.f32 0.0, %v1918
      %v1920 = vpop.f32.mrb[0].mxu0
      %v1921 = vpop.f32.mrb[0].mxu0
      %v1922 = vadd.f32 0.0, %v1921
      %v1923 = vpop.f32.mrb[0].mxu0
      %1924 = vmatprep.mubr.bf16.mxu0 %v1859
      %1925 = vmatmul.mubr.bf16.gmra.mrb[0].mxu0 %v1693
      %v1926 = vpop.f32.mrb[0].mxu0
      %v1927 = vadd.f32 0.0, %v1926
      %v1928 = vpop.f32.mrb[0].mxu0
      %v1929 = vpop.f32.mrb[0].mxu0
      %v1930 = vadd.f32 0.0, %v1929
      %v1931 = vpop.f32.mrb[0].mxu0
      %1932 = vmatprep.mubr.bf16.mxu0 %v1862
      %1933 = vmatmul.mubr.bf16.gmra.mrb[0].mxu0 %v1707
      %v1934 = vpop.f32.mrb[0].mxu0
      %v1935 = vadd.f32 0.0, %v1934
      %v1936 = vpop.f32.mrb[0].mxu0
      %v1937 = vpop.f32.mrb[0].mxu0
      %v1938 = vadd.f32 0.0, %v1937
      %v1939 = vpop.f32.mrb[0].mxu0
      %1940 = vmatprep.mubr.bf16.mxu0 %v1865
      %1941 = vmatmul.mubr.bf16.gmra.mrb[0].mxu0 %v1721
      %v1942 = vpop.f32.mrb[0].mxu0
      %v1943 = vadd.f32 0.0, %v1942
      %v1944 = vpop.f32.mrb[0].mxu0
      %v1945 = vpop.f32.mrb[0].mxu0
      %v1946 = vadd.f32 0.0, %v1945
      %v1947 = vpop.f32.mrb[0].mxu0
      %1948 = vmatprep.mubr.bf16.mxu0 %v1868
      %1949 = vmatmul.mubr.bf16.gmra.mrb[0].mxu0 %v1735
      %v1950 = vpop.f32.mrb[0].mxu0
      %v1951 = vadd.f32 0.0, %v1950
      %v1952 = vpop.f32.mrb[0].mxu0
      %v1953 = vpop.f32.mrb[0].mxu0
      %v1954 = vadd.f32 0.0, %v1953
      %v1955 = vpop.f32.mrb[0].mxu0
      %1956 = vmatprep.mubr.bf16.mxu0 %v1871
      %1957 = vmatmul.mubr.bf16.gmra.mrb[0].mxu0 %v1749
      %v1958 = vpop.f32.mrb[0].mxu0
      %v1959 = vadd.f32 0.0, %v1958
      %v1960 = vpop.f32.mrb[0].mxu0
      %v1961 = vpop.f32.mrb[0].mxu0
      %v1962 = vadd.f32 0.0, %v1961
      %v1963 = vpop.f32.mrb[0].mxu0
      %1964 = vmatprep.mubr.bf16.mxu0 %v1874
      %1965 = vmatmul.mubr.bf16.gmra.mrb[0].mxu0 %v1763
      %v1966 = vpop.f32.mrb[0].mxu0
      %v1967 = vadd.f32 0.0, %v1966
      %v1968 = vpop.f32.mrb[0].mxu0
      %v1969 = vpop.f32.mrb[0].mxu0
      %v1970 = vadd.f32 0.0, %v1969
      %v1971 = vpop.f32.mrb[0].mxu0
      %1972 = vdwg.mxu0
      %v1973 = vadd.f32 %v1607, %v1911
      %v1974 = vadd.f32 %v1608, %v1914
      %v1975 = vadd.f32 %v1609, %v1919
      %v1976 = vadd.f32 %v1610, %v1922
      %v1977 = vadd.f32 %v1611, %v1927
      %v1978 = vadd.f32 %v1612, %v1930
      %v1979 = vadd.f32 %v1613, %v1935
      %v1980 = vadd.f32 %v1614, %v1938
      %v1981 = vadd.f32 %v1615, %v1943
      %v1982 = vadd.f32 %v1616, %v1946
      %v1983 = vadd.f32 %v1617, %v1951
      %v1984 = vadd.f32 %v1618, %v1954
      %v1985 = vadd.f32 %v1619, %v1959
      %v1986 = vadd.f32 %v1620, %v1962
      %v1987 = vadd.f32 %v1621, %v1967
      %v1988 = vadd.f32 %v1622, %v1970
      %s1989 = scalar_lea.vmem %s315, 192
      %v1990 = vld [vmem:[%s1989] sm:$0xf]
      %v1991 = vld [vmem:[%s1989 + $0x4] sm:$0xf]
      %v1992 = vld [vmem:[%s1989 + $0x8] sm:$0xf]
      %v1993 = vld [vmem:[%s1989 + $0xc] sm:$0xf]
      %v1994 = vld [vmem:[%s1989 + $0x10] sm:$0xf]
      %v1995 = vld [vmem:[%s1989 + $0x14] sm:$0xf]
      %v1996 = vld [vmem:[%s1989 + $0x18] sm:$0xf]
      %v1997 = vld [vmem:[%s1989 + $0x1c] sm:$0xf]
      %v1998 = vld [vmem:[%s1989 + $0x20] sm:$0xf]
      %v1999 = vld [vmem:[%s1989 + $0x24] sm:$0xf]
      %v2000 = vld [vmem:[%s1989 + $0x28] sm:$0xf]
      %v2001 = vld [vmem:[%s1989 + $0x2c] sm:$0xf]
      %v2002 = vld [vmem:[%s1989 + $0x30] sm:$0xf]
      %v2003 = vld [vmem:[%s1989 + $0x34] sm:$0xf]
      %v2004 = vld [vmem:[%s1989 + $0x38] sm:$0xf]
      %v2005 = vld [vmem:[%s1989 + $0x3c] sm:$0xf]
      %v2006 = vld [vmem:[%s1989 + $0x40] sm:$0xf]
      %v2007 = vld [vmem:[%s1989 + $0x44] sm:$0xf]
      %v2008 = vld [vmem:[%s1989 + $0x48] sm:$0xf]
      %v2009 = vld [vmem:[%s1989 + $0x4c] sm:$0xf]
      %v2010 = vld [vmem:[%s1989 + $0x50] sm:$0xf]
      %v2011 = vld [vmem:[%s1989 + $0x54] sm:$0xf]
      %v2012 = vld [vmem:[%s1989 + $0x58] sm:$0xf]
      %v2013 = vld [vmem:[%s1989 + $0x5c] sm:$0xf]
      %v2024 = vrot.slane %v1350, 1
      %v2025 = vrot.slane %v1354, 1
      %v2026 = vsel %vm980, %v2024, %v2025
      %v2027 = vrot.slane %v1261, 1
      %v2028 = vrot.slane %v1269, 1
      %v2029 = vsel %vm980, %v2027, %v2028
      %v2030 = vrot.slane %v1358, 1
      %v2031 = vsel %vm980, %v2025, %v2030
      %v2032 = vrot.slane %v1277, 1
      %v2033 = vsel %vm980, %v2028, %v2032
      %v2034 = vrot.slane %v1362, 1
      %v2035 = vsel %vm980, %v2030, %v2034
      %v2036 = vrot.slane %v1285, 1
      %v2037 = vsel %vm980, %v2032, %v2036
      %v2038 = vrot.slane %v1366, 1
      %v2039 = vsel %vm980, %v2034, %v2038
      %v2040 = vrot.slane %v1293, 1
      %v2041 = vsel %vm980, %v2036, %v2040
      %v2042 = vrot.slane %v1370, 1
      %v2043 = vsel %vm980, %v2038, %v2042
      %v2044 = vrot.slane %v1301, 1
      %v2045 = vsel %vm980, %v2040, %v2044
      %v2046 = vrot.slane %v1374, 1
      %v2047 = vsel %vm980, %v2042, %v2046
      %v2048 = vrot.slane %v1309, 1
      %v2049 = vsel %vm980, %v2044, %v2048
      %v2050 = vrot.slane %v1378, 1
      %v2051 = vsel %vm980, %v2046, %v2050
      %v2052 = vrot.slane %v1328, 1
      %v2053 = vsel %vm980, %v2048, %v2052
      %v2054 = vrot.slane %v1627, 1
      %v2055 = vsel %vm980, %v2050, %v2054
      %v2056 = vrot.slane %v1329, 1
      %v2057 = vsel %vm980, %v2052, %v2056
      %v2090 = vunpack.c.l.b16 %v1990
      %v2091 = vunpack.c.l.b16 %v1991
      %v2092 = vunpack.c.l.b16 %v1992
      %v2093 = vunpack.c.l.b16 %v1993
      %v2094 = vunpack.c.l.b16 %v1994
      %v2095 = vunpack.c.l.b16 %v1995
      %v2096 = vunpack.c.l.b16 %v1996
      %v2097 = vunpack.c.l.b16 %v1997
      %v2098 = vunpack.c.l.b16 %v1998
      %v2099 = vunpack.c.l.b16 %v1999
      %v2100 = vunpack.c.l.b16 %v2000
      %v2101 = vunpack.c.l.b16 %v2001
      %v2102 = vunpack.c.l.b16 %v2002
      %v2103 = vunpack.c.l.b16 %v2003
      %v2104 = vunpack.c.l.b16 %v2004
      %v2105 = vunpack.c.l.b16 %v2005
      %v2106 = vunpack.c.l.b16 %v2006
      %v2107 = vunpack.c.l.b16 %v2007
      %v2108 = vunpack.c.l.b16 %v2008
      %v2109 = vunpack.c.l.b16 %v2009
      %v2110 = vunpack.c.l.b16 %v2010
      %v2111 = vunpack.c.l.b16 %v2011
      %v2112 = vunpack.c.l.b16 %v2012
      %v2113 = vunpack.c.l.b16 %v2013
      %v2114 = vpack.c.b16 %v2091, %v2090
      %v2115 = vpack.c.b16 %v2093, %v2092
      %v2116 = vpack.c.b16 %v2095, %v2094
      %v2117 = vpack.c.b16 %v2097, %v2096
      %v2118 = vpack.c.b16 %v2099, %v2098
      %v2119 = vpack.c.b16 %v2101, %v2100
      %v2120 = vpack.c.b16 %v2103, %v2102
      %v2121 = vpack.c.b16 %v2105, %v2104
      %v2122 = vpack.c.b16 %v2107, %v2106
      %v2123 = vpack.c.b16 %v2109, %v2108
      %v2124 = vpack.c.b16 %v2111, %v2110
      %v2125 = vpack.c.b16 %v2113, %v2112
      %v2139 = vsel %vm1347, %v2029, 0
      %v2142 = vsel %vm1347, %v2033, 0
      %v2145 = vsel %vm1347, %v2037, 0
      %v2148 = vsel %vm1347, %v2041, 0
      %v2151 = vsel %vm1347, %v2045, 0
      %v2154 = vsel %vm1347, %v2049, 0
      %v2157 = vsel %vm1347, %v2053, 0
      %v2160 = vsel %vm1347, %v2057, 0
      %2162 = vmatprep.subr.bf16.mxu0 0
      %2163 = vmatpush1.bf16.msra.mxu0 %v2114
      %2164 = vmatprep.subr.bf16.mxu0 0
      %2165 = vmatpush1.bf16.msra.mxu0 %v2115
      %2166 = vmatprep.subr.bf16.mxu0 0
      %2167 = vmatpush1.bf16.msra.mxu0 %v2116
      %2168 = vmatprep.subr.bf16.mxu0 0
      %2169 = vmatpush1.bf16.msra.mxu0 %v2117
      %2170 = vmatprep.subr.bf16.mxu0 0
      %2171 = vmatpush1.bf16.msra.mxu0 %v2118
      %2172 = vmatprep.subr.bf16.mxu0 0
      %2173 = vmatpush1.bf16.msra.mxu0 %v2119
      %2174 = vmatprep.subr.bf16.mxu0 0
      %2175 = vmatpush1.bf16.msra.mxu0 %v2120
      %2176 = vmatprep.subr.bf16.mxu0 0
      %2177 = vmatpush1.bf16.msra.mxu0 %v2121
      %2178 = vmatprep.subr.bf16.mxu0 0
      %2179 = vmatpush1.bf16.msra.mxu0 %v2122
      %2180 = vmatprep.subr.bf16.mxu0 0
      %2181 = vmatpush1.bf16.msra.mxu0 %v2123
      %2182 = vmatprep.subr.bf16.mxu0 0
      %2183 = vmatpush1.bf16.msra.mxu0 %v2124
      %2184 = vmatprep.subr.bf16.mxu0 0
      %2185 = vmatpush1.bf16.msra.mxu0 %v2125
      %2186 = vmatprep.subr.bf16.mxu0 0
      %2187 = vmatpush1.bf16.msra.mxu0 0
      %2188 = vmatprep.subr.bf16.mxu0 0
      %2189 = vmatpush1.bf16.msra.mxu0 0
      %2190 = vmatprep.subr.bf16.mxu0 0
      %2191 = vmatpush1.bf16.msra.mxu0 0
      %2192 = vmatprep.subr.bf16.mxu0 0
      %2193 = vmatpush1.bf16.msra.mxu0 0
      %2194 = vmatprep.mubr.bf16.mxu0 %v2139
      %2195 = vmatmul.mubr.bf16.gmra.mrb[0].mxu0 %v2026
      %v2196 = vpop.f32.mrb[0].mxu0
      %v2197 = vadd.f32 0.0, %v2196
      %v2198 = vpop.f32.mrb[0].mxu0
      %v2199 = vpop.f32.mrb[0].mxu0
      %v2200 = vadd.f32 0.0, %v2199
      %v2201 = vpop.f32.mrb[0].mxu0
      %2202 = vmatprep.mubr.bf16.mxu0 %v2142
      %2203 = vmatmul.mubr.bf16.gmra.mrb[0].mxu0 %v2031
      %v2204 = vpop.f32.mrb[0].mxu0
      %v2205 = vadd.f32 0.0, %v2204
      %v2206 = vpop.f32.mrb[0].mxu0
      %v2207 = vpop.f32.mrb[0].mxu0
      %v2208 = vadd.f32 0.0, %v2207
      %v2209 = vpop.f32.mrb[0].mxu0
      %2210 = vmatprep.mubr.bf16.mxu0 %v2145
      %2211 = vmatmul.mubr.bf16.gmra.mrb[0].mxu0 %v2035
      %v2212 = vpop.f32.mrb[0].mxu0
      %v2213 = vadd.f32 0.0, %v2212
      %v2214 = vpop.f32.mrb[0].mxu0
      %v2215 = vpop.f32.mrb[0].mxu0
      %v2216 = vadd.f32 0.0, %v2215
      %v2217 = vpop.f32.mrb[0].mxu0
      %2218 = vmatprep.mubr.bf16.mxu0 %v2148
      %2219 = vmatmul.mubr.bf16.gmra.mrb[0].mxu0 %v2039
      %v2220 = vpop.f32.mrb[0].mxu0
      %v2221 = vadd.f32 0.0, %v2220
      %v2222 = vpop.f32.mrb[0].mxu0
      %v2223 = vpop.f32.mrb[0].mxu0
      %v2224 = vadd.f32 0.0, %v2223
      %v2225 = vpop.f32.mrb[0].mxu0
      %2226 = vmatprep.mubr.bf16.mxu0 %v2151
      %2227 = vmatmul.mubr.bf16.gmra.mrb[0].mxu0 %v2043
      %v2228 = vpop.f32.mrb[0].mxu0
      %v2229 = vadd.f32 0.0, %v2228
      %v2230 = vpop.f32.mrb[0].mxu0
      %v2231 = vpop.f32.mrb[0].mxu0
      %v2232 = vadd.f32 0.0, %v2231
      %v2233 = vpop.f32.mrb[0].mxu0
      %2234 = vmatprep.mubr.bf16.mxu0 %v2154
      %2235 = vmatmul.mubr.bf16.gmra.mrb[0].mxu0 %v2047
      %v2236 = vpop.f32.mrb[0].mxu0
      %v2237 = vadd.f32 0.0, %v2236
      %v2238 = vpop.f32.mrb[0].mxu0
      %v2239 = vpop.f32.mrb[0].mxu0
      %v2240 = vadd.f32 0.0, %v2239
      %v2241 = vpop.f32.mrb[0].mxu0
      %2242 = vmatprep.mubr.bf16.mxu0 %v2157
      %2243 = vmatmul.mubr.bf16.gmra.mrb[0].mxu0 %v2051
      %v2244 = vpop.f32.mrb[0].mxu0
      %v2245 = vadd.f32 0.0, %v2244
      %v2246 = vpop.f32.mrb[0].mxu0
      %v2247 = vpop.f32.mrb[0].mxu0
      %v2248 = vadd.f32 0.0, %v2247
      %v2249 = vpop.f32.mrb[0].mxu0
      %2250 = vmatprep.mubr.bf16.mxu0 %v2160
      %2251 = vmatmul.mubr.bf16.gmra.mrb[0].mxu0 %v2055
      %v2252 = vpop.f32.mrb[0].mxu0
      %v2253 = vadd.f32 0.0, %v2252
      %v2254 = vpop.f32.mrb[0].mxu0
      %v2255 = vpop.f32.mrb[0].mxu0
      %v2256 = vadd.f32 0.0, %v2255
      %v2257 = vpop.f32.mrb[0].mxu0
      %2258 = vdwg.mxu0
      %v2259 = vsel %vm1129, %v2197, 0.0
      %v2260 = vsel %vm1130, %v2200, 0.0
      %v2261 = vsel %vm1129, %v2205, 0.0
      %v2262 = vsel %vm1130, %v2208, 0.0
      %v2263 = vsel %vm1129, %v2213, 0.0
      %v2264 = vsel %vm1130, %v2216, 0.0
      %v2265 = vsel %vm1129, %v2221, 0.0
      %v2266 = vsel %vm1130, %v2224, 0.0
      %v2267 = vsel %vm1129, %v2229, 0.0
      %v2268 = vsel %vm1130, %v2232, 0.0
      %v2269 = vsel %vm1129, %v2237, 0.0
      %v2270 = vsel %vm1130, %v2240, 0.0
      %v2271 = vsel %vm1129, %v2245, 0.0
      %v2272 = vsel %vm1130, %v2248, 0.0
      %v2273 = vsel %vm1129, %v2253, 0.0
      %v2274 = vsel %vm1130, %v2256, 0.0
      %v2275 = vadd.f32 %v1973, %v2259
      %v2276 = vadd.f32 %v1974, %v2260
      %v2277 = vadd.f32 %v1975, %v2261
      %v2278 = vadd.f32 %v1976, %v2262
      %v2279 = vadd.f32 %v1977, %v2263
      %v2280 = vadd.f32 %v1978, %v2264
      %v2281 = vadd.f32 %v1979, %v2265
      %v2282 = vadd.f32 %v1980, %v2266
      %v2283 = vadd.f32 %v1981, %v2267
      %v2284 = vadd.f32 %v1982, %v2268
      %v2285 = vadd.f32 %v1983, %v2269
      %v2286 = vadd.f32 %v1984, %v2270
      %v2287 = vadd.f32 %v1985, %v2271
      %v2288 = vadd.f32 %v1986, %v2272
      %v2289 = vadd.f32 %v1987, %v2273
      %v2290 = vadd.f32 %v1988, %v2274
      %v2291 = vld [vmem:[%s318] sm:$0x1]
      %v2293 = vlaneseq
      %v2294 = vshrl.u32 %v2293, 7
      %v2295 = vsub.s32 0, %v2294
      %v2296 = vrot.slane %v2291, %v2295
      %v2298 = vadd.f32 %v2275, %v2296
      %v2299 = vadd.f32 %v2276, %v2296
      %v2300 = vadd.f32 %v2277, %v2296
      %v2301 = vadd.f32 %v2278, %v2296
      %v2302 = vadd.f32 %v2279, %v2296
      %v2303 = vadd.f32 %v2280, %v2296
      %v2304 = vadd.f32 %v2281, %v2296
      %v2305 = vadd.f32 %v2282, %v2296
      %v2306 = vadd.f32 %v2283, %v2296
      %v2307 = vadd.f32 %v2284, %v2296
      %v2308 = vadd.f32 %v2285, %v2296
      %v2309 = vadd.f32 %v2286, %v2296
      %v2310 = vadd.f32 %v2287, %v2296
      %v2311 = vadd.f32 %v2288, %v2296
      %v2312 = vadd.f32 %v2289, %v2296
      %v2313 = vadd.f32 %v2290, %v2296
      %v2314 = vmax.f32 %v2298, 0.0
      %v2315 = vmax.f32 %v2299, 0.0
      %v2316 = vmax.f32 %v2300, 0.0
      %v2317 = vmax.f32 %v2301, 0.0
      %v2318 = vmax.f32 %v2302, 0.0
      %v2319 = vmax.f32 %v2303, 0.0
      %v2320 = vmax.f32 %v2304, 0.0
      %v2321 = vmax.f32 %v2305, 0.0
      %v2322 = vmax.f32 %v2306, 0.0
      %v2323 = vmax.f32 %v2307, 0.0
      %v2324 = vmax.f32 %v2308, 0.0
      %v2325 = vmax.f32 %v2309, 0.0
      %v2326 = vmax.f32 %v2310, 0.0
      %v2327 = vmax.f32 %v2311, 0.0
      %v2328 = vmax.f32 %v2312, 0.0
      %v2329 = vmax.f32 %v2313, 0.0
      %v2330 = vpack.c.bf16 %v2315, %v2314
      %v2331 = vpack.c.bf16 %v2317, %v2316
      %v2332 = vpack.c.bf16 %v2319, %v2318
      %v2333 = vpack.c.bf16 %v2321, %v2320
      %v2334 = vpack.c.bf16 %v2323, %v2322
      %v2335 = vpack.c.bf16 %v2325, %v2324
      %v2336 = vpack.c.bf16 %v2327, %v2326
      %v2337 = vpack.c.bf16 %v2329, %v2328
      %v2346 = vunpack.c.l.b16 %v2330
      %v2347 = vunpack.c.h.b16 %v2330
      %v2348 = vunpack.c.l.b16 %v2331
      %v2349 = vunpack.c.h.b16 %v2331
      %v2350 = vunpack.c.l.b16 %v2332
      %v2351 = vunpack.c.h.b16 %v2332
      %v2352 = vunpack.c.l.b16 %v2333
      %v2353 = vunpack.c.h.b16 %v2333
      %v2354 = vunpack.c.l.b16 %v2334
      %v2355 = vunpack.c.h.b16 %v2334
      %v2356 = vunpack.c.l.b16 %v2335
      %v2357 = vunpack.c.h.b16 %v2335
      %v2358 = vunpack.c.l.b16 %v2336
      %v2359 = vunpack.c.h.b16 %v2336
      %v2360 = vunpack.c.l.b16 %v2337
      %v2361 = vunpack.c.h.b16 %v2337
      %v2362 = vpack.c.b16 %v2346, %v2346
      %v2363 = vpack.c.b16 %v2347, %v2347
      %v2364 = vpack.c.b16 %v2348, %v2348
      %v2365 = vpack.c.b16 %v2349, %v2349
      %v2366 = vpack.c.b16 %v2350, %v2350
      %v2367 = vpack.c.b16 %v2351, %v2351
      %v2368 = vpack.c.b16 %v2352, %v2352
      %v2369 = vpack.c.b16 %v2353, %v2353
      %v2370 = vpack.c.b16 %v2354, %v2354
      %v2371 = vpack.c.b16 %v2355, %v2355
      %v2372 = vpack.c.b16 %v2356, %v2356
      %v2373 = vpack.c.b16 %v2357, %v2357
      %v2374 = vpack.c.b16 %v2358, %v2358
      %v2375 = vpack.c.b16 %v2359, %v2359
      %v2376 = vpack.c.b16 %v2360, %v2360
      %v2377 = vpack.c.b16 %v2361, %v2361
      %2394 = vst [vmem:[%s331] sm:$0xf] %v2362
      %2395 = vst [vmem:[%s331 + $0x4] sm:$0xf] %v2363
      %2396 = vst [vmem:[%s331 + $0x8] sm:$0xf] %v2364
      %2397 = vst [vmem:[%s331 + $0xc] sm:$0xf] %v2365
      %2398 = vst [vmem:[%s331 + $0x10] sm:$0xf] %v2366
      %2399 = vst [vmem:[%s331 + $0x14] sm:$0xf] %v2367
      %2400 = vst [vmem:[%s331 + $0x18] sm:$0xf] %v2368
      %2401 = vst [vmem:[%s331 + $0x1c] sm:$0xf] %v2369
      %2402 = vst [vmem:[%s331 + $0x20] sm:$0xf] %v2370
      %2403 = vst [vmem:[%s331 + $0x24] sm:$0xf] %v2371
      %2404 = vst [vmem:[%s331 + $0x28] sm:$0xf] %v2372
      %2405 = vst [vmem:[%s331 + $0x2c] sm:$0xf] %v2373
      %2406 = vst [vmem:[%s331 + $0x30] sm:$0xf] %v2374
      %2407 = vst [vmem:[%s331 + $0x34] sm:$0xf] %v2375
      %2408 = vst [vmem:[%s331 + $0x38] sm:$0xf] %v2376
      %2409 = vst [vmem:[%s331 + $0x3c] sm:$0xf] %v2377
      %s2410 = smul.u32 8, %s23
      %p2411 = scmp.lt.s32.totalorder %s21, 1
      %s2412 = scalar_select %p2411, %s21, 1
      %p2413 = scmp.lt.s32.totalorder %s2410, 15
      %s2414 = scalar_select %p2413, %s2410, 15
      %p2415 = scmp.lt.s32.totalorder %s22, 0
      %s2416 = scalar_select %p2415, %s22, 0
      %s2417 = smul.addr %s2414, 2
      %s2418 = sadd.s32 %s2416, %s2417
      %s2419 = smul.addr %s2412, 32
      %s2420 = sadd.s32 %s2418, %s2419
      %s2421 = smul.addr %s2420, 4
      %s2422 = scalar_lea.vmem %s5, %s2421
      // Predicated region
      $region41: #{up_forward.4} parent=39 // pred_check
        %p2423 = pneg %p187
      $region42: #{up_forward.4} parent=39 // pred_check_branch
        %2425 = sbr.rel (%p2423) target = $region44
      $region43: #{up_forward.4} parent=39 // pred_region
        %s2426 = smul.u32 8, %s23
      $region44: #{up_forward.4} parent=39 // pred_fallthru
        _
    $region40: #{up_forward.4} parent=5 // pred_fallthru
      _
    %p2427 = scmp.le.s32.totalorder 2, %s11
    // Predicated region
    $region45: #{up_forward.4} parent=5 // pred_check
      %p2428 = pneg %p2427
    $region46: #{up_forward.4} parent=5 // pred_check_branch
      %2430 = sbr.rel (%p2428) target = $region48
    $region47: #{up_forward.4} parent=5 // pred_region
      %s2431 = ssub.s32 %s11, 2
      // Predicated region
      $region49: #{up_forward.4} parent=47 // pred_check
        %p2432 = pneg %p193
      $region50: #{up_forward.4} parent=47 // pred_check_branch
        %2434 = sbr.rel (%p2432) target = $region52
      $region51: #{up_forward.4} parent=47 // pred_region
        %s2435 = smul.u32 8, %s26
        %p2436 = scmp.lt.s32.totalorder %s24, 1
        %s2437 = scalar_select %p2436, %s24, 1
        %p2438 = scmp.lt.s32.totalorder %s2435, 15
        %s2439 = scalar_select %p2438, %s2435, 15
        %p2440 = scmp.lt.s32.totalorder %s25, 0
        %s2441 = scalar_select %p2440, %s25, 0
        %s2442 = smul.addr %s2439, 2
        %s2443 = sadd.s32 %s2441, %s2442
        %s2444 = smul.addr %s2437, 32
        %s2445 = sadd.s32 %s2443, %s2444
        %s2446 = smul.addr %s2445, 4
        %s2447 = scalar_lea.vmem %s5, %s2446
      $region52: #{up_forward.4} parent=47 // pred_fallthru
        _
    $region48: #{up_forward.4} parent=5 // pred_fallthru
      _
  $region6: #{up_forward.4} parent=0 // loop_footer
    %s15 = sadd.s32 1, %s11
  $region7: #{up_forward.4} parent=0 // loop_footer_branch
    %10 = sbr.rel target = $region3
  $region8: #{up_forward.4} parent=0 // loop_exit
    _

// kernel: up_forward.5
$region0: #{up_forward.5}
  #allocation0 [shape = 'u32[]', space=smem, size = 0x4, offset = 0x4, fixed_abs, tag = 'smem constant byte address 0x4 - core index']
  #allocation1 [shape = 'u32[144,128]{1,0:T(1,128)}', space=vmem, size = 0x12000, scoped, tag = 'internal scratch']
  %s0 = inlined_call_operand.vmem [shape: bf16[2,16,16,128], index: 0, kind: input, shape index: {}]
  %s1 = inlined_call_operand.vmem [shape: bf16[3,384,128], index: 1, kind: input, shape index: {}]
  %s2 = inlined_call_operand.vmem [shape: f32[1,128], index: 2, kind: input, shape index: {}]
  %s3 = inlined_call_operand.vmem [shape: f32[2,16,16,128], index: 3, kind: output, shape index: {}]
  %s4 = sld [smem:[#allocation0]]
  $region45: #{up_forward.5} parent=0
    _
  %s6 = ssub.s32 1, %s4
  %s7 = scalar_select 0, %s6, %s4
  loop: start=0, step=1, limit=6
  $region2: #{up_forward.5} parent=0 // loop_pre_header
    _
  $region3: #{up_forward.5} parent=0 // loop_header
    %s9 = sphi 0, %s13
    %p10 = scmp.ge.s32.totalorder %s9, 6
    %s16 = sphi 0, %s35
    %s17 = sphi 0, %s31
    %s18 = sphi 0, %s27
    %s19 = sphi 0, %s16
    %s20 = sphi 0, %s17
    %s21 = sphi 0, %s18
    %s22 = sphi 0, %s19
    %s23 = sphi 0, %s20
    %s24 = sphi 0, %s21
    %s38 = sphi 0, %s40
    %s41 = sphi 0, %s38
    %s42 = sphi 0, %s41
    %s58 = sphi 0, %s42
    %s64 = sphi 0, %s66
    %s67 = sphi 0, %s64
    %s68 = sphi 0, %s67
    %s84 = sphi 0, %s68
    %s90 = sphi 0, %s92
    %s93 = sphi 0, %s90
    %s94 = sphi 0, %s93
    %s110 = sphi 0, %s94
    %s120 = sphi 0, %s122
    %s123 = sphi 0, %s120
    %s124 = sphi 0, %s123
    %s140 = sphi 0, %s124
  $region4: #{up_forward.5} parent=0 // loop_header_branch
    %12 = sbr.rel (%p10) target = $region8
  $region5: #{up_forward.5} parent=0 // loop_body
    %s14 = ssub.s32 %s9, 1
    %s15 = ssub.s32 %s9, 2
    %s25 = sadd.s32 1, %s18
    %p26 = scmp.ge.s32.totalorder %s25, 2
    %s27 = scalar_select %p26, 0, %s25
    %s28 = sadd.s32 1, %s17
    %s29 = scalar_select %p26, %s28, %s17
    %p30 = scmp.ge.s32.totalorder %s29, 1
    %s31 = scalar_select %p30, 0, %s29
    %s32 = sadd.s32 1, %s16
    %s33 = scalar_select %p30, %s32, %s16
    %p34 = scmp.ge.s32.totalorder %s33, 2
    %s35 = scalar_select %p34, 0, %s33
    %s36 = ssub.s32 %s16, %s35
    %p37 = scmp.eq.s32.totalorder %s36, 0
    %s39 = sadd.s32 %s38, 1
    %s40 = scalar_select %p37, %s38, %s39
    %p43 = pneg %p37
    %p44 = scmp.eq.s32.totalorder %s9, 3
    %p45 = por %p43, %p44
    %p46 = scmp.ne.s32.totalorder %s38, %s41
    %p47 = scmp.eq.s32.totalorder %s9, 0
    %p48 = por %p46, %p47
    %p49 = scmp.ne.s32.totalorder %s38, %s41
    %p50 = scmp.eq.s32.totalorder %s14, 3
    %p51 = por %p49, %p50
    %p52 = scmp.ne.s32.totalorder %s41, %s42
    %p53 = scmp.eq.s32.totalorder %s14, 0
    %p54 = por %p52, %p53
    %p55 = scmp.ne.s32.totalorder %s41, %s42
    %p56 = scmp.eq.s32.totalorder %s15, 3
    %p57 = por %p55, %p56
    %p59 = scmp.ne.s32.totalorder %s42, %s58
    %p60 = scmp.eq.s32.totalorder %s15, 0
    %p61 = por %p59, %p60
    %s62 = ssub.s32 %s17, %s31
    %p63 = scmp.eq.s32.totalorder %s62, 0
    %s65 = sadd.s32 %s64, 1
    %s66 = scalar_select %p63, %s64, %s65
    %p69 = pneg %p63
    %p70 = scmp.eq.s32.totalorder %s9, 3
    %p71 = por %p69, %p70
    %p72 = scmp.ne.s32.totalorder %s64, %s67
    %p73 = scmp.eq.s32.totalorder %s9, 0
    %p74 = por %p72, %p73
    %p75 = scmp.ne.s32.totalorder %s64, %s67
    %p76 = scmp.eq.s32.totalorder %s14, 3
    %p77 = por %p75, %p76
    %p78 = scmp.ne.s32.totalorder %s67, %s68
    %p79 = scmp.eq.s32.totalorder %s14, 0
    %p80 = por %p78, %p79
    %p81 = scmp.ne.s32.totalorder %s67, %s68
    %p82 = scmp.eq.s32.totalorder %s15, 3
    %p83 = por %p81, %p82
    %p85 = scmp.ne.s32.totalorder %s68, %s84
    %p86 = scmp.eq.s32.totalorder %s15, 0
    %p87 = por %p85, %p86
    %s88 = ssub.s32 %s17, %s31
    %p89 = scmp.eq.s32.totalorder %s88, 0
    %s91 = sadd.s32 %s90, 1
    %s92 = scalar_select %p89, %s90, %s91
    %p95 = pneg %p89
    %p96 = scmp.eq.s32.totalorder %s9, 3
    %p97 = por %p95, %p96
    %p98 = scmp.ne.s32.totalorder %s90, %s93
    %p99 = scmp.eq.s32.totalorder %s9, 0
    %p100 = por %p98, %p99
    %p101 = scmp.ne.s32.totalorder %s90, %s93
    %p102 = scmp.eq.s32.totalorder %s14, 3
    %p103 = por %p101, %p102
    %p104 = scmp.ne.s32.totalorder %s93, %s94
    %p105 = scmp.eq.s32.totalorder %s14, 0
    %p106 = por %p104, %p105
    %p107 = scmp.ne.s32.totalorder %s93, %s94
    %p108 = scmp.eq.s32.totalorder %s15, 3
    %p109 = por %p107, %p108
    %p111 = scmp.ne.s32.totalorder %s94, %s110
    %p112 = scmp.eq.s32.totalorder %s15, 0
    %p113 = por %p111, %p112
    %s114 = ssub.s32 %s16, %s35
    %s115 = ssub.s32 %s18, %s27
    %s116 = sor.u32 %s114, %s115
    %s117 = ssub.s32 %s17, %s31
    %s118 = sor.u32 %s116, %s117
    %p119 = scmp.eq.s32.totalorder %s118, 0
    %s121 = sadd.s32 %s120, 1
    %s122 = scalar_select %p119, %s120, %s121
    %p125 = pneg %p119
    %p126 = scmp.eq.s32.totalorder %s9, 3
    %p127 = por %p125, %p126
    %p128 = scmp.ne.s32.totalorder %s120, %s123
    %p129 = scmp.eq.s32.totalorder %s9, 0
    %p130 = por %p128, %p129
    %p131 = scmp.ne.s32.totalorder %s120, %s123
    %p132 = scmp.eq.s32.totalorder %s14, 3
    %p133 = por %p131, %p132
    %p134 = scmp.ne.s32.totalorder %s123, %s124
    %p135 = scmp.eq.s32.totalorder %s14, 0
    %p136 = por %p134, %p135
    %p137 = scmp.ne.s32.totalorder %s123, %s124
    %p138 = scmp.eq.s32.totalorder %s15, 3
    %p139 = por %p137, %p138
    %p141 = scmp.ne.s32.totalorder %s124, %s140
    %p142 = scmp.eq.s32.totalorder %s15, 0
    %p143 = por %p141, %p142
    %p144 = scmp.le.s32.totalorder 1, %s9
    %p145 = scmp.lt.s32.totalorder %s9, 5
    %p146 = pnand %p144, %p145
    %p147 = pneg %p146
    // Predicated region
    $region9: #{up_forward.5} parent=5 // pred_check
      _
    $region10: #{up_forward.5} parent=5 // pred_check_branch
      %149 = sbr.rel (%p146) target = $region12
    $region11: #{up_forward.5} parent=5 // pred_region
      %s150 = ssub.s32 %s9, 1
      // Predicated region
      $region13: #{up_forward.5} parent=11 // pred_check
        %p151 = pneg %p80
      $region14: #{up_forward.5} parent=11 // pred_check_branch
        %153 = sbr.rel (%p151) target = $region16
      $region15: #{up_forward.5} parent=11 // pred_region
        %p154 = scmp.lt.s32.totalorder %s20, 0
        %s155 = scalar_select %p154, %s20, 0
        %s156 = smul.addr %s155, 4
        %s157 = scalar_lea.vmem %s1, %s156
      $region16: #{up_forward.5} parent=11 // pred_fallthru
        _
      // Predicated region
      $region17: #{up_forward.5} parent=11 // pred_check
        %p158 = pneg %p106
      $region18: #{up_forward.5} parent=11 // pred_check_branch
        %160 = sbr.rel (%p158) target = $region20
      $region19: #{up_forward.5} parent=11 // pred_region
        %p161 = scmp.lt.s32.totalorder %s20, 0
        %s162 = scalar_select %p161, %s20, 0
        %s163 = scalar_lea.vmem %s2, %s162
      $region20: #{up_forward.5} parent=11 // pred_fallthru
        _
    $region12: #{up_forward.5} parent=5 // pred_fallthru
      _
    %p164 = scmp.lt.s32.totalorder %s9, 4
    // Predicated region
    $region21: #{up_forward.5} parent=5 // pred_check
      %p165 = pneg %p164
    $region22: #{up_forward.5} parent=5 // pred_check_branch
      %167 = sbr.rel (%p165) target = $region24
    $region23: #{up_forward.5} parent=5 // pred_region
      // Predicated region
      $region25: #{up_forward.5} parent=23 // pred_check
        %p168 = pneg %p48
      $region26: #{up_forward.5} parent=23 // pred_check_branch
        %170 = sbr.rel (%p168) target = $region28
      $region27: #{up_forward.5} parent=23 // pred_region
        %p171 = scmp.lt.s32.totalorder %s16, 1
        %s172 = scalar_select %p171, %s16, 1
        %s173 = smul.addr %s172, 32
        %s174 = smul.addr %s173, 4
        %s175 = scalar_lea.vmem %s0, %s174
      $region28: #{up_forward.5} parent=23 // pred_fallthru
        _
    $region24: #{up_forward.5} parent=5 // pred_fallthru
      _
    %p176 = scmp.le.s32.totalorder 1, %s9
    %p177 = scmp.lt.s32.totalorder %s9, 5
    %p178 = pnand %p176, %p177
    %p179 = pneg %p178
    // Predicated region
    $region29: #{up_forward.5} parent=5 // pred_check
      _
    $region30: #{up_forward.5} parent=5 // pred_check_branch
      %181 = sbr.rel (%p178) target = $region32
    $region31: #{up_forward.5} parent=5 // pred_region
      %s182 = ssub.s32 %s9, 1
      %p183 = scmp.lt.s32.totalorder %s19, 1
      %s184 = scalar_select %p183, %s19, 1
      %s185 = smul.addr %s184, 32
      %s186 = smul.addr %s185, 4
      %s187 = scalar_lea.vmem %s0, %s186
      %p188 = pneg %p54
      %p189 = pneg %p51
      %p190 = scmp.lt.s32.totalorder %s20, 0
      %s191 = scalar_select %p190, %s20, 0
      %s192 = smul.addr %s191, 4
      %s193 = scalar_lea.vmem %s1, %s192
      %p194 = pneg %p80
      %p195 = pneg %p77
      %p196 = scmp.lt.s32.totalorder %s20, 0
      %s197 = scalar_select %p196, %s20, 0
      %s198 = scalar_lea.vmem %s2, %s197
      %p199 = pneg %p106
      %p200 = pneg %p103
      %p201 = pneg %p136
      %p202 = pneg %p133
      %s203 = smul.u32 8, %s21
      %p204 = scmp.lt.s32.totalorder %s19, 1
      %s205 = scalar_select %p204, %s19, 1
      %p206 = scmp.lt.s32.totalorder %s203, 15
      %s207 = scalar_select %p206, %s203, 15
      %p208 = scmp.lt.s32.totalorder %s20, 0
      %s209 = scalar_select %p208, %s20, 0
      %s210 = smul.addr %s207, 2
      %s211 = sadd.s32 %s209, %s210
      %s212 = smul.addr %s205, 32
      %s213 = sadd.s32 %s211, %s212
      %s214 = smul.addr %s213, 8
      %s215 = scalar_lea.vmem %s3, %s214
      %p216 = scmp.lt.s32.totalorder %s19, 1
      %s217 = scalar_select %p216, %s19, 1
      %s218 = smul.addr %s217, 32
      %s219 = smul.addr %s218, 4
      %s220 = scalar_lea.vmem %s0, %s219
      %p221 = scmp.lt.s32.totalorder %s20, 0
      %s222 = scalar_select %p221, %s20, 0
      %s223 = smul.addr %s222, 4
      %s224 = scalar_lea.vmem %s1, %s223
      %p225 = scmp.lt.s32.totalorder %s20, 0
      %s226 = scalar_select %p225, %s20, 0
      %s227 = scalar_lea.vmem %s2, %s226
      %s228 = smul.u32 8, %s21
      %p229 = scmp.lt.s32.totalorder %s19, 1
      %s230 = scalar_select %p229, %s19, 1
      %p231 = scmp.lt.s32.totalorder %s228, 15
      %s232 = scalar_select %p231, %s228, 15
      %p233 = scmp.lt.s32.totalorder %s20, 0
      %s234 = scalar_select %p233, %s20, 0
      %s235 = smul.addr %s232, 2
      %s236 = sadd.s32 %s234, %s235
      %s237 = smul.addr %s230, 32
      %s238 = sadd.s32 %s236, %s237
      %s239 = smul.addr %s238, 8
      %s240 = scalar_lea.vmem %s3, %s239
      %s241 = smul.u32 8, %s21
      %s243 = smul.u32 %s21, 8
      %v244 = vlaneseq
      %v245 = vshrl.u32 %v244, 7
      %v246 = vadd.s32 %v245, 8
      %vm247 = vcmp.ne.s32.totalorder %v245, 0
      %vm248 = vcmp.ne.s32.totalorder %v246, 0
      %vm249 = vcmp.ne.s32.totalorder %v245, 15
      %vm250 = vcmp.ne.s32.totalorder %v246, 15
      %s251 = smul.u32 %s243, 2
      %s252 = smul.addr %s251, 4
      %s253 = scalar_lea.vmem %s220, %s252
      %v254 = vld [vmem:[%s253] sm:$0xf]
      %v255 = vld [vmem:[%s253 + $0x4] sm:$0xf]
      %v256 = vld [vmem:[%s253 + $0x8] sm:$0xf]
      %v257 = vld [vmem:[%s253 + $0xc] sm:$0xf]
      %v258 = vld [vmem:[%s253 + $0x10] sm:$0xf]
      %v259 = vld [vmem:[%s253 + $0x14] sm:$0xf]
      %v260 = vld [vmem:[%s253 + $0x18] sm:$0xf]
      %v261 = vld [vmem:[%s253 + $0x1c] sm:$0xf]
      %v262 = vld [vmem:[%s253 + $0x20] sm:$0xf]
      %v263 = vld [vmem:[%s253 + $0x24] sm:$0xf]
      %v264 = vld [vmem:[%s253 + $0x28] sm:$0xf]
      %v265 = vld [vmem:[%s253 + $0x2c] sm:$0xf]
      %v266 = vld [vmem:[%s253 + $0x30] sm:$0xf]
      %v267 = vld [vmem:[%s253 + $0x34] sm:$0xf]
      %v268 = vld [vmem:[%s253 + $0x38] sm:$0xf]
      %v269 = vld [vmem:[%s253 + $0x3c] sm:$0xf]
      %s270 = ssub.s32 %s243, 1
      %p271 = scmp.gt.s32.totalorder %s270, 0
      %s272 = scalar_select %p271, %s270, 0
      %s273 = smul.u32 %s272, 2
      %s274 = smul.addr %s273, 4
      %s275 = scalar_lea.vmem %s220, %s274
      %v276 = vld [vmem:[%s275] sm:$0xf]
      %v277 = vld [vmem:[%s275 + $0x4] sm:$0xf]
      %s278 = sadd.s32 %s243, 8
      %p279 = scmp.lt.s32.totalorder %s278, 15
      %s280 = scalar_select %p279, %s278, 15
      %s281 = smul.u32 %s280, 2
      %s282 = smul.addr %s281, 4
      %s283 = scalar_lea.vmem %s220, %s282
      %v284 = vld [vmem:[%s283] sm:$0xf]
      %v285 = vld [vmem:[%s283 + $0x4] sm:$0xf]
      %p286 = scmp.gt.s32.totalorder %s243, 0
      %s287 = scalar_select %p286, 1, 0
      %v288 = vstv %s287
      %vm289 = vcmp.eq.s32.totalorder %v288, 1
      %v290 = vsel %vm289, %v276, 0
      %v291 = vsel %vm289, %v277, 0
      %p292 = scmp.lt.s32.totalorder %s278, 16
      %s293 = scalar_select %p292, 1, 0
      %v294 = vstv %s293
      %vm295 = vcmp.eq.s32.totalorder %v294, 1
      %v296 = vsel %vm295, %v284, 0
      %v297 = vsel %vm295, %v285, 0
      %v300 = vunpack.c.l.b16 %v290
      %v301 = vunpack.c.l.b16 %v291
      %v302 = vpack.c.b16 %v301, %v300
      %v304 = vshrl.u32 %v302, 16
      %v306 = vrot.slane %v304, 7
      %v307 = vshll.u32 %v302, 16
      %v309 = vor.u32 %v306, %v307
      %v328 = vunpack.c.l.b16 %v254
      %v329 = vunpack.c.l.b16 %v255
      %v330 = vunpack.c.l.b16 %v256
      %v331 = vunpack.c.l.b16 %v257
      %v332 = vunpack.c.l.b16 %v258
      %v333 = vunpack.c.l.b16 %v259
      %v334 = vunpack.c.l.b16 %v260
      %v335 = vunpack.c.l.b16 %v261
      %v336 = vunpack.c.l.b16 %v262
      %v337 = vunpack.c.l.b16 %v263
      %v338 = vunpack.c.l.b16 %v264
      %v339 = vunpack.c.l.b16 %v265
      %v340 = vunpack.c.l.b16 %v266
      %v341 = vunpack.c.l.b16 %v267
      %v342 = vunpack.c.l.b16 %v268
      %v343 = vunpack.c.l.b16 %v269
      %v344 = vpack.c.b16 %v329, %v328
      %v345 = vpack.c.b16 %v331, %v330
      %v346 = vpack.c.b16 %v333, %v332
      %v347 = vpack.c.b16 %v335, %v334
      %v348 = vpack.c.b16 %v337, %v336
      %v349 = vpack.c.b16 %v339, %v338
      %v350 = vpack.c.b16 %v341, %v340
      %v351 = vpack.c.b16 %v343, %v342
      %vm352 = vsmask.f32 256
      %v354 = vshrl.u32 %v344, 16
      %v356 = vrot.slane %v354, 7
      %v357 = vshll.u32 %v344, 16
      %v359 = vor.u32 %v356, %v357
      %v361 = vshrl.u32 %v345, 16
      %v363 = vrot.slane %v361, 7
      %v364 = vshll.u32 %v345, 16
      %v366 = vor.u32 %v363, %v364
      %v367 = vsel %vm352, %v356, %v366
      %v369 = vshrl.u32 %v346, 16
      %v371 = vrot.slane %v369, 7
      %v372 = vshll.u32 %v346, 16
      %v374 = vor.u32 %v371, %v372
      %v375 = vsel %vm352, %v363, %v374
      %v377 = vshrl.u32 %v347, 16
      %v379 = vrot.slane %v377, 7
      %v380 = vshll.u32 %v347, 16
      %v382 = vor.u32 %v379, %v380
      %v383 = vsel %vm352, %v371, %v382
      %v385 = vshrl.u32 %v348, 16
      %v387 = vrot.slane %v385, 7
      %v388 = vshll.u32 %v348, 16
      %v390 = vor.u32 %v387, %v388
      %v391 = vsel %vm352, %v379, %v390
      %v393 = vshrl.u32 %v349, 16
      %v395 = vrot.slane %v393, 7
      %v396 = vshll.u32 %v349, 16
      %v398 = vor.u32 %v395, %v396
      %v399 = vsel %vm352, %v387, %v398
      %v401 = vshrl.u32 %v350, 16
      %v403 = vrot.slane %v401, 7
      %v404 = vshll.u32 %v350, 16
      %v406 = vor.u32 %v403, %v404
      %v407 = vsel %vm352, %v395, %v406
      %v409 = vshrl.u32 %v351, 16
      %v411 = vrot.slane %v409, 7
      %v412 = vshll.u32 %v351, 16
      %v414 = vor.u32 %v411, %v412
      %v415 = vsel %vm352, %v403, %v414
      %v427 = vunpack.c.l.b16 %v296
      %v428 = vunpack.c.l.b16 %v297
      %v429 = vpack.c.b16 %v428, %v427
      %v431 = vshrl.u32 %v429, 16
      %v433 = vrot.slane %v431, 7
      %v434 = vshll.u32 %v429, 16
      %v436 = vor.u32 %v433, %v434
      %vm439 = vcmask 1040384
      %vm440 = vmand %vm439, %vm352
      %v441 = vsel %vm440, 0, %v309
      %v442 = vsel %vm440, %v306, %v359
      %v443 = vsel %vm440, %v411, %v436
      %v444 = vsel %vm440, %v433, 0
      %v445 = vld [vmem:[%s224] sm:$0xf]
      %v446 = vld [vmem:[%s224 + $0x4] sm:$0xf]
      %v447 = vld [vmem:[%s224 + $0x8] sm:$0xf]
      %v448 = vld [vmem:[%s224 + $0xc] sm:$0xf]
      %v449 = vld [vmem:[%s224 + $0x10] sm:$0xf]
      %v450 = vld [vmem:[%s224 + $0x14] sm:$0xf]
      %v451 = vld [vmem:[%s224 + $0x18] sm:$0xf]
      %v452 = vld [vmem:[%s224 + $0x1c] sm:$0xf]
      %v453 = vld [vmem:[%s224 + $0x20] sm:$0xf]
      %v454 = vld [vmem:[%s224 + $0x24] sm:$0xf]
      %v455 = vld [vmem:[%s224 + $0x28] sm:$0xf]
      %v456 = vld [vmem:[%s224 + $0x2c] sm:$0xf]
      %v457 = vld [vmem:[%s224 + $0x30] sm:$0xf]
      %v458 = vld [vmem:[%s224 + $0x34] sm:$0xf]
      %v459 = vld [vmem:[%s224 + $0x38] sm:$0xf]
      %v460 = vld [vmem:[%s224 + $0x3c] sm:$0xf]
      %v461 = vld [vmem:[%s224 + $0x40] sm:$0xf]
      %v462 = vld [vmem:[%s224 + $0x44] sm:$0xf]
      %v463 = vld [vmem:[%s224 + $0x48] sm:$0xf]
      %v464 = vld [vmem:[%s224 + $0x4c] sm:$0xf]
      %v465 = vld [vmem:[%s224 + $0x50] sm:$0xf]
      %v466 = vld [vmem:[%s224 + $0x54] sm:$0xf]
      %v467 = vld [vmem:[%s224 + $0x58] sm:$0xf]
      %v468 = vld [vmem:[%s224 + $0x5c] sm:$0xf]
      %v469 = vld [vmem:[%s224 + $0x60] sm:$0xf]
      %v470 = vld [vmem:[%s224 + $0x64] sm:$0xf]
      %v471 = vld [vmem:[%s224 + $0x68] sm:$0xf]
      %v472 = vld [vmem:[%s224 + $0x6c] sm:$0xf]
      %v473 = vld [vmem:[%s224 + $0x70] sm:$0xf]
      %v474 = vld [vmem:[%s224 + $0x74] sm:$0xf]
      %v475 = vld [vmem:[%s224 + $0x78] sm:$0xf]
      %v476 = vld [vmem:[%s224 + $0x7c] sm:$0xf]
      %v477 = vld [vmem:[%s224 + $0x80] sm:$0xf]
      %v478 = vld [vmem:[%s224 + $0x84] sm:$0xf]
      %v479 = vld [vmem:[%s224 + $0x88] sm:$0xf]
      %v480 = vld [vmem:[%s224 + $0x8c] sm:$0xf]
      %v481 = vld [vmem:[%s224 + $0x90] sm:$0xf]
      %v482 = vld [vmem:[%s224 + $0x94] sm:$0xf]
      %v483 = vld [vmem:[%s224 + $0x98] sm:$0xf]
      %v484 = vld [vmem:[%s224 + $0x9c] sm:$0xf]
      %v485 = vld [vmem:[%s224 + $0xa0] sm:$0xf]
      %v486 = vld [vmem:[%s224 + $0xa4] sm:$0xf]
      %v487 = vld [vmem:[%s224 + $0xa8] sm:$0xf]
      %v488 = vld [vmem:[%s224 + $0xac] sm:$0xf]
      %v489 = vld [vmem:[%s224 + $0xb0] sm:$0xf]
      %v490 = vld [vmem:[%s224 + $0xb4] sm:$0xf]
      %v491 = vld [vmem:[%s224 + $0xb8] sm:$0xf]
      %v492 = vld [vmem:[%s224 + $0xbc] sm:$0xf]
      %v541 = vunpack.c.l.b16 %v445
      %v542 = vunpack.c.l.b16 %v446
      %v543 = vunpack.c.l.b16 %v447
      %v544 = vunpack.c.l.b16 %v448
      %v545 = vunpack.c.l.b16 %v449
      %v546 = vunpack.c.l.b16 %v450
      %v547 = vunpack.c.l.b16 %v451
      %v548 = vunpack.c.l.b16 %v452
      %v549 = vunpack.c.l.b16 %v453
      %v550 = vunpack.c.l.b16 %v454
      %v551 = vunpack.c.l.b16 %v455
      %v552 = vunpack.c.l.b16 %v456
      %v553 = vunpack.c.l.b16 %v457
      %v554 = vunpack.c.l.b16 %v458
      %v555 = vunpack.c.l.b16 %v459
      %v556 = vunpack.c.l.b16 %v460
      %v557 = vunpack.c.l.b16 %v461
      %v558 = vunpack.c.l.b16 %v462
      %v559 = vunpack.c.l.b16 %v463
      %v560 = vunpack.c.l.b16 %v464
      %v561 = vunpack.c.l.b16 %v465
      %v562 = vunpack.c.l.b16 %v466
      %v563 = vunpack.c.l.b16 %v467
      %v564 = vunpack.c.l.b16 %v468
      %v565 = vunpack.c.l.b16 %v469
      %v566 = vunpack.c.l.b16 %v470
      %v567 = vunpack.c.l.b16 %v471
      %v568 = vunpack.c.l.b16 %v472
      %v569 = vunpack.c.l.b16 %v473
      %v570 = vunpack.c.l.b16 %v474
      %v571 = vunpack.c.l.b16 %v475
      %v572 = vunpack.c.l.b16 %v476
      %v573 = vunpack.c.l.b16 %v477
      %v574 = vunpack.c.l.b16 %v478
      %v575 = vunpack.c.l.b16 %v479
      %v576 = vunpack.c.l.b16 %v480
      %v577 = vunpack.c.l.b16 %v481
      %v578 = vunpack.c.l.b16 %v482
      %v579 = vunpack.c.l.b16 %v483
      %v580 = vunpack.c.l.b16 %v484
      %v581 = vunpack.c.l.b16 %v485
      %v582 = vunpack.c.l.b16 %v486
      %v583 = vunpack.c.l.b16 %v487
      %v584 = vunpack.c.l.b16 %v488
      %v585 = vunpack.c.l.b16 %v489
      %v586 = vunpack.c.l.b16 %v490
      %v587 = vunpack.c.l.b16 %v491
      %v588 = vunpack.c.l.b16 %v492
      %v589 = vpack.c.b16 %v542, %v541
      %v590 = vpack.c.b16 %v544, %v543
      %v591 = vpack.c.b16 %v546, %v545
      %v592 = vpack.c.b16 %v548, %v547
      %v593 = vpack.c.b16 %v550, %v549
      %v594 = vpack.c.b16 %v552, %v551
      %v595 = vpack.c.b16 %v554, %v553
      %v596 = vpack.c.b16 %v556, %v555
      %v597 = vpack.c.b16 %v558, %v557
      %v598 = vpack.c.b16 %v560, %v559
      %v599 = vpack.c.b16 %v562, %v561
      %v600 = vpack.c.b16 %v564, %v563
      %v601 = vpack.c.b16 %v566, %v565
      %v602 = vpack.c.b16 %v568, %v567
      %v603 = vpack.c.b16 %v570, %v569
      %v604 = vpack.c.b16 %v572, %v571
      %v605 = vpack.c.b16 %v574, %v573
      %v606 = vpack.c.b16 %v576, %v575
      %v607 = vpack.c.b16 %v578, %v577
      %v608 = vpack.c.b16 %v580, %v579
      %v609 = vpack.c.b16 %v582, %v581
      %v610 = vpack.c.b16 %v584, %v583
      %v611 = vpack.c.b16 %v586, %v585
      %v612 = vpack.c.b16 %v588, %v587
      %637 = vmatprep.subr.bf16.mxu0 0
      %638 = vmatpush1.bf16.msra.mxu0 %v589
      %639 = vmatprep.subr.bf16.mxu0 0
      %640 = vmatpush1.bf16.msra.mxu0 %v590
      %641 = vmatprep.subr.bf16.mxu0 0
      %642 = vmatpush1.bf16.msra.mxu0 %v591
      %643 = vmatprep.subr.bf16.mxu0 0
      %644 = vmatpush1.bf16.msra.mxu0 %v592
      %645 = vmatprep.subr.bf16.mxu0 0
      %646 = vmatpush1.bf16.msra.mxu0 %v593
      %647 = vmatprep.subr.bf16.mxu0 0
      %648 = vmatpush1.bf16.msra.mxu0 %v594
      %649 = vmatprep.subr.bf16.mxu0 0
      %650 = vmatpush1.bf16.msra.mxu0 %v595
      %651 = vmatprep.subr.bf16.mxu0 0
      %652 = vmatpush1.bf16.msra.mxu0 %v596
      %653 = vmatprep.subr.bf16.mxu0 0
      %654 = vmatpush1.bf16.msra.mxu0 %v597
      %655 = vmatprep.subr.bf16.mxu0 0
      %656 = vmatpush1.bf16.msra.mxu0 %v598
      %657 = vmatprep.subr.bf16.mxu0 0
      %658 = vmatpush1.bf16.msra.mxu0 %v599
      %659 = vmatprep.subr.bf16.mxu0 0
      %660 = vmatpush1.bf16.msra.mxu0 %v600
      %661 = vmatprep.subr.bf16.mxu0 0
      %662 = vmatpush1.bf16.msra.mxu0 %v601
      %663 = vmatprep.subr.bf16.mxu0 0
      %664 = vmatpush1.bf16.msra.mxu0 %v602
      %665 = vmatprep.subr.bf16.mxu0 0
      %666 = vmatpush1.bf16.msra.mxu0 %v603
      %667 = vmatprep.subr.bf16.mxu0 0
      %668 = vmatpush1.bf16.msra.mxu0 %v604
      %669 = vmatprep.mubr.bf16.mxu0 %v442
      %670 = vmatmul.mubr.bf16.gmra.mrb[0].mxu0 %v441
      %v671 = vpop.f32.mrb[0].mxu0
      %v672 = vadd.f32 0.0, %v671
      %v673 = vpop.f32.mrb[0].mxu0
      %v674 = vpop.f32.mrb[0].mxu0
      %v675 = vadd.f32 0.0, %v674
      %v676 = vpop.f32.mrb[0].mxu0
      %677 = vmatprep.mubr.bf16.mxu0 %v367
      %678 = vmatmul.mubr.bf16.gmra.mrb[0].mxu0 %v442
      %v679 = vpop.f32.mrb[0].mxu0
      %v680 = vadd.f32 0.0, %v679
      %v681 = vpop.f32.mrb[0].mxu0
      %v682 = vpop.f32.mrb[0].mxu0
      %v683 = vadd.f32 0.0, %v682
      %v684 = vpop.f32.mrb[0].mxu0
      %685 = vmatprep.mubr.bf16.mxu0 %v375
      %686 = vmatmul.mubr.bf16.gmra.mrb[0].mxu0 %v367
      %v687 = vpop.f32.mrb[0].mxu0
      %v688 = vadd.f32 0.0, %v687
      %v689 = vpop.f32.mrb[0].mxu0
      %v690 = vpop.f32.mrb[0].mxu0
      %v691 = vadd.f32 0.0, %v690
      %v692 = vpop.f32.mrb[0].mxu0
      %693 = vmatprep.mubr.bf16.mxu0 %v383
      %694 = vmatmul.mubr.bf16.gmra.mrb[0].mxu0 %v375
      %v695 = vpop.f32.mrb[0].mxu0
      %v696 = vadd.f32 0.0, %v695
      %v697 = vpop.f32.mrb[0].mxu0
      %v698 = vpop.f32.mrb[0].mxu0
      %v699 = vadd.f32 0.0, %v698
      %v700 = vpop.f32.mrb[0].mxu0
      %701 = vmatprep.mubr.bf16.mxu0 %v391
      %702 = vmatmul.mubr.bf16.gmra.mrb[0].mxu0 %v383
      %v703 = vpop.f32.mrb[0].mxu0
      %v704 = vadd.f32 0.0, %v703
      %v705 = vpop.f32.mrb[0].mxu0
      %v706 = vpop.f32.mrb[0].mxu0
      %v707 = vadd.f32 0.0, %v706
      %v708 = vpop.f32.mrb[0].mxu0
      %709 = vmatprep.mubr.bf16.mxu0 %v399
      %710 = vmatmul.mubr.bf16.gmra.mrb[0].mxu0 %v391
      %v711 = vpop.f32.mrb[0].mxu0
      %v712 = vadd.f32 0.0, %v711
      %v713 = vpop.f32.mrb[0].mxu0
      %v714 = vpop.f32.mrb[0].mxu0
      %v715 = vadd.f32 0.0, %v714
      %v716 = vpop.f32.mrb[0].mxu0
      %717 = vmatprep.mubr.bf16.mxu0 %v407
      %718 = vmatmul.mubr.bf16.gmra.mrb[0].mxu0 %v399
      %v719 = vpop.f32.mrb[0].mxu0
      %v720 = vadd.f32 0.0, %v719
      %v721 = vpop.f32.mrb[0].mxu0
      %v722 = vpop.f32.mrb[0].mxu0
      %v723 = vadd.f32 0.0, %v722
      %v724 = vpop.f32.mrb[0].mxu0
      %725 = vmatprep.mubr.bf16.mxu0 %v415
      %726 = vmatmul.mubr.bf16.gmra.mrb[0].mxu0 %v407
      %v727 = vpop.f32.mrb[0].mxu0
      %v728 = vadd.f32 0.0, %v727
      %v729 = vpop.f32.mrb[0].mxu0
      %v730 = vpop.f32.mrb[0].mxu0
      %v731 = vadd.f32 0.0, %v730
      %v732 = vpop.f32.mrb[0].mxu0
      %733 = vdwg.mxu0
      %734 = vmatprep.subr.bf16.mxu0 0
      %735 = vmatpush1.bf16.msra.mxu0 %v605
      %736 = vmatprep.subr.bf16.mxu0 0
      %737 = vmatpush1.bf16.msra.mxu0 %v606
      %738 = vmatprep.subr.bf16.mxu0 0
      %739 = vmatpush1.bf16.msra.mxu0 %v607
      %740 = vmatprep.subr.bf16.mxu0 0
      %741 = vmatpush1.bf16.msra.mxu0 %v608
      %742 = vmatprep.subr.bf16.mxu0 0
      %743 = vmatpush1.bf16.msra.mxu0 %v609
      %744 = vmatprep.subr.bf16.mxu0 0
      %745 = vmatpush1.bf16.msra.mxu0 %v610
      %746 = vmatprep.subr.bf16.mxu0 0
      %747 = vmatpush1.bf16.msra.mxu0 %v611
      %748 = vmatprep.subr.bf16.mxu0 0
      %749 = vmatpush1.bf16.msra.mxu0 %v612
      %750 = vmatprep.subr.bf16.mxu0 0
      %751 = vmatpush1.bf16.msra.mxu0 0
      %752 = vmatprep.subr.bf16.mxu0 0
      %753 = vmatpush1.bf16.msra.mxu0 0
      %754 = vmatprep.subr.bf16.mxu0 0
      %755 = vmatpush1.bf16.msra.mxu0 0
      %756 = vmatprep.subr.bf16.mxu0 0
      %757 = vmatpush1.bf16.msra.mxu0 0
      %758 = vmatprep.subr.bf16.mxu0 0
      %759 = vmatpush1.bf16.msra.mxu0 0
      %760 = vmatprep.subr.bf16.mxu0 0
      %761 = vmatpush1.bf16.msra.mxu0 0
      %762 = vmatprep.subr.bf16.mxu0 0
      %763 = vmatpush1.bf16.msra.mxu0 0
      %764 = vmatprep.subr.bf16.mxu0 0
      %765 = vmatpush1.bf16.msra.mxu0 0
      %766 = vmatprep.mubr.bf16.mxu0 0
      %767 = vmatmul.mubr.bf16.gmra.mrb[0].mxu0 %v367
      %v768 = vpop.f32.mrb[0].mxu0
      %v769 = vadd.f32 %v672, %v768
      %v770 = vpop.f32.mrb[0].mxu0
      %v771 = vpop.f32.mrb[0].mxu0
      %v772 = vadd.f32 %v675, %v771
      %v773 = vpop.f32.mrb[0].mxu0
      %774 = vmatprep.mubr.bf16.mxu0 0
      %775 = vmatmul.mubr.bf16.gmra.mrb[0].mxu0 %v375
      %v776 = vpop.f32.mrb[0].mxu0
      %v777 = vadd.f32 %v680, %v776
      %v778 = vpop.f32.mrb[0].mxu0
      %v779 = vpop.f32.mrb[0].mxu0
      %v780 = vadd.f32 %v683, %v779
      %v781 = vpop.f32.mrb[0].mxu0
      %782 = vmatprep.mubr.bf16.mxu0 0
      %783 = vmatmul.mubr.bf16.gmra.mrb[0].mxu0 %v383
      %v784 = vpop.f32.mrb[0].mxu0
      %v785 = vadd.f32 %v688, %v784
      %v786 = vpop.f32.mrb[0].mxu0
      %v787 = vpop.f32.mrb[0].mxu0
      %v788 = vadd.f32 %v691, %v787
      %v789 = vpop.f32.mrb[0].mxu0
      %790 = vmatprep.mubr.bf16.mxu0 0
      %791 = vmatmul.mubr.bf16.gmra.mrb[0].mxu0 %v391
      %v792 = vpop.f32.mrb[0].mxu0
      %v793 = vadd.f32 %v696, %v792
      %v794 = vpop.f32.mrb[0].mxu0
      %v795 = vpop.f32.mrb[0].mxu0
      %v796 = vadd.f32 %v699, %v795
      %v797 = vpop.f32.mrb[0].mxu0
      %798 = vmatprep.mubr.bf16.mxu0 0
      %799 = vmatmul.mubr.bf16.gmra.mrb[0].mxu0 %v399
      %v800 = vpop.f32.mrb[0].mxu0
      %v801 = vadd.f32 %v704, %v800
      %v802 = vpop.f32.mrb[0].mxu0
      %v803 = vpop.f32.mrb[0].mxu0
      %v804 = vadd.f32 %v707, %v803
      %v805 = vpop.f32.mrb[0].mxu0
      %806 = vmatprep.mubr.bf16.mxu0 0
      %807 = vmatmul.mubr.bf16.gmra.mrb[0].mxu0 %v407
      %v808 = vpop.f32.mrb[0].mxu0
      %v809 = vadd.f32 %v712, %v808
      %v810 = vpop.f32.mrb[0].mxu0
      %v811 = vpop.f32.mrb[0].mxu0
      %v812 = vadd.f32 %v715, %v811
      %v813 = vpop.f32.mrb[0].mxu0
      %814 = vmatprep.mubr.bf16.mxu0 0
      %815 = vmatmul.mubr.bf16.gmra.mrb[0].mxu0 %v415
      %v816 = vpop.f32.mrb[0].mxu0
      %v817 = vadd.f32 %v720, %v816
      %v818 = vpop.f32.mrb[0].mxu0
      %v819 = vpop.f32.mrb[0].mxu0
      %v820 = vadd.f32 %v723, %v819
      %v821 = vpop.f32.mrb[0].mxu0
      %822 = vmatprep.mubr.bf16.mxu0 0
      %823 = vmatmul.mubr.bf16.gmra.mrb[0].mxu0 %v443
      %v824 = vpop.f32.mrb[0].mxu0
      %v825 = vadd.f32 %v728, %v824
      %v826 = vpop.f32.mrb[0].mxu0
      %v827 = vpop.f32.mrb[0].mxu0
      %v828 = vadd.f32 %v731, %v827
      %v829 = vpop.f32.mrb[0].mxu0
      %830 = vdwg.mxu0
      %v831 = vsel %vm247, 1, 0
      %v832 = vsel %vm248, 1, 0
      %vm833 = vcmp.eq.s32.totalorder %v831, 1
      %vm834 = vcmp.eq.s32.totalorder %v832, 1
      %v835 = vsel %vm833, %v769, 0.0
      %v836 = vsel %vm834, %v772, 0.0
      %v837 = vsel %vm833, %v777, 0.0
      %v838 = vsel %vm834, %v780, 0.0
      %v839 = vsel %vm833, %v785, 0.0
      %v840 = vsel %vm834, %v788, 0.0
      %v841 = vsel %vm833, %v793, 0.0
      %v842 = vsel %vm834, %v796, 0.0
      %v843 = vsel %vm833, %v801, 0.0
      %v844 = vsel %vm834, %v804, 0.0
      %v845 = vsel %vm833, %v809, 0.0
      %v846 = vsel %vm834, %v812, 0.0
      %v847 = vsel %vm833, %v817, 0.0
      %v848 = vsel %vm834, %v820, 0.0
      %v849 = vsel %vm833, %v825, 0.0
      %v850 = vsel %vm834, %v828, 0.0
      %s851 = scalar_lea.vmem %s224, 192
      %v852 = vld [vmem:[%s851] sm:$0xf]
      %v853 = vld [vmem:[%s851 + $0x4] sm:$0xf]
      %v854 = vld [vmem:[%s851 + $0x8] sm:$0xf]
      %v855 = vld [vmem:[%s851 + $0xc] sm:$0xf]
      %v856 = vld [vmem:[%s851 + $0x10] sm:$0xf]
      %v857 = vld [vmem:[%s851 + $0x14] sm:$0xf]
      %v858 = vld [vmem:[%s851 + $0x18] sm:$0xf]
      %v859 = vld [vmem:[%s851 + $0x1c] sm:$0xf]
      %v860 = vld [vmem:[%s851 + $0x20] sm:$0xf]
      %v861 = vld [vmem:[%s851 + $0x24] sm:$0xf]
      %v862 = vld [vmem:[%s851 + $0x28] sm:$0xf]
      %v863 = vld [vmem:[%s851 + $0x2c] sm:$0xf]
      %v864 = vld [vmem:[%s851 + $0x30] sm:$0xf]
      %v865 = vld [vmem:[%s851 + $0x34] sm:$0xf]
      %v866 = vld [vmem:[%s851 + $0x38] sm:$0xf]
      %v867 = vld [vmem:[%s851 + $0x3c] sm:$0xf]
      %v868 = vld [vmem:[%s851 + $0x40] sm:$0xf]
      %v869 = vld [vmem:[%s851 + $0x44] sm:$0xf]
      %v870 = vld [vmem:[%s851 + $0x48] sm:$0xf]
      %v871 = vld [vmem:[%s851 + $0x4c] sm:$0xf]
      %v872 = vld [vmem:[%s851 + $0x50] sm:$0xf]
      %v873 = vld [vmem:[%s851 + $0x54] sm:$0xf]
      %v874 = vld [vmem:[%s851 + $0x58] sm:$0xf]
      %v875 = vld [vmem:[%s851 + $0x5c] sm:$0xf]
      %v876 = vld [vmem:[%s851 + $0x60] sm:$0xf]
      %v877 = vld [vmem:[%s851 + $0x64] sm:$0xf]
      %v878 = vld [vmem:[%s851 + $0x68] sm:$0xf]
      %v879 = vld [vmem:[%s851 + $0x6c] sm:$0xf]
      %v880 = vld [vmem:[%s851 + $0x70] sm:$0xf]
      %v881 = vld [vmem:[%s851 + $0x74] sm:$0xf]
      %v882 = vld [vmem:[%s851 + $0x78] sm:$0xf]
      %v883 = vld [vmem:[%s851 + $0x7c] sm:$0xf]
      %v884 = vld [vmem:[%s851 + $0x80] sm:$0xf]
      %v885 = vld [vmem:[%s851 + $0x84] sm:$0xf]
      %v886 = vld [vmem:[%s851 + $0x88] sm:$0xf]
      %v887 = vld [vmem:[%s851 + $0x8c] sm:$0xf]
      %v888 = vld [vmem:[%s851 + $0x90] sm:$0xf]
      %v889 = vld [vmem:[%s851 + $0x94] sm:$0xf]
      %v890 = vld [vmem:[%s851 + $0x98] sm:$0xf]
      %v891 = vld [vmem:[%s851 + $0x9c] sm:$0xf]
      %v892 = vld [vmem:[%s851 + $0xa0] sm:$0xf]
      %v893 = vld [vmem:[%s851 + $0xa4] sm:$0xf]
      %v894 = vld [vmem:[%s851 + $0xa8] sm:$0xf]
      %v895 = vld [vmem:[%s851 + $0xac] sm:$0xf]
      %v896 = vld [vmem:[%s851 + $0xb0] sm:$0xf]
      %v897 = vld [vmem:[%s851 + $0xb4] sm:$0xf]
      %v898 = vld [vmem:[%s851 + $0xb8] sm:$0xf]
      %v899 = vld [vmem:[%s851 + $0xbc] sm:$0xf]
      %vm900 = vsmask.f32 7424
      %v902 = vshrl.u32 %v441, 16
      %v904 = vshll.u32 %v441, 16
      %v906 = vrot.slane %v904, 1
      %v907 = vor.u32 %v902, %v906
      %v909 = vshll.u32 %v442, 16
      %v911 = vrot.slane %v909, 1
      %v912 = vsel %vm900, %v907, %v911
      %v913 = vshrl.u32 %v442, 16
      %v915 = vor.u32 %v913, %v911
      %v917 = vshll.u32 %v367, 16
      %v919 = vrot.slane %v917, 1
      %v920 = vsel %vm900, %v915, %v919
      %v921 = vshrl.u32 %v367, 16
      %v923 = vor.u32 %v921, %v919
      %v925 = vshll.u32 %v375, 16
      %v927 = vrot.slane %v925, 1
      %v928 = vsel %vm900, %v923, %v927
      %v929 = vshrl.u32 %v375, 16
      %v931 = vor.u32 %v929, %v927
      %v933 = vshll.u32 %v383, 16
      %v935 = vrot.slane %v933, 1
      %v936 = vsel %vm900, %v931, %v935
      %v937 = vshrl.u32 %v383, 16
      %v939 = vor.u32 %v937, %v935
      %v941 = vshll.u32 %v391, 16
      %v943 = vrot.slane %v941, 1
      %v944 = vsel %vm900, %v939, %v943
      %v945 = vshrl.u32 %v391, 16
      %v947 = vor.u32 %v945, %v943
      %v949 = vshll.u32 %v399, 16
      %v951 = vrot.slane %v949, 1
      %v952 = vsel %vm900, %v947, %v951
      %v953 = vshrl.u32 %v399, 16
      %v955 = vor.u32 %v953, %v951
      %v957 = vshll.u32 %v407, 16
      %v959 = vrot.slane %v957, 1
      %v960 = vsel %vm900, %v955, %v959
      %v961 = vshrl.u32 %v407, 16
      %v963 = vor.u32 %v961, %v959
      %v965 = vshll.u32 %v415, 16
      %v967 = vrot.slane %v965, 1
      %v968 = vsel %vm900, %v963, %v967
      %v969 = vshrl.u32 %v415, 16
      %v971 = vor.u32 %v969, %v967
      %v973 = vshll.u32 %v443, 16
      %v975 = vrot.slane %v973, 1
      %v976 = vsel %vm900, %v971, %v975
      %v977 = vshrl.u32 %v443, 16
      %v979 = vor.u32 %v977, %v975
      %v981 = vshll.u32 %v444, 16
      %v983 = vrot.slane %v981, 1
      %v984 = vsel %vm900, %v979, %v983
      %v1043 = vunpack.c.l.b16 %v852
      %v1044 = vunpack.c.l.b16 %v853
      %v1045 = vunpack.c.l.b16 %v854
      %v1046 = vunpack.c.l.b16 %v855
      %v1047 = vunpack.c.l.b16 %v856
      %v1048 = vunpack.c.l.b16 %v857
      %v1049 = vunpack.c.l.b16 %v858
      %v1050 = vunpack.c.l.b16 %v859
      %v1051 = vunpack.c.l.b16 %v860
      %v1052 = vunpack.c.l.b16 %v861
      %v1053 = vunpack.c.l.b16 %v862
      %v1054 = vunpack.c.l.b16 %v863
      %v1055 = vunpack.c.l.b16 %v864
      %v1056 = vunpack.c.l.b16 %v865
      %v1057 = vunpack.c.l.b16 %v866
      %v1058 = vunpack.c.l.b16 %v867
      %v1059 = vunpack.c.l.b16 %v868
      %v1060 = vunpack.c.l.b16 %v869
      %v1061 = vunpack.c.l.b16 %v870
      %v1062 = vunpack.c.l.b16 %v871
      %v1063 = vunpack.c.l.b16 %v872
      %v1064 = vunpack.c.l.b16 %v873
      %v1065 = vunpack.c.l.b16 %v874
      %v1066 = vunpack.c.l.b16 %v875
      %v1067 = vunpack.c.l.b16 %v876
      %v1068 = vunpack.c.l.b16 %v877
      %v1069 = vunpack.c.l.b16 %v878
      %v1070 = vunpack.c.l.b16 %v879
      %v1071 = vunpack.c.l.b16 %v880
      %v1072 = vunpack.c.l.b16 %v881
      %v1073 = vunpack.c.l.b16 %v882
      %v1074 = vunpack.c.l.b16 %v883
      %v1075 = vunpack.c.l.b16 %v884
      %v1076 = vunpack.c.l.b16 %v885
      %v1077 = vunpack.c.l.b16 %v886
      %v1078 = vunpack.c.l.b16 %v887
      %v1079 = vunpack.c.l.b16 %v888
      %v1080 = vunpack.c.l.b16 %v889
      %v1081 = vunpack.c.l.b16 %v890
      %v1082 = vunpack.c.l.b16 %v891
      %v1083 = vunpack.c.l.b16 %v892
      %v1084 = vunpack.c.l.b16 %v893
      %v1085 = vunpack.c.l.b16 %v894
      %v1086 = vunpack.c.l.b16 %v895
      %v1087 = vunpack.c.l.b16 %v896
      %v1088 = vunpack.c.l.b16 %v897
      %v1089 = vunpack.c.l.b16 %v898
      %v1090 = vunpack.c.l.b16 %v899
      %v1091 = vpack.c.b16 %v1044, %v1043
      %v1092 = vpack.c.b16 %v1046, %v1045
      %v1093 = vpack.c.b16 %v1048, %v1047
      %v1094 = vpack.c.b16 %v1050, %v1049
      %v1095 = vpack.c.b16 %v1052, %v1051
      %v1096 = vpack.c.b16 %v1054, %v1053
      %v1097 = vpack.c.b16 %v1056, %v1055
      %v1098 = vpack.c.b16 %v1058, %v1057
      %v1099 = vpack.c.b16 %v1060, %v1059
      %v1100 = vpack.c.b16 %v1062, %v1061
      %v1101 = vpack.c.b16 %v1064, %v1063
      %v1102 = vpack.c.b16 %v1066, %v1065
      %v1103 = vpack.c.b16 %v1068, %v1067
      %v1104 = vpack.c.b16 %v1070, %v1069
      %v1105 = vpack.c.b16 %v1072, %v1071
      %v1106 = vpack.c.b16 %v1074, %v1073
      %v1107 = vpack.c.b16 %v1076, %v1075
      %v1108 = vpack.c.b16 %v1078, %v1077
      %v1109 = vpack.c.b16 %v1080, %v1079
      %v1110 = vpack.c.b16 %v1082, %v1081
      %v1111 = vpack.c.b16 %v1084, %v1083
      %v1112 = vpack.c.b16 %v1086, %v1085
      %v1113 = vpack.c.b16 %v1088, %v1087
      %v1114 = vpack.c.b16 %v1090, %v1089
      %1139 = vmatprep.subr.bf16.mxu0 0
      %1140 = vmatpush1.bf16.msra.mxu0 %v1091
      %1141 = vmatprep.subr.bf16.mxu0 0
      %1142 = vmatpush1.bf16.msra.mxu0 %v1092
      %1143 = vmatprep.subr.bf16.mxu0 0
      %1144 = vmatpush1.bf16.msra.mxu0 %v1093
      %1145 = vmatprep.subr.bf16.mxu0 0
      %1146 = vmatpush1.bf16.msra.mxu0 %v1094
      %1147 = vmatprep.subr.bf16.mxu0 0
      %1148 = vmatpush1.bf16.msra.mxu0 %v1095
      %1149 = vmatprep.subr.bf16.mxu0 0
      %1150 = vmatpush1.bf16.msra.mxu0 %v1096
      %1151 = vmatprep.subr.bf16.mxu0 0
      %1152 = vmatpush1.bf16.msra.mxu0 %v1097
      %1153 = vmatprep.subr.bf16.mxu0 0
      %1154 = vmatpush1.bf16.msra.mxu0 %v1098
      %1155 = vmatprep.subr.bf16.mxu0 0
      %1156 = vmatpush1.bf16.msra.mxu0 %v1099
      %1157 = vmatprep.subr.bf16.mxu0 0
      %1158 = vmatpush1.bf16.msra.mxu0 %v1100
      %1159 = vmatprep.subr.bf16.mxu0 0
      %1160 = vmatpush1.bf16.msra.mxu0 %v1101
      %1161 = vmatprep.subr.bf16.mxu0 0
      %1162 = vmatpush1.bf16.msra.mxu0 %v1102
      %1163 = vmatprep.subr.bf16.mxu0 0
      %1164 = vmatpush1.bf16.msra.mxu0 %v1103
      %1165 = vmatprep.subr.bf16.mxu0 0
      %1166 = vmatpush1.bf16.msra.mxu0 %v1104
      %1167 = vmatprep.subr.bf16.mxu0 0
      %1168 = vmatpush1.bf16.msra.mxu0 %v1105
      %1169 = vmatprep.subr.bf16.mxu0 0
      %1170 = vmatpush1.bf16.msra.mxu0 %v1106
      %1171 = vmatprep.mubr.bf16.mxu0 %v920
      %1172 = vmatmul.mubr.bf16.gmra.mrb[0].mxu0 %v912
      %v1173 = vpop.f32.mrb[0].mxu0
      %v1174 = vadd.f32 0.0, %v1173
      %v1175 = vpop.f32.mrb[0].mxu0
      %v1176 = vpop.f32.mrb[0].mxu0
      %v1177 = vadd.f32 0.0, %v1176
      %v1178 = vpop.f32.mrb[0].mxu0
      %1179 = vmatprep.mubr.bf16.mxu0 %v928
      %1180 = vmatmul.mubr.bf16.gmra.mrb[0].mxu0 %v920
      %v1181 = vpop.f32.mrb[0].mxu0
      %v1182 = vadd.f32 0.0, %v1181
      %v1183 = vpop.f32.mrb[0].mxu0
      %v1184 = vpop.f32.mrb[0].mxu0
      %v1185 = vadd.f32 0.0, %v1184
      %v1186 = vpop.f32.mrb[0].mxu0
      %1187 = vmatprep.mubr.bf16.mxu0 %v936
      %1188 = vmatmul.mubr.bf16.gmra.mrb[0].mxu0 %v928
      %v1189 = vpop.f32.mrb[0].mxu0
      %v1190 = vadd.f32 0.0, %v1189
      %v1191 = vpop.f32.mrb[0].mxu0
      %v1192 = vpop.f32.mrb[0].mxu0
      %v1193 = vadd.f32 0.0, %v1192
      %v1194 = vpop.f32.mrb[0].mxu0
      %1195 = vmatprep.mubr.bf16.mxu0 %v944
      %1196 = vmatmul.mubr.bf16.gmra.mrb[0].mxu0 %v936
      %v1197 = vpop.f32.mrb[0].mxu0
      %v1198 = vadd.f32 0.0, %v1197
      %v1199 = vpop.f32.mrb[0].mxu0
      %v1200 = vpop.f32.mrb[0].mxu0
      %v1201 = vadd.f32 0.0, %v1200
      %v1202 = vpop.f32.mrb[0].mxu0
      %1203 = vmatprep.mubr.bf16.mxu0 %v952
      %1204 = vmatmul.mubr.bf16.gmra.mrb[0].mxu0 %v944
      %v1205 = vpop.f32.mrb[0].mxu0
      %v1206 = vadd.f32 0.0, %v1205
      %v1207 = vpop.f32.mrb[0].mxu0
      %v1208 = vpop.f32.mrb[0].mxu0
      %v1209 = vadd.f32 0.0, %v1208
      %v1210 = vpop.f32.mrb[0].mxu0
      %1211 = vmatprep.mubr.bf16.mxu0 %v960
      %1212 = vmatmul.mubr.bf16.gmra.mrb[0].mxu0 %v952
      %v1213 = vpop.f32.mrb[0].mxu0
      %v1214 = vadd.f32 0.0, %v1213
      %v1215 = vpop.f32.mrb[0].mxu0
      %v1216 = vpop.f32.mrb[0].mxu0
      %v1217 = vadd.f32 0.0, %v1216
      %v1218 = vpop.f32.mrb[0].mxu0
      %1219 = vmatprep.mubr.bf16.mxu0 %v968
      %1220 = vmatmul.mubr.bf16.gmra.mrb[0].mxu0 %v960
      %v1221 = vpop.f32.mrb[0].mxu0
      %v1222 = vadd.f32 0.0, %v1221
      %v1223 = vpop.f32.mrb[0].mxu0
      %v1224 = vpop.f32.mrb[0].mxu0
      %v1225 = vadd.f32 0.0, %v1224
      %v1226 = vpop.f32.mrb[0].mxu0
      %1227 = vmatprep.mubr.bf16.mxu0 %v976
      %1228 = vmatmul.mubr.bf16.gmra.mrb[0].mxu0 %v968
      %v1229 = vpop.f32.mrb[0].mxu0
      %v1230 = vadd.f32 0.0, %v1229
      %v1231 = vpop.f32.mrb[0].mxu0
      %v1232 = vpop.f32.mrb[0].mxu0
      %v1233 = vadd.f32 0.0, %v1232
      %v1234 = vpop.f32.mrb[0].mxu0
      %1235 = vdwg.mxu0
      %1236 = vmatprep.subr.bf16.mxu0 0
      %1237 = vmatpush1.bf16.msra.mxu0 %v1107
      %1238 = vmatprep.subr.bf16.mxu0 0
      %1239 = vmatpush1.bf16.msra.mxu0 %v1108
      %1240 = vmatprep.subr.bf16.mxu0 0
      %1241 = vmatpush1.bf16.msra.mxu0 %v1109
      %1242 = vmatprep.subr.bf16.mxu0 0
      %1243 = vmatpush1.bf16.msra.mxu0 %v1110
      %1244 = vmatprep.subr.bf16.mxu0 0
      %1245 = vmatpush1.bf16.msra.mxu0 %v1111
      %1246 = vmatprep.subr.bf16.mxu0 0
      %1247 = vmatpush1.bf16.msra.mxu0 %v1112
      %1248 = vmatprep.subr.bf16.mxu0 0
      %1249 = vmatpush1.bf16.msra.mxu0 %v1113
      %1250 = vmatprep.subr.bf16.mxu0 0
      %1251 = vmatpush1.bf16.msra.mxu0 %v1114
      %1252 = vmatprep.subr.bf16.mxu0 0
      %1253 = vmatpush1.bf16.msra.mxu0 0
      %1254 = vmatprep.subr.bf16.mxu0 0
      %1255 = vmatpush1.bf16.msra.mxu0 0
      %1256 = vmatprep.subr.bf16.mxu0 0
      %1257 = vmatpush1.bf16.msra.mxu0 0
      %1258 = vmatprep.subr.bf16.mxu0 0
      %1259 = vmatpush1.bf16.msra.mxu0 0
      %1260 = vmatprep.subr.bf16.mxu0 0
      %1261 = vmatpush1.bf16.msra.mxu0 0
      %1262 = vmatprep.subr.bf16.mxu0 0
      %1263 = vmatpush1.bf16.msra.mxu0 0
      %1264 = vmatprep.subr.bf16.mxu0 0
      %1265 = vmatpush1.bf16.msra.mxu0 0
      %1266 = vmatprep.subr.bf16.mxu0 0
      %1267 = vmatpush1.bf16.msra.mxu0 0
      %1268 = vmatprep.mubr.bf16.mxu0 0
      %1269 = vmatmul.mubr.bf16.gmra.mrb[0].mxu0 %v928
      %v1270 = vpop.f32.mrb[0].mxu0
      %v1271 = vadd.f32 %v1174, %v1270
      %v1272 = vpop.f32.mrb[0].mxu0
      %v1273 = vpop.f32.mrb[0].mxu0
      %v1274 = vadd.f32 %v1177, %v1273
      %v1275 = vpop.f32.mrb[0].mxu0
      %1276 = vmatprep.mubr.bf16.mxu0 0
      %1277 = vmatmul.mubr.bf16.gmra.mrb[0].mxu0 %v936
      %v1278 = vpop.f32.mrb[0].mxu0
      %v1279 = vadd.f32 %v1182, %v1278
      %v1280 = vpop.f32.mrb[0].mxu0
      %v1281 = vpop.f32.mrb[0].mxu0
      %v1282 = vadd.f32 %v1185, %v1281
      %v1283 = vpop.f32.mrb[0].mxu0
      %1284 = vmatprep.mubr.bf16.mxu0 0
      %1285 = vmatmul.mubr.bf16.gmra.mrb[0].mxu0 %v944
      %v1286 = vpop.f32.mrb[0].mxu0
      %v1287 = vadd.f32 %v1190, %v1286
      %v1288 = vpop.f32.mrb[0].mxu0
      %v1289 = vpop.f32.mrb[0].mxu0
      %v1290 = vadd.f32 %v1193, %v1289
      %v1291 = vpop.f32.mrb[0].mxu0
      %1292 = vmatprep.mubr.bf16.mxu0 0
      %1293 = vmatmul.mubr.bf16.gmra.mrb[0].mxu0 %v952
      %v1294 = vpop.f32.mrb[0].mxu0
      %v1295 = vadd.f32 %v1198, %v1294
      %v1296 = vpop.f32.mrb[0].mxu0
      %v1297 = vpop.f32.mrb[0].mxu0
      %v1298 = vadd.f32 %v1201, %v1297
      %v1299 = vpop.f32.mrb[0].mxu0
      %1300 = vmatprep.mubr.bf16.mxu0 0
      %1301 = vmatmul.mubr.bf16.gmra.mrb[0].mxu0 %v960
      %v1302 = vpop.f32.mrb[0].mxu0
      %v1303 = vadd.f32 %v1206, %v1302
      %v1304 = vpop.f32.mrb[0].mxu0
      %v1305 = vpop.f32.mrb[0].mxu0
      %v1306 = vadd.f32 %v1209, %v1305
      %v1307 = vpop.f32.mrb[0].mxu0
      %1308 = vmatprep.mubr.bf16.mxu0 0
      %1309 = vmatmul.mubr.bf16.gmra.mrb[0].mxu0 %v968
      %v1310 = vpop.f32.mrb[0].mxu0
      %v1311 = vadd.f32 %v1214, %v1310
      %v1312 = vpop.f32.mrb[0].mxu0
      %v1313 = vpop.f32.mrb[0].mxu0
      %v1314 = vadd.f32 %v1217, %v1313
      %v1315 = vpop.f32.mrb[0].mxu0
      %1316 = vmatprep.mubr.bf16.mxu0 0
      %1317 = vmatmul.mubr.bf16.gmra.mrb[0].mxu0 %v976
      %v1318 = vpop.f32.mrb[0].mxu0
      %v1319 = vadd.f32 %v1222, %v1318
      %v1320 = vpop.f32.mrb[0].mxu0
      %v1321 = vpop.f32.mrb[0].mxu0
      %v1322 = vadd.f32 %v1225, %v1321
      %v1323 = vpop.f32.mrb[0].mxu0
      %1324 = vmatprep.mubr.bf16.mxu0 0
      %1325 = vmatmul.mubr.bf16.gmra.mrb[0].mxu0 %v984
      %v1326 = vpop.f32.mrb[0].mxu0
      %v1327 = vadd.f32 %v1230, %v1326
      %v1328 = vpop.f32.mrb[0].mxu0
      %v1329 = vpop.f32.mrb[0].mxu0
      %v1330 = vadd.f32 %v1233, %v1329
      %v1331 = vpop.f32.mrb[0].mxu0
      %1332 = vdwg.mxu0
      %v1333 = vadd.f32 %v835, %v1271
      %v1334 = vadd.f32 %v836, %v1274
      %v1335 = vadd.f32 %v837, %v1279
      %v1336 = vadd.f32 %v838, %v1282
      %v1337 = vadd.f32 %v839, %v1287
      %v1338 = vadd.f32 %v840, %v1290
      %v1339 = vadd.f32 %v841, %v1295
      %v1340 = vadd.f32 %v842, %v1298
      %v1341 = vadd.f32 %v843, %v1303
      %v1342 = vadd.f32 %v844, %v1306
      %v1343 = vadd.f32 %v845, %v1311
      %v1344 = vadd.f32 %v846, %v1314
      %v1345 = vadd.f32 %v847, %v1319
      %v1346 = vadd.f32 %v848, %v1322
      %v1347 = vadd.f32 %v849, %v1327
      %v1348 = vadd.f32 %v850, %v1330
      %s1349 = scalar_lea.vmem %s224, 384
      %v1350 = vld [vmem:[%s1349] sm:$0xf]
      %v1351 = vld [vmem:[%s1349 + $0x4] sm:$0xf]
      %v1352 = vld [vmem:[%s1349 + $0x8] sm:$0xf]
      %v1353 = vld [vmem:[%s1349 + $0xc] sm:$0xf]
      %v1354 = vld [vmem:[%s1349 + $0x10] sm:$0xf]
      %v1355 = vld [vmem:[%s1349 + $0x14] sm:$0xf]
      %v1356 = vld [vmem:[%s1349 + $0x18] sm:$0xf]
      %v1357 = vld [vmem:[%s1349 + $0x1c] sm:$0xf]
      %v1358 = vld [vmem:[%s1349 + $0x20] sm:$0xf]
      %v1359 = vld [vmem:[%s1349 + $0x24] sm:$0xf]
      %v1360 = vld [vmem:[%s1349 + $0x28] sm:$0xf]
      %v1361 = vld [vmem:[%s1349 + $0x2c] sm:$0xf]
      %v1362 = vld [vmem:[%s1349 + $0x30] sm:$0xf]
      %v1363 = vld [vmem:[%s1349 + $0x34] sm:$0xf]
      %v1364 = vld [vmem:[%s1349 + $0x38] sm:$0xf]
      %v1365 = vld [vmem:[%s1349 + $0x3c] sm:$0xf]
      %v1366 = vld [vmem:[%s1349 + $0x40] sm:$0xf]
      %v1367 = vld [vmem:[%s1349 + $0x44] sm:$0xf]
      %v1368 = vld [vmem:[%s1349 + $0x48] sm:$0xf]
      %v1369 = vld [vmem:[%s1349 + $0x4c] sm:$0xf]
      %v1370 = vld [vmem:[%s1349 + $0x50] sm:$0xf]
      %v1371 = vld [vmem:[%s1349 + $0x54] sm:$0xf]
      %v1372 = vld [vmem:[%s1349 + $0x58] sm:$0xf]
      %v1373 = vld [vmem:[%s1349 + $0x5c] sm:$0xf]
      %v1374 = vld [vmem:[%s1349 + $0x60] sm:$0xf]
      %v1375 = vld [vmem:[%s1349 + $0x64] sm:$0xf]
      %v1376 = vld [vmem:[%s1349 + $0x68] sm:$0xf]
      %v1377 = vld [vmem:[%s1349 + $0x6c] sm:$0xf]
      %v1378 = vld [vmem:[%s1349 + $0x70] sm:$0xf]
      %v1379 = vld [vmem:[%s1349 + $0x74] sm:$0xf]
      %v1380 = vld [vmem:[%s1349 + $0x78] sm:$0xf]
      %v1381 = vld [vmem:[%s1349 + $0x7c] sm:$0xf]
      %v1382 = vld [vmem:[%s1349 + $0x80] sm:$0xf]
      %v1383 = vld [vmem:[%s1349 + $0x84] sm:$0xf]
      %v1384 = vld [vmem:[%s1349 + $0x88] sm:$0xf]
      %v1385 = vld [vmem:[%s1349 + $0x8c] sm:$0xf]
      %v1386 = vld [vmem:[%s1349 + $0x90] sm:$0xf]
      %v1387 = vld [vmem:[%s1349 + $0x94] sm:$0xf]
      %v1388 = vld [vmem:[%s1349 + $0x98] sm:$0xf]
      %v1389 = vld [vmem:[%s1349 + $0x9c] sm:$0xf]
      %v1390 = vld [vmem:[%s1349 + $0xa0] sm:$0xf]
      %v1391 = vld [vmem:[%s1349 + $0xa4] sm:$0xf]
      %v1392 = vld [vmem:[%s1349 + $0xa8] sm:$0xf]
      %v1393 = vld [vmem:[%s1349 + $0xac] sm:$0xf]
      %v1394 = vld [vmem:[%s1349 + $0xb0] sm:$0xf]
      %v1395 = vld [vmem:[%s1349 + $0xb4] sm:$0xf]
      %v1396 = vld [vmem:[%s1349 + $0xb8] sm:$0xf]
      %v1397 = vld [vmem:[%s1349 + $0xbc] sm:$0xf]
      %vm1402 = vcmask 1046528
      %v1403 = vrot.slane %v441, 1
      %v1404 = vrot.slane %v442, 1
      %v1405 = vsel %vm1402, %v1403, %v1404
      %v1406 = vrot.slane %v367, 1
      %v1407 = vsel %vm1402, %v1404, %v1406
      %v1408 = vrot.slane %v375, 1
      %v1409 = vsel %vm1402, %v1406, %v1408
      %v1410 = vrot.slane %v383, 1
      %v1411 = vsel %vm1402, %v1408, %v1410
      %v1412 = vrot.slane %v391, 1
      %v1413 = vsel %vm1402, %v1410, %v1412
      %v1414 = vrot.slane %v399, 1
      %v1415 = vsel %vm1402, %v1412, %v1414
      %v1416 = vrot.slane %v407, 1
      %v1417 = vsel %vm1402, %v1414, %v1416
      %v1418 = vrot.slane %v415, 1
      %v1419 = vsel %vm1402, %v1416, %v1418
      %v1420 = vrot.slane %v443, 1
      %v1421 = vsel %vm1402, %v1418, %v1420
      %v1422 = vrot.slane %v444, 1
      %v1423 = vsel %vm1402, %v1420, %v1422
      %v1482 = vunpack.c.l.b16 %v1350
      %v1483 = vunpack.c.l.b16 %v1351
      %v1484 = vunpack.c.l.b16 %v1352
      %v1485 = vunpack.c.l.b16 %v1353
      %v1486 = vunpack.c.l.b16 %v1354
      %v1487 = vunpack.c.l.b16 %v1355
      %v1488 = vunpack.c.l.b16 %v1356
      %v1489 = vunpack.c.l.b16 %v1357
      %v1490 = vunpack.c.l.b16 %v1358
      %v1491 = vunpack.c.l.b16 %v1359
      %v1492 = vunpack.c.l.b16 %v1360
      %v1493 = vunpack.c.l.b16 %v1361
      %v1494 = vunpack.c.l.b16 %v1362
      %v1495 = vunpack.c.l.b16 %v1363
      %v1496 = vunpack.c.l.b16 %v1364
      %v1497 = vunpack.c.l.b16 %v1365
      %v1498 = vunpack.c.l.b16 %v1366
      %v1499 = vunpack.c.l.b16 %v1367
      %v1500 = vunpack.c.l.b16 %v1368
      %v1501 = vunpack.c.l.b16 %v1369
      %v1502 = vunpack.c.l.b16 %v1370
      %v1503 = vunpack.c.l.b16 %v1371
      %v1504 = vunpack.c.l.b16 %v1372
      %v1505 = vunpack.c.l.b16 %v1373
      %v1506 = vunpack.c.l.b16 %v1374
      %v1507 = vunpack.c.l.b16 %v1375
      %v1508 = vunpack.c.l.b16 %v1376
      %v1509 = vunpack.c.l.b16 %v1377
      %v1510 = vunpack.c.l.b16 %v1378
      %v1511 = vunpack.c.l.b16 %v1379
      %v1512 = vunpack.c.l.b16 %v1380
      %v1513 = vunpack.c.l.b16 %v1381
      %v1514 = vunpack.c.l.b16 %v1382
      %v1515 = vunpack.c.l.b16 %v1383
      %v1516 = vunpack.c.l.b16 %v1384
      %v1517 = vunpack.c.l.b16 %v1385
      %v1518 = vunpack.c.l.b16 %v1386
      %v1519 = vunpack.c.l.b16 %v1387
      %v1520 = vunpack.c.l.b16 %v1388
      %v1521 = vunpack.c.l.b16 %v1389
      %v1522 = vunpack.c.l.b16 %v1390
      %v1523 = vunpack.c.l.b16 %v1391
      %v1524 = vunpack.c.l.b16 %v1392
      %v1525 = vunpack.c.l.b16 %v1393
      %v1526 = vunpack.c.l.b16 %v1394
      %v1527 = vunpack.c.l.b16 %v1395
      %v1528 = vunpack.c.l.b16 %v1396
      %v1529 = vunpack.c.l.b16 %v1397
      %v1530 = vpack.c.b16 %v1483, %v1482
      %v1531 = vpack.c.b16 %v1485, %v1484
      %v1532 = vpack.c.b16 %v1487, %v1486
      %v1533 = vpack.c.b16 %v1489, %v1488
      %v1534 = vpack.c.b16 %v1491, %v1490
      %v1535 = vpack.c.b16 %v1493, %v1492
      %v1536 = vpack.c.b16 %v1495, %v1494
      %v1537 = vpack.c.b16 %v1497, %v1496
      %v1538 = vpack.c.b16 %v1499, %v1498
      %v1539 = vpack.c.b16 %v1501, %v1500
      %v1540 = vpack.c.b16 %v1503, %v1502
      %v1541 = vpack.c.b16 %v1505, %v1504
      %v1542 = vpack.c.b16 %v1507, %v1506
      %v1543 = vpack.c.b16 %v1509, %v1508
      %v1544 = vpack.c.b16 %v1511, %v1510
      %v1545 = vpack.c.b16 %v1513, %v1512
      %v1546 = vpack.c.b16 %v1515, %v1514
      %v1547 = vpack.c.b16 %v1517, %v1516
      %v1548 = vpack.c.b16 %v1519, %v1518
      %v1549 = vpack.c.b16 %v1521, %v1520
      %v1550 = vpack.c.b16 %v1523, %v1522
      %v1551 = vpack.c.b16 %v1525, %v1524
      %v1552 = vpack.c.b16 %v1527, %v1526
      %v1553 = vpack.c.b16 %v1529, %v1528
      %1578 = vmatprep.subr.bf16.mxu0 0
      %1579 = vmatpush1.bf16.msra.mxu0 %v1530
      %1580 = vmatprep.subr.bf16.mxu0 0
      %1581 = vmatpush1.bf16.msra.mxu0 %v1531
      %1582 = vmatprep.subr.bf16.mxu0 0
      %1583 = vmatpush1.bf16.msra.mxu0 %v1532
      %1584 = vmatprep.subr.bf16.mxu0 0
      %1585 = vmatpush1.bf16.msra.mxu0 %v1533
      %1586 = vmatprep.subr.bf16.mxu0 0
      %1587 = vmatpush1.bf16.msra.mxu0 %v1534
      %1588 = vmatprep.subr.bf16.mxu0 0
      %1589 = vmatpush1.bf16.msra.mxu0 %v1535
      %1590 = vmatprep.subr.bf16.mxu0 0
      %1591 = vmatpush1.bf16.msra.mxu0 %v1536
      %1592 = vmatprep.subr.bf16.mxu0 0
      %1593 = vmatpush1.bf16.msra.mxu0 %v1537
      %1594 = vmatprep.subr.bf16.mxu0 0
      %1595 = vmatpush1.bf16.msra.mxu0 %v1538
      %1596 = vmatprep.subr.bf16.mxu0 0
      %1597 = vmatpush1.bf16.msra.mxu0 %v1539
      %1598 = vmatprep.subr.bf16.mxu0 0
      %1599 = vmatpush1.bf16.msra.mxu0 %v1540
      %1600 = vmatprep.subr.bf16.mxu0 0
      %1601 = vmatpush1.bf16.msra.mxu0 %v1541
      %1602 = vmatprep.subr.bf16.mxu0 0
      %1603 = vmatpush1.bf16.msra.mxu0 %v1542
      %1604 = vmatprep.subr.bf16.mxu0 0
      %1605 = vmatpush1.bf16.msra.mxu0 %v1543
      %1606 = vmatprep.subr.bf16.mxu0 0
      %1607 = vmatpush1.bf16.msra.mxu0 %v1544
      %1608 = vmatprep.subr.bf16.mxu0 0
      %1609 = vmatpush1.bf16.msra.mxu0 %v1545
      %1610 = vmatprep.mubr.bf16.mxu0 %v1407
      %1611 = vmatmul.mubr.bf16.gmra.mrb[0].mxu0 %v1405
      %v1612 = vpop.f32.mrb[0].mxu0
      %v1613 = vadd.f32 0.0, %v1612
      %v1614 = vpop.f32.mrb[0].mxu0
      %v1615 = vpop.f32.mrb[0].mxu0
      %v1616 = vadd.f32 0.0, %v1615
      %v1617 = vpop.f32.mrb[0].mxu0
      %1618 = vmatprep.mubr.bf16.mxu0 %v1409
      %1619 = vmatmul.mubr.bf16.gmra.mrb[0].mxu0 %v1407
      %v1620 = vpop.f32.mrb[0].mxu0
      %v1621 = vadd.f32 0.0, %v1620
      %v1622 = vpop.f32.mrb[0].mxu0
      %v1623 = vpop.f32.mrb[0].mxu0
      %v1624 = vadd.f32 0.0, %v1623
      %v1625 = vpop.f32.mrb[0].mxu0
      %1626 = vmatprep.mubr.bf16.mxu0 %v1411
      %1627 = vmatmul.mubr.bf16.gmra.mrb[0].mxu0 %v1409
      %v1628 = vpop.f32.mrb[0].mxu0
      %v1629 = vadd.f32 0.0, %v1628
      %v1630 = vpop.f32.mrb[0].mxu0
      %v1631 = vpop.f32.mrb[0].mxu0
      %v1632 = vadd.f32 0.0, %v1631
      %v1633 = vpop.f32.mrb[0].mxu0
      %1634 = vmatprep.mubr.bf16.mxu0 %v1413
      %1635 = vmatmul.mubr.bf16.gmra.mrb[0].mxu0 %v1411
      %v1636 = vpop.f32.mrb[0].mxu0
      %v1637 = vadd.f32 0.0, %v1636
      %v1638 = vpop.f32.mrb[0].mxu0
      %v1639 = vpop.f32.mrb[0].mxu0
      %v1640 = vadd.f32 0.0, %v1639
      %v1641 = vpop.f32.mrb[0].mxu0
      %1642 = vmatprep.mubr.bf16.mxu0 %v1415
      %1643 = vmatmul.mubr.bf16.gmra.mrb[0].mxu0 %v1413
      %v1644 = vpop.f32.mrb[0].mxu0
      %v1645 = vadd.f32 0.0, %v1644
      %v1646 = vpop.f32.mrb[0].mxu0
      %v1647 = vpop.f32.mrb[0].mxu0
      %v1648 = vadd.f32 0.0, %v1647
      %v1649 = vpop.f32.mrb[0].mxu0
      %1650 = vmatprep.mubr.bf16.mxu0 %v1417
      %1651 = vmatmul.mubr.bf16.gmra.mrb[0].mxu0 %v1415
      %v1652 = vpop.f32.mrb[0].mxu0
      %v1653 = vadd.f32 0.0, %v1652
      %v1654 = vpop.f32.mrb[0].mxu0
      %v1655 = vpop.f32.mrb[0].mxu0
      %v1656 = vadd.f32 0.0, %v1655
      %v1657 = vpop.f32.mrb[0].mxu0
      %1658 = vmatprep.mubr.bf16.mxu0 %v1419
      %1659 = vmatmul.mubr.bf16.gmra.mrb[0].mxu0 %v1417
      %v1660 = vpop.f32.mrb[0].mxu0
      %v1661 = vadd.f32 0.0, %v1660
      %v1662 = vpop.f32.mrb[0].mxu0
      %v1663 = vpop.f32.mrb[0].mxu0
      %v1664 = vadd.f32 0.0, %v1663
      %v1665 = vpop.f32.mrb[0].mxu0
      %1666 = vmatprep.mubr.bf16.mxu0 %v1421
      %1667 = vmatmul.mubr.bf16.gmra.mrb[0].mxu0 %v1419
      %v1668 = vpop.f32.mrb[0].mxu0
      %v1669 = vadd.f32 0.0, %v1668
      %v1670 = vpop.f32.mrb[0].mxu0
      %v1671 = vpop.f32.mrb[0].mxu0
      %v1672 = vadd.f32 0.0, %v1671
      %v1673 = vpop.f32.mrb[0].mxu0
      %1674 = vdwg.mxu0
      %1675 = vmatprep.subr.bf16.mxu0 0
      %1676 = vmatpush1.bf16.msra.mxu0 %v1546
      %1677 = vmatprep.subr.bf16.mxu0 0
      %1678 = vmatpush1.bf16.msra.mxu0 %v1547
      %1679 = vmatprep.subr.bf16.mxu0 0
      %1680 = vmatpush1.bf16.msra.mxu0 %v1548
      %1681 = vmatprep.subr.bf16.mxu0 0
      %1682 = vmatpush1.bf16.msra.mxu0 %v1549
      %1683 = vmatprep.subr.bf16.mxu0 0
      %1684 = vmatpush1.bf16.msra.mxu0 %v1550
      %1685 = vmatprep.subr.bf16.mxu0 0
      %1686 = vmatpush1.bf16.msra.mxu0 %v1551
      %1687 = vmatprep.subr.bf16.mxu0 0
      %1688 = vmatpush1.bf16.msra.mxu0 %v1552
      %1689 = vmatprep.subr.bf16.mxu0 0
      %1690 = vmatpush1.bf16.msra.mxu0 %v1553
      %1691 = vmatprep.subr.bf16.mxu0 0
      %1692 = vmatpush1.bf16.msra.mxu0 0
      %1693 = vmatprep.subr.bf16.mxu0 0
      %1694 = vmatpush1.bf16.msra.mxu0 0
      %1695 = vmatprep.subr.bf16.mxu0 0
      %1696 = vmatpush1.bf16.msra.mxu0 0
      %1697 = vmatprep.subr.bf16.mxu0 0
      %1698 = vmatpush1.bf16.msra.mxu0 0
      %1699 = vmatprep.subr.bf16.mxu0 0
      %1700 = vmatpush1.bf16.msra.mxu0 0
      %1701 = vmatprep.subr.bf16.mxu0 0
      %1702 = vmatpush1.bf16.msra.mxu0 0
      %1703 = vmatprep.subr.bf16.mxu0 0
      %1704 = vmatpush1.bf16.msra.mxu0 0
      %1705 = vmatprep.subr.bf16.mxu0 0
      %1706 = vmatpush1.bf16.msra.mxu0 0
      %1707 = vmatprep.mubr.bf16.mxu0 0
      %1708 = vmatmul.mubr.bf16.gmra.mrb[0].mxu0 %v1409
      %v1709 = vpop.f32.mrb[0].mxu0
      %v1710 = vadd.f32 %v1613, %v1709
      %v1711 = vpop.f32.mrb[0].mxu0
      %v1712 = vpop.f32.mrb[0].mxu0
      %v1713 = vadd.f32 %v1616, %v1712
      %v1714 = vpop.f32.mrb[0].mxu0
      %1715 = vmatprep.mubr.bf16.mxu0 0
      %1716 = vmatmul.mubr.bf16.gmra.mrb[0].mxu0 %v1411
      %v1717 = vpop.f32.mrb[0].mxu0
      %v1718 = vadd.f32 %v1621, %v1717
      %v1719 = vpop.f32.mrb[0].mxu0
      %v1720 = vpop.f32.mrb[0].mxu0
      %v1721 = vadd.f32 %v1624, %v1720
      %v1722 = vpop.f32.mrb[0].mxu0
      %1723 = vmatprep.mubr.bf16.mxu0 0
      %1724 = vmatmul.mubr.bf16.gmra.mrb[0].mxu0 %v1413
      %v1725 = vpop.f32.mrb[0].mxu0
      %v1726 = vadd.f32 %v1629, %v1725
      %v1727 = vpop.f32.mrb[0].mxu0
      %v1728 = vpop.f32.mrb[0].mxu0
      %v1729 = vadd.f32 %v1632, %v1728
      %v1730 = vpop.f32.mrb[0].mxu0
      %1731 = vmatprep.mubr.bf16.mxu0 0
      %1732 = vmatmul.mubr.bf16.gmra.mrb[0].mxu0 %v1415
      %v1733 = vpop.f32.mrb[0].mxu0
      %v1734 = vadd.f32 %v1637, %v1733
      %v1735 = vpop.f32.mrb[0].mxu0
      %v1736 = vpop.f32.mrb[0].mxu0
      %v1737 = vadd.f32 %v1640, %v1736
      %v1738 = vpop.f32.mrb[0].mxu0
      %1739 = vmatprep.mubr.bf16.mxu0 0
      %1740 = vmatmul.mubr.bf16.gmra.mrb[0].mxu0 %v1417
      %v1741 = vpop.f32.mrb[0].mxu0
      %v1742 = vadd.f32 %v1645, %v1741
      %v1743 = vpop.f32.mrb[0].mxu0
      %v1744 = vpop.f32.mrb[0].mxu0
      %v1745 = vadd.f32 %v1648, %v1744
      %v1746 = vpop.f32.mrb[0].mxu0
      %1747 = vmatprep.mubr.bf16.mxu0 0
      %1748 = vmatmul.mubr.bf16.gmra.mrb[0].mxu0 %v1419
      %v1749 = vpop.f32.mrb[0].mxu0
      %v1750 = vadd.f32 %v1653, %v1749
      %v1751 = vpop.f32.mrb[0].mxu0
      %v1752 = vpop.f32.mrb[0].mxu0
      %v1753 = vadd.f32 %v1656, %v1752
      %v1754 = vpop.f32.mrb[0].mxu0
      %1755 = vmatprep.mubr.bf16.mxu0 0
      %1756 = vmatmul.mubr.bf16.gmra.mrb[0].mxu0 %v1421
      %v1757 = vpop.f32.mrb[0].mxu0
      %v1758 = vadd.f32 %v1661, %v1757
      %v1759 = vpop.f32.mrb[0].mxu0
      %v1760 = vpop.f32.mrb[0].mxu0
      %v1761 = vadd.f32 %v1664, %v1760
      %v1762 = vpop.f32.mrb[0].mxu0
      %1763 = vmatprep.mubr.bf16.mxu0 0
      %1764 = vmatmul.mubr.bf16.gmra.mrb[0].mxu0 %v1423
      %v1765 = vpop.f32.mrb[0].mxu0
      %v1766 = vadd.f32 %v1669, %v1765
      %v1767 = vpop.f32.mrb[0].mxu0
      %v1768 = vpop.f32.mrb[0].mxu0
      %v1769 = vadd.f32 %v1672, %v1768
      %v1770 = vpop.f32.mrb[0].mxu0
      %1771 = vdwg.mxu0
      %v1772 = vsel %vm249, 1, 0
      %v1773 = vsel %vm250, 1, 0
      %vm1774 = vcmp.eq.s32.totalorder %v1772, 1
      %vm1775 = vcmp.eq.s32.totalorder %v1773, 1
      %v1776 = vsel %vm1774, %v1710, 0.0
      %v1777 = vsel %vm1775, %v1713, 0.0
      %v1778 = vsel %vm1774, %v1718, 0.0
      %v1779 = vsel %vm1775, %v1721, 0.0
      %v1780 = vsel %vm1774, %v1726, 0.0
      %v1781 = vsel %vm1775, %v1729, 0.0
      %v1782 = vsel %vm1774, %v1734, 0.0
      %v1783 = vsel %vm1775, %v1737, 0.0
      %v1784 = vsel %vm1774, %v1742, 0.0
      %v1785 = vsel %vm1775, %v1745, 0.0
      %v1786 = vsel %vm1774, %v1750, 0.0
      %v1787 = vsel %vm1775, %v1753, 0.0
      %v1788 = vsel %vm1774, %v1758, 0.0
      %v1789 = vsel %vm1775, %v1761, 0.0
      %v1790 = vsel %vm1774, %v1766, 0.0
      %v1791 = vsel %vm1775, %v1769, 0.0
      %v1792 = vadd.f32 %v1333, %v1776
      %v1793 = vadd.f32 %v1334, %v1777
      %v1794 = vadd.f32 %v1335, %v1778
      %v1795 = vadd.f32 %v1336, %v1779
      %v1796 = vadd.f32 %v1337, %v1780
      %v1797 = vadd.f32 %v1338, %v1781
      %v1798 = vadd.f32 %v1339, %v1782
      %v1799 = vadd.f32 %v1340, %v1783
      %v1800 = vadd.f32 %v1341, %v1784
      %v1801 = vadd.f32 %v1342, %v1785
      %v1802 = vadd.f32 %v1343, %v1786
      %v1803 = vadd.f32 %v1344, %v1787
      %v1804 = vadd.f32 %v1345, %v1788
      %v1805 = vadd.f32 %v1346, %v1789
      %v1806 = vadd.f32 %v1347, %v1790
      %v1807 = vadd.f32 %v1348, %v1791
      %v1808 = vld [vmem:[%s227] sm:$0x1]
      %v1810 = vlaneseq
      %v1811 = vshrl.u32 %v1810, 7
      %v1812 = vsub.s32 0, %v1811
      %v1813 = vrot.slane %v1808, %v1812
      %v1815 = vadd.f32 %v1792, %v1813
      %v1816 = vadd.f32 %v1793, %v1813
      %v1817 = vadd.f32 %v1794, %v1813
      %v1818 = vadd.f32 %v1795, %v1813
      %v1819 = vadd.f32 %v1796, %v1813
      %v1820 = vadd.f32 %v1797, %v1813
      %v1821 = vadd.f32 %v1798, %v1813
      %v1822 = vadd.f32 %v1799, %v1813
      %v1823 = vadd.f32 %v1800, %v1813
      %v1824 = vadd.f32 %v1801, %v1813
      %v1825 = vadd.f32 %v1802, %v1813
      %v1826 = vadd.f32 %v1803, %v1813
      %v1827 = vadd.f32 %v1804, %v1813
      %v1828 = vadd.f32 %v1805, %v1813
      %v1829 = vadd.f32 %v1806, %v1813
      %v1830 = vadd.f32 %v1807, %v1813
      %v1831 = vmax.f32 %v1815, 0.0
      %v1832 = vmax.f32 %v1816, 0.0
      %v1833 = vmax.f32 %v1817, 0.0
      %v1834 = vmax.f32 %v1818, 0.0
      %v1835 = vmax.f32 %v1819, 0.0
      %v1836 = vmax.f32 %v1820, 0.0
      %v1837 = vmax.f32 %v1821, 0.0
      %v1838 = vmax.f32 %v1822, 0.0
      %v1839 = vmax.f32 %v1823, 0.0
      %v1840 = vmax.f32 %v1824, 0.0
      %v1841 = vmax.f32 %v1825, 0.0
      %v1842 = vmax.f32 %v1826, 0.0
      %v1843 = vmax.f32 %v1827, 0.0
      %v1844 = vmax.f32 %v1828, 0.0
      %v1845 = vmax.f32 %v1829, 0.0
      %v1846 = vmax.f32 %v1830, 0.0
      %1847 = vst [vmem:[%s240] sm:$0xff] %v1831
      %1848 = vst [vmem:[%s240 + $0x8] sm:$0xff] %v1832
      %1849 = vst [vmem:[%s240 + $0x10] sm:$0xff] %v1833
      %1850 = vst [vmem:[%s240 + $0x18] sm:$0xff] %v1834
      %1851 = vst [vmem:[%s240 + $0x20] sm:$0xff] %v1835
      %1852 = vst [vmem:[%s240 + $0x28] sm:$0xff] %v1836
      %1853 = vst [vmem:[%s240 + $0x30] sm:$0xff] %v1837
      %1854 = vst [vmem:[%s240 + $0x38] sm:$0xff] %v1838
      %1855 = vst [vmem:[%s240 + $0x40] sm:$0xff] %v1839
      %1856 = vst [vmem:[%s240 + $0x48] sm:$0xff] %v1840
      %1857 = vst [vmem:[%s240 + $0x50] sm:$0xff] %v1841
      %1858 = vst [vmem:[%s240 + $0x58] sm:$0xff] %v1842
      %1859 = vst [vmem:[%s240 + $0x60] sm:$0xff] %v1843
      %1860 = vst [vmem:[%s240 + $0x68] sm:$0xff] %v1844
      %1861 = vst [vmem:[%s240 + $0x70] sm:$0xff] %v1845
      %1862 = vst [vmem:[%s240 + $0x78] sm:$0xff] %v1846
      %s1863 = smul.u32 8, %s21
      %p1864 = scmp.lt.s32.totalorder %s19, 1
      %s1865 = scalar_select %p1864, %s19, 1
      %p1866 = scmp.lt.s32.totalorder %s1863, 15
      %s1867 = scalar_select %p1866, %s1863, 15
      %p1868 = scmp.lt.s32.totalorder %s20, 0
      %s1869 = scalar_select %p1868, %s20, 0
      %s1870 = smul.addr %s1867, 2
      %s1871 = sadd.s32 %s1869, %s1870
      %s1872 = smul.addr %s1865, 32
      %s1873 = sadd.s32 %s1871, %s1872
      %s1874 = smul.addr %s1873, 8
      %s1875 = scalar_lea.vmem %s3, %s1874
      // Predicated region
      $region33: #{up_forward.5} parent=31 // pred_check
        %p1876 = pneg %p133
      $region34: #{up_forward.5} parent=31 // pred_check_branch
        %1878 = sbr.rel (%p1876) target = $region36
      $region35: #{up_forward.5} parent=31 // pred_region
        %s1879 = smul.u32 8, %s21
      $region36: #{up_forward.5} parent=31 // pred_fallthru
        _
    $region32: #{up_forward.5} parent=5 // pred_fallthru
      _
    %p1880 = scmp.le.s32.totalorder 2, %s9
    // Predicated region
    $region37: #{up_forward.5} parent=5 // pred_check
      %p1881 = pneg %p1880
    $region38: #{up_forward.5} parent=5 // pred_check_branch
      %1883 = sbr.rel (%p1881) target = $region40
    $region39: #{up_forward.5} parent=5 // pred_region
      %s1884 = ssub.s32 %s9, 2
      // Predicated region
      $region41: #{up_forward.5} parent=39 // pred_check
        %p1885 = pneg %p139
      $region42: #{up_forward.5} parent=39 // pred_check_branch
        %1887 = sbr.rel (%p1885) target = $region44
      $region43: #{up_forward.5} parent=39 // pred_region
        %s1888 = smul.u32 8, %s24
        %p1889 = scmp.lt.s32.totalorder %s22, 1
        %s1890 = scalar_select %p1889, %s22, 1
        %p1891 = scmp.lt.s32.totalorder %s1888, 15
        %s1892 = scalar_select %p1891, %s1888, 15
        %p1893 = scmp.lt.s32.totalorder %s23, 0
        %s1894 = scalar_select %p1893, %s23, 0
        %s1895 = smul.addr %s1892, 2
        %s1896 = sadd.s32 %s1894, %s1895
        %s1897 = smul.addr %s1890, 32
        %s1898 = sadd.s32 %s1896, %s1897
        %s1899 = smul.addr %s1898, 8
        %s1900 = scalar_lea.vmem %s3, %s1899
      $region44: #{up_forward.5} parent=39 // pred_fallthru
        _
    $region40: #{up_forward.5} parent=5 // pred_fallthru
      _
  $region6: #{up_forward.5} parent=0 // loop_footer
    %s13 = sadd.s32 1, %s9
  $region7: #{up_forward.5} parent=0 // loop_footer_branch
    %8 = sbr.rel target = $region3
  $region8: #{up_forward.5} parent=0 // loop_exit
    _

</llo_original>
